<compile_context>
chip_gen: v6e
topology: v6e:2x2x1
jax: 0.10.0
libtpu: 0.0.40
codegen_flags: <defaults>
</compile_context>

<pallas_src>
import jax
import jax.numpy as jnp
from jax import lax
from jax.experimental import pallas as pl
from jax.experimental.pallas import tpu as pltpu

BN_EPS = 1e-5          # PyTorch BatchNorm1d default
TILE_N = 4096          # lane-dense block width of the concatenated head output


# ----------------------------------------------------------------------------
# Fused forward kernel
# ----------------------------------------------------------------------------
def make_fused_forward(B, L, V, E, C, H, head_out):
    n_total = 3 * head_out
    assert n_total % TILE_N == 0, "concatenated head output must tile by TILE_N"
    n_blocks = n_total // TILE_N
    BL = B * L

    def kernel(ids_ref, emb_ref,
               w1_ref, b1_ref, s1_ref, t1_ref,
               w2_ref, b2_ref, s2_ref, t2_ref,
               fcw_ref, fcb_ref,
               hw_ref, hb_ref,
               out_ref, h_ref):

        def conv_bn_relu(x, w_ref, b_ref, s_ref, t_ref):
            # Conv1d(k=3, pad=1) + bias -> ReLU -> folded BatchNorm(eval),
            # batched over the whole (B*L, Cin) slab.  Per-tap aligned bf16
            # matmuls; neighbour taps brought in with non-negative XLU sublane
            # rolls; batch boundaries / zero padding handled by masking on the
            # in-sequence position (row % L).
            tl = jnp.dot(x, w_ref[0], preferred_element_type=jnp.float32)
            tm = jnp.dot(x, w_ref[1], preferred_element_type=jnp.float32)
            tr = jnp.dot(x, w_ref[2], preferred_element_type=jnp.float32)
            pos = lax.broadcasted_iota(jnp.int32, tm.shape, 0) % L
            y = (tm
                 + jnp.where(pos >= 1, pltpu.roll(tl, shift=1, axis=0), 0.0)
                 + jnp.where(pos <= L - 2,
                             pltpu.roll(tr, shift=BL - 1, axis=0), 0.0)
                 + b_ref[...])
            y = jnp.maximum(y, 0.0)                          # ReLU
            return y * s_ref[...] + t_ref[...]               # folded BN

        # ---- trunk: embedding -> conv1+bn -> conv2+bn -> fc+relu -----------
        # Runs once (grid step 0); the (B, H) bf16 result stays in VMEM
        # scratch and is reused by every head block.
        @pl.when(pl.program_id(0) == 0)
        def _trunk():
            # Embedding lookup as a one-hot matmul (gather-free, MXU-friendly).
            ids = ids_ref[...]                                   # (B*L, 1) int32
            vocab_iota = lax.broadcasted_iota(jnp.int32, (BL, V), 1)
            onehot = jnp.where(ids == vocab_iota, 1.0, 0.0).astype(jnp.bfloat16)
            emb = jnp.dot(onehot, emb_ref[...],
                          preferred_element_type=jnp.float32)    # (B*L, E) f32

            x1 = conv_bn_relu(emb.astype(jnp.bfloat16),
                              w1_ref, b1_ref, s1_ref, t1_ref)    # (B*L, C)
            x2 = conv_bn_relu(x1.astype(jnp.bfloat16),
                              w2_ref, b2_ref, s2_ref, t2_ref)    # (B*L, C)

            # fc (flatten + Linear + ReLU) as ONE matmul: the fc weights were
            # pre-permuted to (L*C, H) so the channel-last conv output only
            # needs a (B*L, C) -> (B, L*C) reshape (matches PyTorch's
            # x.view(B, -1) on the (B, C, L) tensor).
            flat = x2.astype(jnp.bfloat16).reshape(B, L * C)
            h = jnp.dot(flat, fcw_ref[...],
                        preferred_element_type=jnp.float32) + fcb_ref[...]
            h_ref[...] = jnp.maximum(h, 0.0).astype(jnp.bfloat16)
            # NOTE: dropout = identity (eval mode).

        # ---- heads: one lane-dense TILE_N block of concat(snac_0,1,2) ------
        y = jnp.dot(h_ref[...], hw_ref[...],
                    preferred_element_type=jnp.float32) + hb_ref[...]
        out_ref[...] = jax.nn.sigmoid(y).astype(out_ref.dtype)

    def full(shape):
        return pl.BlockSpec(shape, lambda j: (0,) * len(shape))

    return pl.pallas_call(
        kernel,
        out_shape=jax.ShapeDtypeStruct((B, n_total), jnp.float32),
        grid=(n_blocks,),
        in_specs=[
            full((BL, 1)),                    # input ids (int32)
            full((V, E)),                     # embedding table (bf16, resident)
            full((3, E, C)), full((1, C)), full((1, C)), full((1, C)),  # conv1
            full((3, C, C)), full((1, C)), full((1, C)), full((1, C)),  # conv2
            full((L * C, H)), full((1, H)),   # fc (bf16 weight, f32 bias)
            pl.BlockSpec((H, TILE_N), lambda j: (0, j)),  # head weights, streamed
            pl.BlockSpec((1, TILE_N), lambda j: (0, j)),  # head bias
        ],
        out_specs=pl.BlockSpec((B, TILE_N), lambda j: (0, j)),
        scratch_shapes=[pltpu.VMEM((B, H), jnp.bfloat16)],
        # "arbitrary": the trunk result in VMEM scratch is produced at step 0
        # and reused by all later steps, so the axis must stay sequential.
        compiler_params=pltpu.CompilerParams(
            dimension_semantics=("arbitrary",),
            vmem_limit_bytes=64 * 1024 * 1024),
    )


def forward(prep, input_ids, attention_mask):
    """Eval-mode forward; attention_mask is unused by the reference module."""
    del attention_mask
    B, L = input_ids.shape
    V, E = prep["embedding"].shape
    C = prep["conv1_b"].shape[-1]
    H = prep["fc_b"].shape[-1]
    head_out = prep["heads_b"].shape[-1] // 3
    fused = make_fused_forward(B, L, V, E, C, H, head_out)
    ids2d = input_ids.astype(jnp.int32).reshape(B * L, 1)
    out = fused(ids2d, prep["embedding"],
                prep["conv1_w"], prep["conv1_b"],
                prep["bn1_scale"], prep["bn1_shift"],
                prep["conv2_w"], prep["conv2_b"],
                prep["bn2_scale"], prep["bn2_shift"],
                prep["fc_w"], prep["fc_b"],
                prep["heads_w"], prep["heads_b"])
    return (out[:, :head_out], out[:, head_out:2 * head_out],
            out[:, 2 * head_out:])


# ----------------------------------------------------------------------------
# Parameters: synthetic init in "module layout", then one-time kernel prep
# ----------------------------------------------------------------------------
def init_params(key, vocab_size, embedding_dim, hidden_dim, seq_len,
                head_out=4096):
    ks = jax.random.split(key, 12)
    s = 0.1
    n = lambda k, shape: jax.random.normal(k, shape, jnp.float32) * s
    return dict(
        embedding=n(ks[0], (vocab_size, embedding_dim)),
        conv1_w=n(ks[1], (3, embedding_dim, hidden_dim)),   # (k, Cin, Cout)
        conv1_b=n(ks[2], (hidden_dim,)),
        bn1_gamma=jnp.ones((hidden_dim,), jnp.float32),
        bn1_beta=jnp.zeros((hidden_dim,), jnp.float32),
        bn1_mean=n(ks[3], (hidden_dim,)),
        bn1_var=1.0 + 0.1 * jax.random.uniform(ks[4], (hidden_dim,)),
        conv2_w=n(ks[5], (3, hidden_dim, hidden_dim)),
        conv2_b=n(ks[6], (hidden_dim,)),
        bn2_gamma=jnp.ones((hidden_dim,), jnp.float32),
        bn2_beta=jnp.zeros((hidden_dim,), jnp.float32),
        bn2_mean=n(ks[7], (hidden_dim,)),
        bn2_var=1.0 + 0.1 * jax.random.uniform(ks[8], (hidden_dim,)),
        # PyTorch flatten order: in_features index = c*seq_len + l.
        # (Reference module hardcodes hidden_dim*512; scaled to hidden_dim*L.)
        fc_w=n(ks[9], (hidden_dim * seq_len, hidden_dim)),
        fc_b=jnp.zeros((hidden_dim,), jnp.float32),
        heads_w=n(ks[10], (3, hidden_dim, head_out)),
        heads_b=n(ks[11], (3, head_out)),
    )


def prepare_params(p, seq_len):
    """One-time prep: fold BN to scale/shift, permute fc weights for a
    channel-last flatten, concatenate the 3 heads, cast matmul weights bf16."""
    C = p["conv1_b"].shape[0]
    H = p["fc_b"].shape[0]

    def bn_fold(gamma, beta, mean, var):
        scale = gamma * lax.rsqrt(var + BN_EPS)
        return scale, beta - mean * scale

    s1, t1 = bn_fold(p["bn1_gamma"], p["bn1_beta"], p["bn1_mean"], p["bn1_var"])
    s2, t2 = bn_fold(p["bn2_gamma"], p["bn2_beta"], p["bn2_mean"], p["bn2_var"])
    row = lambda v: v.reshape(1, -1)
    # (C*L, H) in PyTorch (B,C,L)-flatten order -> (L*C, H) for channel-last
    # flatten (index l*C + c), consumed by one in-kernel matmul.
    fc_w_perm = (p["fc_w"].reshape(C, seq_len, H)
                 .transpose(1, 0, 2).reshape(seq_len * C, H))
    heads_w_cat = p["heads_w"].transpose(1, 0, 2).reshape(H, -1)   # (H, 3*O)
    return dict(
        embedding=p["embedding"].astype(jnp.bfloat16),
        conv1_w=p["conv1_w"].astype(jnp.bfloat16), conv1_b=row(p["conv1_b"]),
        bn1_scale=row(s1), bn1_shift=row(t1),
        conv2_w=p["conv2_w"].astype(jnp.bfloat16), conv2_b=row(p["conv2_b"]),
        bn2_scale=row(s2), bn2_shift=row(t2),
        fc_w=fc_w_perm.astype(jnp.bfloat16), fc_b=row(p["fc_b"]),
        heads_w=heads_w_cat.astype(jnp.bfloat16),
        heads_b=p["heads_b"].reshape(1, -1),
    )


# ----------------------------------------------------------------------------
# Pure-JAX eval-mode reference (same bf16 operand rounding) for validation
# ----------------------------------------------------------------------------
def reference_forward(params, input_ids):
    B, _ = input_ids.shape
    r = lambda a: a.astype(jnp.bfloat16).astype(jnp.float32)
    x = jnp.take(r(params["embedding"]), input_ids, axis=0)      # (B, L, E)

    def conv_bn(x, w, bias, gamma, beta, mean, var):
        xr, wr = r(x), r(w)
        xp = jnp.pad(xr, ((0, 0), (1, 1), (0, 0)))
        y = (jnp.einsum("ble,eo->blo", xp[:, :-2], wr[0])
             + jnp.einsum("ble,eo->blo", xp[:, 1:-1], wr[1])
             + jnp.einsum("ble,eo->blo", xp[:, 2:], wr[2]) + bias)
        y = jnp.maximum(y, 0.0)
        return (y - mean) * lax.rsqrt(var + BN_EPS) * gamma + beta

    x = conv_bn(x, params["conv1_w"], params["conv1_b"], params["bn1_gamma"],
                params["bn1_beta"], params["bn1_mean"], params["bn1_var"])
    x = conv_bn(x, params["conv2_w"], params["conv2_b"], params["bn2_gamma"],
                params["bn2_beta"], params["bn2_mean"], params["bn2_var"])
    # PyTorch flatten: (B, C, L) -> (B, C*L)
    x = jnp.transpose(x, (0, 2, 1)).reshape(B, -1)
    x = jnp.maximum(r(x) @ r(params["fc_w"]) + params["fc_b"], 0.0)
    hw = r(params["heads_w"])
    xs = r(x)
    return tuple(jax.nn.sigmoid(xs @ hw[i] + params["heads_b"][i])
                 for i in range(3))


# ----------------------------------------------------------------------------
if __name__ == "__main__":
    key = jax.random.PRNGKey(0)
    vocab_size, embedding_dim, hidden_dim = 128, 128, 128
    batch, seq_len, head_out = 2, 8, 4096

    pkey, ikey = jax.random.split(key)
    params = init_params(pkey, vocab_size, embedding_dim, hidden_dim,
                         seq_len, head_out)
    prep = prepare_params(params, seq_len)

    input_ids = jax.random.randint(ikey, (batch, seq_len), 0, vocab_size,
                                   dtype=jnp.int32)
    attention_mask = jnp.ones((batch, seq_len), jnp.int32)

    snac_0, snac_1, snac_2 = forward(prep, input_ids, attention_mask)
    jax.block_until_ready((snac_0, snac_1, snac_2))

    assert snac_0.shape == (batch, head_out)
    assert snac_1.shape == (batch, head_out)
    assert snac_2.shape == (batch, head_out)
    assert bool(jnp.all((snac_0 >= 0) & (snac_0 <= 1)))
    assert bool(jnp.all((snac_1 >= 0) & (snac_1 <= 1)))
    assert bool(jnp.all((snac_2 >= 0) & (snac_2 <= 1)))

    r0, r1, r2 = reference_forward(params, input_ids)
    for got, want in ((snac_0, r0), (snac_1, r1), (snac_2, r2)):
        err = float(jnp.max(jnp.abs(got - want)))
        assert bool(jnp.allclose(got, want, atol=2e-2, rtol=0.0)), err

    print("KERNEL_OK")
</pallas_src>

<mosaic_0001>
module attributes {stable_mosaic.version = 11 : i64} {
  func.func @kernel(%arg0: i32, %arg1: memref<16x1xi32, #tpu.memory_space<vmem>>, %arg2: memref<128x128xbf16, #tpu.memory_space<vmem>>, %arg3: memref<3x128x128xbf16, #tpu.memory_space<vmem>>, %arg4: memref<1x128xf32, #tpu.memory_space<vmem>>, %arg5: memref<1x128xf32, #tpu.memory_space<vmem>>, %arg6: memref<1x128xf32, #tpu.memory_space<vmem>>, %arg7: memref<3x128x128xbf16, #tpu.memory_space<vmem>>, %arg8: memref<1x128xf32, #tpu.memory_space<vmem>>, %arg9: memref<1x128xf32, #tpu.memory_space<vmem>>, %arg10: memref<1x128xf32, #tpu.memory_space<vmem>>, %arg11: memref<1024x128xbf16, #tpu.memory_space<vmem>>, %arg12: memref<1x128xf32, #tpu.memory_space<vmem>>, %arg13: memref<128x4096xbf16, #tpu.memory_space<vmem>>, %arg14: memref<1x4096xf32, #tpu.memory_space<vmem>>, %arg15: memref<2x4096xf32, #tpu.memory_space<vmem>>, %arg16: memref<2x128xbf16, #tpu.memory_space<vmem>>) attributes {dimension_semantics = [#tpu.dimension_semantics<arbitrary>], iteration_bounds = array<i64: 3>, scalar_prefetch = 0 : i64, scratch_operands = 1 : i64, tpu.core_type = #tpu.core_type<tc>, window_params = [{pipeline_mode = #tpu.pipeline_mode<synchronous>, transform_indices = @transform_0, window_bounds = array<i64: 16, 1>}, {pipeline_mode = #tpu.pipeline_mode<synchronous>, transform_indices = @transform_1, window_bounds = array<i64: 128, 128>}, {pipeline_mode = #tpu.pipeline_mode<synchronous>, transform_indices = @transform_2, window_bounds = array<i64: 3, 128, 128>}, {pipeline_mode = #tpu.pipeline_mode<synchronous>, transform_indices = @transform_3, window_bounds = array<i64: 1, 128>}, {pipeline_mode = #tpu.pipeline_mode<synchronous>, transform_indices = @transform_4, window_bounds = array<i64: 1, 128>}, {pipeline_mode = #tpu.pipeline_mode<synchronous>, transform_indices = @transform_5, window_bounds = array<i64: 1, 128>}, {pipeline_mode = #tpu.pipeline_mode<synchronous>, transform_indices = @transform_6, window_bounds = array<i64: 3, 128, 128>}, {pipeline_mode = #tpu.pipeline_mode<synchronous>, transform_indices = @transform_7, window_bounds = array<i64: 1, 128>}, {pipeline_mode = #tpu.pipeline_mode<synchronous>, transform_indices = @transform_8, window_bounds = array<i64: 1, 128>}, {pipeline_mode = #tpu.pipeline_mode<synchronous>, transform_indices = @transform_9, window_bounds = array<i64: 1, 128>}, {pipeline_mode = #tpu.pipeline_mode<synchronous>, transform_indices = @transform_10, window_bounds = array<i64: 1024, 128>}, {pipeline_mode = #tpu.pipeline_mode<synchronous>, transform_indices = @transform_11, window_bounds = array<i64: 1, 128>}, {transform_indices = @transform_12, window_bounds = array<i64: 128, 4096>}, {transform_indices = @transform_13, window_bounds = array<i64: 1, 4096>}, {transform_indices = @transform_14, window_bounds = array<i64: 2, 4096>}]} {
    %c0_i32 = arith.constant 0 : i32
    %0 = arith.cmpi eq, %arg0, %c0_i32 : i32
    %1 = arith.extui %0 : i1 to i32
    %c0_i32_0 = arith.constant 0 : i32
    %2 = arith.cmpi ne, %1, %c0_i32_0 : i32
    scf.if %2 {
      %c0_9 = arith.constant 0 : index
      %c0_10 = arith.constant 0 : index
      %15 = vector.load %arg1[%c0_9, %c0_10] : memref<16x1xi32, #tpu.memory_space<vmem>>, vector<16x1xi32>
      %16 = tpu.iota {dimensions = array<i32: 1>} : vector<16x128xi32>
      %17 = vector.broadcast %15 : vector<16x1xi32> to vector<16x128xi32>
      %18 = arith.cmpi eq, %17, %16 : vector<16x128xi32>
      %cst_11 = arith.constant 1.000000e+00 : f32
      %cst_12 = arith.constant 0.000000e+00 : f32
      %19 = vector.broadcast %cst_11 : f32 to vector<16x128xf32>
      %20 = vector.broadcast %cst_12 : f32 to vector<16x128xf32>
      %21 = arith.select %18, %19, %20 : vector<16x128xi1>, vector<16x128xf32>
      %22 = arith.truncf %21 : vector<16x128xf32> to vector<16x128xbf16>
      %c0_13 = arith.constant 0 : index
      %c0_14 = arith.constant 0 : index
      %23 = vector.load %arg2[%c0_13, %c0_14] : memref<128x128xbf16, #tpu.memory_space<vmem>>, vector<128x128xbf16>
      %cst_15 = arith.constant dense<0.000000e+00> : vector<16x128xf32>
      %24 = tpu.matmul %22, %23, %cst_15 {dimension_numbers = #tpu.dot_dimension_numbers<[1], [0], [0], [1], [0, 0, 1, 1], [], []>} : vector<16x128xbf16>, vector<128x128xbf16>, vector<16x128xf32> -> vector<16x128xf32>
      %25 = arith.truncf %24 : vector<16x128xf32> to vector<16x128xbf16>
      %c0_16 = arith.constant 0 : index
      %c0_17 = arith.constant 0 : index
      %c0_18 = arith.constant 0 : index
      %26 = vector.load %arg3[%c0_16, %c0_17, %c0_18] : memref<3x128x128xbf16, #tpu.memory_space<vmem>>, vector<1x128x128xbf16>
      %27 = vector.shape_cast %26 : vector<1x128x128xbf16> to vector<128x128xbf16>
      %cst_19 = arith.constant dense<0.000000e+00> : vector<16x128xf32>
      %28 = tpu.matmul %25, %27, %cst_19 {dimension_numbers = #tpu.dot_dimension_numbers<[1], [0], [0], [1], [0, 0, 1, 1], [], []>} : vector<16x128xbf16>, vector<128x128xbf16>, vector<16x128xf32> -> vector<16x128xf32>
      %c1 = arith.constant 1 : index
      %c0_20 = arith.constant 0 : index
      %c0_21 = arith.constant 0 : index
      %29 = vector.load %arg3[%c1, %c0_20, %c0_21] : memref<3x128x128xbf16, #tpu.memory_space<vmem>>, vector<1x128x128xbf16>
      %30 = vector.shape_cast %29 : vector<1x128x128xbf16> to vector<128x128xbf16>
      %cst_22 = arith.constant dense<0.000000e+00> : vector<16x128xf32>
      %31 = tpu.matmul %25, %30, %cst_22 {dimension_numbers = #tpu.dot_dimension_numbers<[1], [0], [0], [1], [0, 0, 1, 1], [], []>} : vector<16x128xbf16>, vector<128x128xbf16>, vector<16x128xf32> -> vector<16x128xf32>
      %c2 = arith.constant 2 : index
      %c0_23 = arith.constant 0 : index
      %c0_24 = arith.constant 0 : index
      %32 = vector.load %arg3[%c2, %c0_23, %c0_24] : memref<3x128x128xbf16, #tpu.memory_space<vmem>>, vector<1x128x128xbf16>
      %33 = vector.shape_cast %32 : vector<1x128x128xbf16> to vector<128x128xbf16>
      %cst_25 = arith.constant dense<0.000000e+00> : vector<16x128xf32>
      %34 = tpu.matmul %25, %33, %cst_25 {dimension_numbers = #tpu.dot_dimension_numbers<[1], [0], [0], [1], [0, 0, 1, 1], [], []>} : vector<16x128xbf16>, vector<128x128xbf16>, vector<16x128xf32> -> vector<16x128xf32>
      %35 = tpu.iota {dimensions = array<i32: 0>} : vector<16x128xi32>
      %c8_i32 = arith.constant 8 : i32
      %c0_i32_26 = arith.constant 0 : i32
      %36 = arith.cmpi eq, %c8_i32, %c0_i32_26 : i32
      %c1_i32 = arith.constant 1 : i32
      %37 = arith.select %36, %c1_i32, %c8_i32 : i32
      %38 = vector.broadcast %37 : i32 to vector<16x128xi32>
      %39 = arith.remsi %35, %38 : vector<16x128xi32>
      %c0_i32_27 = arith.constant 0 : i32
      %40 = vector.broadcast %c0_i32_27 : i32 to vector<16x128xi32>
      %41 = arith.cmpi ne, %39, %40 : vector<16x128xi32>
      %c0_i32_28 = arith.constant 0 : i32
      %42 = vector.broadcast %c0_i32_28 : i32 to vector<16x128xi32>
      %43 = arith.cmpi slt, %39, %42 : vector<16x128xi32>
      %c0_i32_29 = arith.constant 0 : i32
      %44 = arith.cmpi slt, %37, %c0_i32_29 : i32
      %45 = vector.broadcast %44 : i1 to vector<16x128xi1>
      %46 = vector.broadcast %45 : vector<16x128xi1> to vector<16x128xi1>
      %47 = arith.xori %43, %46 : vector<16x128xi1>
      %48 = arith.andi %47, %41 : vector<16x128xi1>
      %49 = vector.broadcast %37 : i32 to vector<16x128xi32>
      %50 = arith.addi %39, %49 : vector<16x128xi32>
      %51 = arith.select %48, %50, %39 : vector<16x128xi1>, vector<16x128xi32>
      %c1_i32_30 = arith.constant 1 : i32
      %52 = vector.broadcast %c1_i32_30 : i32 to vector<16x128xi32>
      %53 = arith.cmpi sge, %51, %52 : vector<16x128xi32>
      %c1_i32_31 = arith.constant 1 : i32
      %54 = tpu.dynamic_rotate %28 by %c1_i32_31 dim 0 : vector<16x128xf32>, i32 -> vector<16x128xf32>
      %cst_32 = arith.constant 0.000000e+00 : f32
      %55 = vector.broadcast %cst_32 : f32 to vector<16x128xf32>
      %56 = arith.select %53, %54, %55 : vector<16x128xi1>, vector<16x128xf32>
      %57 = arith.addf %31, %56 : vector<16x128xf32>
      %c6_i32 = arith.constant 6 : i32
      %58 = vector.broadcast %c6_i32 : i32 to vector<16x128xi32>
      %59 = arith.cmpi sle, %51, %58 : vector<16x128xi32>
      %c15_i32 = arith.constant 15 : i32
      %60 = tpu.dynamic_rotate %34 by %c15_i32 dim 0 : vector<16x128xf32>, i32 -> vector<16x128xf32>
      %cst_33 = arith.constant 0.000000e+00 : f32
      %61 = vector.broadcast %cst_33 : f32 to vector<16x128xf32>
      %62 = arith.select %59, %60, %61 : vector<16x128xi1>, vector<16x128xf32>
      %63 = arith.addf %57, %62 : vector<16x128xf32>
      %c0_34 = arith.constant 0 : index
      %c0_35 = arith.constant 0 : index
      %64 = vector.load %arg4[%c0_34, %c0_35] : memref<1x128xf32, #tpu.memory_space<vmem>>, vector<1x128xf32>
      %65 = vector.broadcast %64 : vector<1x128xf32> to vector<16x128xf32>
      %66 = arith.addf %63, %65 : vector<16x128xf32>
      %cst_36 = arith.constant 0.000000e+00 : f32
      %67 = vector.broadcast %cst_36 : f32 to vector<16x128xf32>
      %68 = arith.maximumf %66, %67 : vector<16x128xf32>
      %c0_37 = arith.constant 0 : index
      %c0_38 = arith.constant 0 : index
      %69 = vector.load %arg5[%c0_37, %c0_38] : memref<1x128xf32, #tpu.memory_space<vmem>>, vector<1x128xf32>
      %70 = vector.broadcast %69 : vector<1x128xf32> to vector<16x128xf32>
      %71 = arith.mulf %68, %70 : vector<16x128xf32>
      %c0_39 = arith.constant 0 : index
      %c0_40 = arith.constant 0 : index
      %72 = vector.load %arg6[%c0_39, %c0_40] : memref<1x128xf32, #tpu.memory_space<vmem>>, vector<1x128xf32>
      %73 = vector.broadcast %72 : vector<1x128xf32> to vector<16x128xf32>
      %74 = arith.addf %71, %73 : vector<16x128xf32>
      %75 = arith.truncf %74 : vector<16x128xf32> to vector<16x128xbf16>
      %c0_41 = arith.constant 0 : index
      %c0_42 = arith.constant 0 : index
      %c0_43 = arith.constant 0 : index
      %76 = vector.load %arg7[%c0_41, %c0_42, %c0_43] : memref<3x128x128xbf16, #tpu.memory_space<vmem>>, vector<1x128x128xbf16>
      %77 = vector.shape_cast %76 : vector<1x128x128xbf16> to vector<128x128xbf16>
      %cst_44 = arith.constant dense<0.000000e+00> : vector<16x128xf32>
      %78 = tpu.matmul %75, %77, %cst_44 {dimension_numbers = #tpu.dot_dimension_numbers<[1], [0], [0], [1], [0, 0, 1, 1], [], []>} : vector<16x128xbf16>, vector<128x128xbf16>, vector<16x128xf32> -> vector<16x128xf32>
      %c1_45 = arith.constant 1 : index
      %c0_46 = arith.constant 0 : index
      %c0_47 = arith.constant 0 : index
      %79 = vector.load %arg7[%c1_45, %c0_46, %c0_47] : memref<3x128x128xbf16, #tpu.memory_space<vmem>>, vector<1x128x128xbf16>
      %80 = vector.shape_cast %79 : vector<1x128x128xbf16> to vector<128x128xbf16>
      %cst_48 = arith.constant dense<0.000000e+00> : vector<16x128xf32>
      %81 = tpu.matmul %75, %80, %cst_48 {dimension_numbers = #tpu.dot_dimension_numbers<[1], [0], [0], [1], [0, 0, 1, 1], [], []>} : vector<16x128xbf16>, vector<128x128xbf16>, vector<16x128xf32> -> vector<16x128xf32>
      %c2_49 = arith.constant 2 : index
      %c0_50 = arith.constant 0 : index
      %c0_51 = arith.constant 0 : index
      %82 = vector.load %arg7[%c2_49, %c0_50, %c0_51] : memref<3x128x128xbf16, #tpu.memory_space<vmem>>, vector<1x128x128xbf16>
      %83 = vector.shape_cast %82 : vector<1x128x128xbf16> to vector<128x128xbf16>
      %cst_52 = arith.constant dense<0.000000e+00> : vector<16x128xf32>
      %84 = tpu.matmul %75, %83, %cst_52 {dimension_numbers = #tpu.dot_dimension_numbers<[1], [0], [0], [1], [0, 0, 1, 1], [], []>} : vector<16x128xbf16>, vector<128x128xbf16>, vector<16x128xf32> -> vector<16x128xf32>
      %85 = tpu.iota {dimensions = array<i32: 0>} : vector<16x128xi32>
      %c8_i32_53 = arith.constant 8 : i32
      %c0_i32_54 = arith.constant 0 : i32
      %86 = arith.cmpi eq, %c8_i32_53, %c0_i32_54 : i32
      %c1_i32_55 = arith.constant 1 : i32
      %87 = arith.select %86, %c1_i32_55, %c8_i32_53 : i32
      %88 = vector.broadcast %87 : i32 to vector<16x128xi32>
      %89 = arith.remsi %85, %88 : vector<16x128xi32>
      %c0_i32_56 = arith.constant 0 : i32
      %90 = vector.broadcast %c0_i32_56 : i32 to vector<16x128xi32>
      %91 = arith.cmpi ne, %89, %90 : vector<16x128xi32>
      %c0_i32_57 = arith.constant 0 : i32
      %92 = vector.broadcast %c0_i32_57 : i32 to vector<16x128xi32>
      %93 = arith.cmpi slt, %89, %92 : vector<16x128xi32>
      %c0_i32_58 = arith.constant 0 : i32
      %94 = arith.cmpi slt, %87, %c0_i32_58 : i32
      %95 = vector.broadcast %94 : i1 to vector<16x128xi1>
      %96 = vector.broadcast %95 : vector<16x128xi1> to vector<16x128xi1>
      %97 = arith.xori %93, %96 : vector<16x128xi1>
      %98 = arith.andi %97, %91 : vector<16x128xi1>
      %99 = vector.broadcast %87 : i32 to vector<16x128xi32>
      %100 = arith.addi %89, %99 : vector<16x128xi32>
      %101 = arith.select %98, %100, %89 : vector<16x128xi1>, vector<16x128xi32>
      %c1_i32_59 = arith.constant 1 : i32
      %102 = vector.broadcast %c1_i32_59 : i32 to vector<16x128xi32>
      %103 = arith.cmpi sge, %101, %102 : vector<16x128xi32>
      %c1_i32_60 = arith.constant 1 : i32
      %104 = tpu.dynamic_rotate %78 by %c1_i32_60 dim 0 : vector<16x128xf32>, i32 -> vector<16x128xf32>
      %cst_61 = arith.constant 0.000000e+00 : f32
      %105 = vector.broadcast %cst_61 : f32 to vector<16x128xf32>
      %106 = arith.select %103, %104, %105 : vector<16x128xi1>, vector<16x128xf32>
      %107 = arith.addf %81, %106 : vector<16x128xf32>
      %c6_i32_62 = arith.constant 6 : i32
      %108 = vector.broadcast %c6_i32_62 : i32 to vector<16x128xi32>
      %109 = arith.cmpi sle, %101, %108 : vector<16x128xi32>
      %c15_i32_63 = arith.constant 15 : i32
      %110 = tpu.dynamic_rotate %84 by %c15_i32_63 dim 0 : vector<16x128xf32>, i32 -> vector<16x128xf32>
      %cst_64 = arith.constant 0.000000e+00 : f32
      %111 = vector.broadcast %cst_64 : f32 to vector<16x128xf32>
      %112 = arith.select %109, %110, %111 : vector<16x128xi1>, vector<16x128xf32>
      %113 = arith.addf %107, %112 : vector<16x128xf32>
      %c0_65 = arith.constant 0 : index
      %c0_66 = arith.constant 0 : index
      %114 = vector.load %arg8[%c0_65, %c0_66] : memref<1x128xf32, #tpu.memory_space<vmem>>, vector<1x128xf32>
      %115 = vector.broadcast %114 : vector<1x128xf32> to vector<16x128xf32>
      %116 = arith.addf %113, %115 : vector<16x128xf32>
      %cst_67 = arith.constant 0.000000e+00 : f32
      %117 = vector.broadcast %cst_67 : f32 to vector<16x128xf32>
      %118 = arith.maximumf %116, %117 : vector<16x128xf32>
      %c0_68 = arith.constant 0 : index
      %c0_69 = arith.constant 0 : index
      %119 = vector.load %arg9[%c0_68, %c0_69] : memref<1x128xf32, #tpu.memory_space<vmem>>, vector<1x128xf32>
      %120 = vector.broadcast %119 : vector<1x128xf32> to vector<16x128xf32>
      %121 = arith.mulf %118, %120 : vector<16x128xf32>
      %c0_70 = arith.constant 0 : index
      %c0_71 = arith.constant 0 : index
      %122 = vector.load %arg10[%c0_70, %c0_71] : memref<1x128xf32, #tpu.memory_space<vmem>>, vector<1x128xf32>
      %123 = vector.broadcast %122 : vector<1x128xf32> to vector<16x128xf32>
      %124 = arith.addf %121, %123 : vector<16x128xf32>
      %125 = arith.truncf %124 : vector<16x128xf32> to vector<16x128xbf16>
      %126 = vector.shape_cast %125 : vector<16x128xbf16> to vector<2x1024xbf16>
      %c0_72 = arith.constant 0 : index
      %c0_73 = arith.constant 0 : index
      %127 = vector.load %arg11[%c0_72, %c0_73] : memref<1024x128xbf16, #tpu.memory_space<vmem>>, vector<1024x128xbf16>
      %cst_74 = arith.constant dense<0.000000e+00> : vector<2x128xf32>
      %128 = tpu.matmul %126, %127, %cst_74 {dimension_numbers = #tpu.dot_dimension_numbers<[1], [0], [0], [1], [0, 0, 1, 1], [], []>} : vector<2x1024xbf16>, vector<1024x128xbf16>, vector<2x128xf32> -> vector<2x128xf32>
      %c0_75 = arith.constant 0 : index
      %c0_76 = arith.constant 0 : index
      %129 = vector.load %arg12[%c0_75, %c0_76] : memref<1x128xf32, #tpu.memory_space<vmem>>, vector<1x128xf32>
      %130 = vector.broadcast %129 : vector<1x128xf32> to vector<2x128xf32>
      %131 = arith.addf %128, %130 : vector<2x128xf32>
      %cst_77 = arith.constant 0.000000e+00 : f32
      %132 = vector.broadcast %cst_77 : f32 to vector<2x128xf32>
      %133 = arith.maximumf %131, %132 : vector<2x128xf32>
      %134 = arith.truncf %133 : vector<2x128xf32> to vector<2x128xbf16>
      %c0_78 = arith.constant 0 : index
      %c0_79 = arith.constant 0 : index
      %135 = vector.load %arg16[%c0_78, %c0_79] : memref<2x128xbf16, #tpu.memory_space<vmem>>, vector<2x128xbf16>
      tpu.vector_store %arg16[%c0_78, %c0_79], %134 {strides = array<i32>} : memref<2x128xbf16, #tpu.memory_space<vmem>>, vector<2x128xbf16>,
    } else {
    }
    %c0 = arith.constant 0 : index
    %c0_1 = arith.constant 0 : index
    %3 = vector.load %arg16[%c0, %c0_1] : memref<2x128xbf16, #tpu.memory_space<vmem>>, vector<2x128xbf16>
    %c0_2 = arith.constant 0 : index
    %c0_3 = arith.constant 0 : index
    %4 = vector.load %arg13[%c0_2, %c0_3] : memref<128x4096xbf16, #tpu.memory_space<vmem>>, vector<128x4096xbf16>
    %cst = arith.constant dense<0.000000e+00> : vector<2x4096xf32>
    %5 = tpu.matmul %3, %4, %cst {dimension_numbers = #tpu.dot_dimension_numbers<[1], [0], [0], [1], [0, 0, 1, 1], [], []>} : vector<2x128xbf16>, vector<128x4096xbf16>, vector<2x4096xf32> -> vector<2x4096xf32>
    %c0_4 = arith.constant 0 : index
    %c0_5 = arith.constant 0 : index
    %6 = vector.load %arg14[%c0_4, %c0_5] : memref<1x4096xf32, #tpu.memory_space<vmem>>, vector<1x4096xf32>
    %7 = vector.broadcast %6 : vector<1x4096xf32> to vector<2x4096xf32>
    %8 = arith.addf %5, %7 : vector<2x4096xf32>
    %9 = arith.negf %8 : vector<2x4096xf32>
    %10 = math.exp %9 : vector<2x4096xf32>
    %cst_6 = arith.constant 1.000000e+00 : f32
    %11 = vector.broadcast %cst_6 : f32 to vector<2x4096xf32>
    %12 = arith.addf %11, %10 : vector<2x4096xf32>
    %13 = arith.divf %11, %12 : vector<2x4096xf32>
    %c0_7 = arith.constant 0 : index
    %c0_8 = arith.constant 0 : index
    %14 = vector.load %arg15[%c0_7, %c0_8] : memref<2x4096xf32, #tpu.memory_space<vmem>>, vector<2x4096xf32>
    tpu.vector_store %arg15[%c0_7, %c0_8], %13 {strides = array<i32>} : memref<2x4096xf32, #tpu.memory_space<vmem>>, vector<2x4096xf32>,
    return
  }
  func.func @transform_0(%arg0: i32) -> (i32, i32) {
    %c0_i32 = arith.constant 0 : i32
    %c0_i32_0 = arith.constant 0 : i32
    %c0_i32_1 = arith.constant 0 : i32
    return %c0_i32, %c0_i32_0 : i32, i32
  }
  func.func @transform_1(%arg0: i32) -> (i32, i32) {
    %c0_i32 = arith.constant 0 : i32
    %c0_i32_0 = arith.constant 0 : i32
    %c0_i32_1 = arith.constant 0 : i32
    return %c0_i32, %c0_i32_0 : i32, i32
  }
  func.func @transform_2(%arg0: i32) -> (i32, i32, i32) {
    %c0_i32 = arith.constant 0 : i32
    %c0_i32_0 = arith.constant 0 : i32
    %c0_i32_1 = arith.constant 0 : i32
    %c0_i32_2 = arith.constant 0 : i32
    return %c0_i32, %c0_i32_0, %c0_i32_1 : i32, i32, i32
  }
  func.func @transform_3(%arg0: i32) -> (i32, i32) {
    %c0_i32 = arith.constant 0 : i32
    %c0_i32_0 = arith.constant 0 : i32
    %c0_i32_1 = arith.constant 0 : i32
    return %c0_i32, %c0_i32_0 : i32, i32
  }
  func.func @transform_4(%arg0: i32) -> (i32, i32) {
    %c0_i32 = arith.constant 0 : i32
    %c0_i32_0 = arith.constant 0 : i32
    %c0_i32_1 = arith.constant 0 : i32
    return %c0_i32, %c0_i32_0 : i32, i32
  }
  func.func @transform_5(%arg0: i32) -> (i32, i32) {
    %c0_i32 = arith.constant 0 : i32
    %c0_i32_0 = arith.constant 0 : i32
    %c0_i32_1 = arith.constant 0 : i32
    return %c0_i32, %c0_i32_0 : i32, i32
  }
  func.func @transform_6(%arg0: i32) -> (i32, i32, i32) {
    %c0_i32 = arith.constant 0 : i32
    %c0_i32_0 = arith.constant 0 : i32
    %c0_i32_1 = arith.constant 0 : i32
    %c0_i32_2 = arith.constant 0 : i32
    return %c0_i32, %c0_i32_0, %c0_i32_1 : i32, i32, i32
  }
  func.func @transform_7(%arg0: i32) -> (i32, i32) {
    %c0_i32 = arith.constant 0 : i32
    %c0_i32_0 = arith.constant 0 : i32
    %c0_i32_1 = arith.constant 0 : i32
    return %c0_i32, %c0_i32_0 : i32, i32
  }
  func.func @transform_8(%arg0: i32) -> (i32, i32) {
    %c0_i32 = arith.constant 0 : i32
    %c0_i32_0 = arith.constant 0 : i32
    %c0_i32_1 = arith.constant 0 : i32
    return %c0_i32, %c0_i32_0 : i32, i32
  }
  func.func @transform_9(%arg0: i32) -> (i32, i32) {
    %c0_i32 = arith.constant 0 : i32
    %c0_i32_0 = arith.constant 0 : i32
    %c0_i32_1 = arith.constant 0 : i32
    return %c0_i32, %c0_i32_0 : i32, i32
  }
  func.func @transform_10(%arg0: i32) -> (i32, i32) {
    %c0_i32 = arith.constant 0 : i32
    %c0_i32_0 = arith.constant 0 : i32
    %c0_i32_1 = arith.constant 0 : i32
    return %c0_i32, %c0_i32_0 : i32, i32
  }
  func.func @transform_11(%arg0: i32) -> (i32, i32) {
    %c0_i32 = arith.constant 0 : i32
    %c0_i32_0 = arith.constant 0 : i32
    %c0_i32_1 = arith.constant 0 : i32
    return %c0_i32, %c0_i32_0 : i32, i32
  }
  func.func @transform_12(%arg0: i32) -> (i32, i32) {
    %c0_i32 = arith.constant 0 : i32
    %c0_i32_0 = arith.constant 0 : i32
    return %c0_i32, %arg0 : i32, i32
  }
  func.func @transform_13(%arg0: i32) -> (i32, i32) {
    %c0_i32 = arith.constant 0 : i32
    %c0_i32_0 = arith.constant 0 : i32
    return %c0_i32, %arg0 : i32, i32
  }
  func.func @transform_14(%arg0: i32) -> (i32, i32) {
    %c0_i32 = arith.constant 0 : i32
    %c0_i32_0 = arith.constant 0 : i32
    return %c0_i32, %arg0 : i32, i32
  }
}

</mosaic_0001>

<llo_original>
// kernel: tpu_custom_call.1
$region0: #{tpu_custom_call.1}
  #allocation0 [shape = 'u32[]', space=smem, size = 0x4, offset = 0x4, fixed_abs, tag = 'smem constant byte address 0x4 - core index']
  #allocation1 [shape = 'u32[144,128]{1,0:T(1,128)}', space=vmem, size = 0x12000, scoped, tag = 'internal scratch']
  #allocation2 [shape = 'bf16[2,128]{1,0:T(2,128)(2,1)}', space=vmem, size = 0x200, scoped, tag = 'scratch operand']
  %s0 = inlined_call_operand.vmem [shape: s32[16,1], index: 0, kind: input, shape index: {}]
  %s1 = inlined_call_operand.hbm [shape: bf16[128,128], index: 1, kind: input, shape index: {}]
  %s2 = inlined_call_operand.hbm [shape: bf16[3,128,128], index: 2, kind: input, shape index: {}]
  %s3 = inlined_call_operand.hbm [shape: f32[1,128], index: 3, kind: input, shape index: {}]
  %s4 = inlined_call_operand.hbm [shape: f32[1,128], index: 4, kind: input, shape index: {}]
  %s5 = inlined_call_operand.hbm [shape: f32[1,128], index: 5, kind: input, shape index: {}]
  %s6 = inlined_call_operand.hbm [shape: bf16[3,128,128], index: 6, kind: input, shape index: {}]
  %s7 = inlined_call_operand.hbm [shape: f32[1,128], index: 7, kind: input, shape index: {}]
  %s8 = inlined_call_operand.hbm [shape: f32[1,128], index: 8, kind: input, shape index: {}]
  %s9 = inlined_call_operand.hbm [shape: f32[1,128], index: 9, kind: input, shape index: {}]
  %s10 = inlined_call_operand.hbm [shape: bf16[1024,128], index: 10, kind: input, shape index: {}]
  %s11 = inlined_call_operand.hbm [shape: f32[1,128], index: 11, kind: input, shape index: {}]
  %s12 = inlined_call_operand.hbm [shape: bf16[128,12288], index: 12, kind: input, shape index: {}]
  %s13 = inlined_call_operand.hbm [shape: f32[1,12288], index: 13, kind: input, shape index: {}]
  %s14 = inlined_call_operand.hbm [shape: f32[2,12288], index: 14, kind: output, shape index: {}]
  %s15 = sld [smem:[#allocation0]]
  $region145: #{tpu_custom_call.1} parent=0
    _
  %s17 = ssub.s32 1, %s15
  %s18 = scalar_select 0, %s17, %s15
  $region1: #{tpu_custom_call.1} parent=0
    #allocation3 [shape = 'u8[32768]{0}', space=vmem, size = 0x8000, scoped, tag = 'input window, operand 1, single buffered']
    #allocation4 [shape = 's32[2]{0}', space=sflag, size = 0x8, scoped, tag = 'scoped memory for tpu_custom_call.1']
    #allocation5 [shape = 's32[2]{0}', space=sflag, size = 0x8, scoped, tag = 'scoped memory for tpu_custom_call.1']
    #allocation6 [shape = 'u8[98304]{0}', space=vmem, size = 0x18000, scoped, tag = 'input window, operand 2, single buffered']
    #allocation7 [shape = 's32[1]{0}', space=sflag, size = 0x4, scoped, tag = 'scoped memory for tpu_custom_call.1']
    #allocation8 [shape = 'u8[512]{0}', space=vmem, size = 0x400, scoped, tag = 'input window, operand 3, single buffered']
    #allocation9 [shape = 'u8[512]{0}', space=vmem, size = 0x400, scoped, tag = 'input window, operand 4, single buffered']
    #allocation10 [shape = 's32[1]{0}', space=sflag, size = 0x4, scoped, tag = 'scoped memory for tpu_custom_call.1']
    #allocation11 [shape = 'u8[512]{0}', space=vmem, size = 0x400, scoped, tag = 'input window, operand 5, single buffered']
    #allocation12 [shape = 'u8[98304]{0}', space=vmem, size = 0x18000, scoped, tag = 'input window, operand 6, single buffered']
    #allocation13 [shape = 's32[1]{0}', space=sflag, size = 0x4, scoped, tag = 'scoped memory for tpu_custom_call.1']
    #allocation14 [shape = 'u8[512]{0}', space=vmem, size = 0x400, scoped, tag = 'input window, operand 7, single buffered']
    #allocation15 [shape = 'u8[512]{0}', space=vmem, size = 0x400, scoped, tag = 'input window, operand 8, single buffered']
    #allocation16 [shape = 's32[1]{0}', space=sflag, size = 0x4, scoped, tag = 'scoped memory for tpu_custom_call.1']
    #allocation17 [shape = 'u8[512]{0}', space=vmem, size = 0x400, scoped, tag = 'input window, operand 9, single buffered']
    #allocation18 [shape = 'u8[262144]{0}', space=vmem, size = 0x40000, scoped, tag = 'input window, operand 10, single buffered']
    #allocation19 [shape = 's32[1]{0}', space=sflag, size = 0x4, scoped, tag = 'scoped memory for tpu_custom_call.1']
    #allocation20 [shape = 'u8[512]{0}', space=vmem, size = 0x400, scoped, tag = 'input window, operand 11, single buffered']
    #allocation21 [shape = 'u8[2097152]{0}', space=vmem, size = 0x200000, scoped, tag = 'input window, operand 12']
    #allocation22 [shape = 's32[2]{0}', space=sflag, size = 0x8, scoped, tag = 'scoped memory for tpu_custom_call.1']
    #allocation23 [shape = 'u8[32768]{0}', space=vmem, size = 0x8000, scoped, tag = 'input window, operand 13']
    #allocation24 [shape = 'u8[65536]{0}', space=vmem, size = 0x10000, scoped, tag = 'output window, operand 0']
    %19 = vsyncpa [#allocation4], 0
    %20 = vsyncpa [#allocation7], 0
    %21 = vsyncpa [#allocation10], 0
    %22 = vsyncpa [#allocation13], 0
    %23 = vsyncpa [#allocation16], 0
    %24 = vsyncpa [#allocation19], 0
    %25 = vsyncpa [#allocation22], 0
    %s26 = scalar_lea.sflag [#allocation22], 1
    %27 = vsyncpa %s26, 0
    %28 = vsyncpa [#allocation5], 0
    %s29 = scalar_lea.sflag [#allocation5], 1
    %30 = vsyncpa %s29, 0
    loop: start=0, step=1, limit=5
    $region2: #{tpu_custom_call.1} parent=1 // loop_pre_header
      _
    $region3: #{tpu_custom_call.1} parent=1 // loop_header
      %s32 = sphi 0, %s36
      %p33 = scmp.ge.s32.totalorder %s32, 5
      %s40 = sphi 0, %s40
      %s42 = sphi 0, %s40
      %s43 = sphi 0, %s42
      %s57 = sphi 0, %s43
      %s61 = sphi 0, %s61
      %s63 = sphi 0, %s61
      %s64 = sphi 0, %s63
      %s78 = sphi 0, %s64
      %s82 = sphi 0, %s82
      %s84 = sphi 0, %s82
      %s85 = sphi 0, %s84
      %s99 = sphi 0, %s85
      %s103 = sphi 0, %s103
      %s105 = sphi 0, %s103
      %s106 = sphi 0, %s105
      %s120 = sphi 0, %s106
      %s124 = sphi 0, %s124
      %s126 = sphi 0, %s124
      %s127 = sphi 0, %s126
      %s141 = sphi 0, %s127
      %s145 = sphi 0, %s145
      %s147 = sphi 0, %s145
      %s148 = sphi 0, %s147
      %s162 = sphi 0, %s148
      %s166 = sphi 0, %s166
      %s168 = sphi 0, %s166
      %s169 = sphi 0, %s168
      %s183 = sphi 0, %s169
      %s187 = sphi 0, %s187
      %s189 = sphi 0, %s187
      %s190 = sphi 0, %s189
      %s204 = sphi 0, %s190
      %s208 = sphi 0, %s208
      %s210 = sphi 0, %s208
      %s211 = sphi 0, %s210
      %s225 = sphi 0, %s211
      %s229 = sphi 0, %s229
      %s231 = sphi 0, %s229
      %s232 = sphi 0, %s231
      %s246 = sphi 0, %s232
      %s250 = sphi 0, %s250
      %s252 = sphi 0, %s250
      %s253 = sphi 0, %s252
      %s267 = sphi 0, %s253
      %s271 = sphi 0, %s271
      %s273 = sphi 0, %s271
      %s274 = sphi 0, %s273
      %s288 = sphi 0, %s274
      %s294 = sphi 0, %s296
      %s297 = sphi 0, %s294
      %s298 = sphi 0, %s297
      %s314 = sphi 0, %s298
      %s320 = sphi 0, %s322
      %s323 = sphi 0, %s320
      %s324 = sphi 0, %s323
      %s340 = sphi 0, %s324
      %s346 = sphi 0, %s348
      %s349 = sphi 0, %s346
      %s350 = sphi 0, %s349
      %s366 = sphi 0, %s350
    $region4: #{tpu_custom_call.1} parent=1 // loop_header_branch
      %35 = sbr.rel (%p33) target = $region8
    $region5: #{tpu_custom_call.1} parent=1 // loop_body
      %s37 = ssub.s32 %s32, 1
      %s38 = ssub.s32 %s32, 2
      %s39 = sadd.s32 %s32, 1
      %s41 = sadd.s32 %s40, 1
      %p44 = scmp.eq.s32.totalorder %s32, 2
      %p45 = scmp.ne.s32.totalorder %s40, %s42
      %p46 = scmp.eq.s32.totalorder %s32, 0
      %p47 = por %p45, %p46
      %p48 = scmp.ne.s32.totalorder %s40, %s42
      %p49 = scmp.eq.s32.totalorder %s37, 2
      %p50 = por %p48, %p49
      %p51 = scmp.ne.s32.totalorder %s42, %s43
      %p52 = scmp.eq.s32.totalorder %s37, 0
      %p53 = por %p51, %p52
      %p54 = scmp.ne.s32.totalorder %s42, %s43
      %p55 = scmp.eq.s32.totalorder %s38, 2
      %p56 = por %p54, %p55
      %p58 = scmp.ne.s32.totalorder %s43, %s57
      %p59 = scmp.eq.s32.totalorder %s38, 0
      %p60 = por %p58, %p59
      %s62 = sadd.s32 %s61, 1
      %p65 = scmp.eq.s32.totalorder %s32, 2
      %p66 = scmp.ne.s32.totalorder %s61, %s63
      %p67 = scmp.eq.s32.totalorder %s32, 0
      %p68 = por %p66, %p67
      %p69 = scmp.ne.s32.totalorder %s61, %s63
      %p70 = scmp.eq.s32.totalorder %s37, 2
      %p71 = por %p69, %p70
      %p72 = scmp.ne.s32.totalorder %s63, %s64
      %p73 = scmp.eq.s32.totalorder %s37, 0
      %p74 = por %p72, %p73
      %p75 = scmp.ne.s32.totalorder %s63, %s64
      %p76 = scmp.eq.s32.totalorder %s38, 2
      %p77 = por %p75, %p76
      %p79 = scmp.ne.s32.totalorder %s64, %s78
      %p80 = scmp.eq.s32.totalorder %s38, 0
      %p81 = por %p79, %p80
      %s83 = sadd.s32 %s82, 1
      %p86 = scmp.eq.s32.totalorder %s32, 2
      %p87 = scmp.ne.s32.totalorder %s82, %s84
      %p88 = scmp.eq.s32.totalorder %s32, 0
      %p89 = por %p87, %p88
      %p90 = scmp.ne.s32.totalorder %s82, %s84
      %p91 = scmp.eq.s32.totalorder %s37, 2
      %p92 = por %p90, %p91
      %p93 = scmp.ne.s32.totalorder %s84, %s85
      %p94 = scmp.eq.s32.totalorder %s37, 0
      %p95 = por %p93, %p94
      %p96 = scmp.ne.s32.totalorder %s84, %s85
      %p97 = scmp.eq.s32.totalorder %s38, 2
      %p98 = por %p96, %p97
      %p100 = scmp.ne.s32.totalorder %s85, %s99
      %p101 = scmp.eq.s32.totalorder %s38, 0
      %p102 = por %p100, %p101
      %s104 = sadd.s32 %s103, 1
      %p107 = scmp.eq.s32.totalorder %s32, 2
      %p108 = scmp.ne.s32.totalorder %s103, %s105
      %p109 = scmp.eq.s32.totalorder %s32, 0
      %p110 = por %p108, %p109
      %p111 = scmp.ne.s32.totalorder %s103, %s105
      %p112 = scmp.eq.s32.totalorder %s37, 2
      %p113 = por %p111, %p112
      %p114 = scmp.ne.s32.totalorder %s105, %s106
      %p115 = scmp.eq.s32.totalorder %s37, 0
      %p116 = por %p114, %p115
      %p117 = scmp.ne.s32.totalorder %s105, %s106
      %p118 = scmp.eq.s32.totalorder %s38, 2
      %p119 = por %p117, %p118
      %p121 = scmp.ne.s32.totalorder %s106, %s120
      %p122 = scmp.eq.s32.totalorder %s38, 0
      %p123 = por %p121, %p122
      %s125 = sadd.s32 %s124, 1
      %p128 = scmp.eq.s32.totalorder %s32, 2
      %p129 = scmp.ne.s32.totalorder %s124, %s126
      %p130 = scmp.eq.s32.totalorder %s32, 0
      %p131 = por %p129, %p130
      %p132 = scmp.ne.s32.totalorder %s124, %s126
      %p133 = scmp.eq.s32.totalorder %s37, 2
      %p134 = por %p132, %p133
      %p135 = scmp.ne.s32.totalorder %s126, %s127
      %p136 = scmp.eq.s32.totalorder %s37, 0
      %p137 = por %p135, %p136
      %p138 = scmp.ne.s32.totalorder %s126, %s127
      %p139 = scmp.eq.s32.totalorder %s38, 2
      %p140 = por %p138, %p139
      %p142 = scmp.ne.s32.totalorder %s127, %s141
      %p143 = scmp.eq.s32.totalorder %s38, 0
      %p144 = por %p142, %p143
      %s146 = sadd.s32 %s145, 1
      %p149 = scmp.eq.s32.totalorder %s32, 2
      %p150 = scmp.ne.s32.totalorder %s145, %s147
      %p151 = scmp.eq.s32.totalorder %s32, 0
      %p152 = por %p150, %p151
      %p153 = scmp.ne.s32.totalorder %s145, %s147
      %p154 = scmp.eq.s32.totalorder %s37, 2
      %p155 = por %p153, %p154
      %p156 = scmp.ne.s32.totalorder %s147, %s148
      %p157 = scmp.eq.s32.totalorder %s37, 0
      %p158 = por %p156, %p157
      %p159 = scmp.ne.s32.totalorder %s147, %s148
      %p160 = scmp.eq.s32.totalorder %s38, 2
      %p161 = por %p159, %p160
      %p163 = scmp.ne.s32.totalorder %s148, %s162
      %p164 = scmp.eq.s32.totalorder %s38, 0
      %p165 = por %p163, %p164
      %s167 = sadd.s32 %s166, 1
      %p170 = scmp.eq.s32.totalorder %s32, 2
      %p171 = scmp.ne.s32.totalorder %s166, %s168
      %p172 = scmp.eq.s32.totalorder %s32, 0
      %p173 = por %p171, %p172
      %p174 = scmp.ne.s32.totalorder %s166, %s168
      %p175 = scmp.eq.s32.totalorder %s37, 2
      %p176 = por %p174, %p175
      %p177 = scmp.ne.s32.totalorder %s168, %s169
      %p178 = scmp.eq.s32.totalorder %s37, 0
      %p179 = por %p177, %p178
      %p180 = scmp.ne.s32.totalorder %s168, %s169
      %p181 = scmp.eq.s32.totalorder %s38, 2
      %p182 = por %p180, %p181
      %p184 = scmp.ne.s32.totalorder %s169, %s183
      %p185 = scmp.eq.s32.totalorder %s38, 0
      %p186 = por %p184, %p185
      %s188 = sadd.s32 %s187, 1
      %p191 = scmp.eq.s32.totalorder %s32, 2
      %p192 = scmp.ne.s32.totalorder %s187, %s189
      %p193 = scmp.eq.s32.totalorder %s32, 0
      %p194 = por %p192, %p193
      %p195 = scmp.ne.s32.totalorder %s187, %s189
      %p196 = scmp.eq.s32.totalorder %s37, 2
      %p197 = por %p195, %p196
      %p198 = scmp.ne.s32.totalorder %s189, %s190
      %p199 = scmp.eq.s32.totalorder %s37, 0
      %p200 = por %p198, %p199
      %p201 = scmp.ne.s32.totalorder %s189, %s190
      %p202 = scmp.eq.s32.totalorder %s38, 2
      %p203 = por %p201, %p202
      %p205 = scmp.ne.s32.totalorder %s190, %s204
      %p206 = scmp.eq.s32.totalorder %s38, 0
      %p207 = por %p205, %p206
      %s209 = sadd.s32 %s208, 1
      %p212 = scmp.eq.s32.totalorder %s32, 2
      %p213 = scmp.ne.s32.totalorder %s208, %s210
      %p214 = scmp.eq.s32.totalorder %s32, 0
      %p215 = por %p213, %p214
      %p216 = scmp.ne.s32.totalorder %s208, %s210
      %p217 = scmp.eq.s32.totalorder %s37, 2
      %p218 = por %p216, %p217
      %p219 = scmp.ne.s32.totalorder %s210, %s211
      %p220 = scmp.eq.s32.totalorder %s37, 0
      %p221 = por %p219, %p220
      %p222 = scmp.ne.s32.totalorder %s210, %s211
      %p223 = scmp.eq.s32.totalorder %s38, 2
      %p224 = por %p222, %p223
      %p226 = scmp.ne.s32.totalorder %s211, %s225
      %p227 = scmp.eq.s32.totalorder %s38, 0
      %p228 = por %p226, %p227
      %s230 = sadd.s32 %s229, 1
      %p233 = scmp.eq.s32.totalorder %s32, 2
      %p234 = scmp.ne.s32.totalorder %s229, %s231
      %p235 = scmp.eq.s32.totalorder %s32, 0
      %p236 = por %p234, %p235
      %p237 = scmp.ne.s32.totalorder %s229, %s231
      %p238 = scmp.eq.s32.totalorder %s37, 2
      %p239 = por %p237, %p238
      %p240 = scmp.ne.s32.totalorder %s231, %s232
      %p241 = scmp.eq.s32.totalorder %s37, 0
      %p242 = por %p240, %p241
      %p243 = scmp.ne.s32.totalorder %s231, %s232
      %p244 = scmp.eq.s32.totalorder %s38, 2
      %p245 = por %p243, %p244
      %p247 = scmp.ne.s32.totalorder %s232, %s246
      %p248 = scmp.eq.s32.totalorder %s38, 0
      %p249 = por %p247, %p248
      %s251 = sadd.s32 %s250, 1
      %p254 = scmp.eq.s32.totalorder %s32, 2
      %p255 = scmp.ne.s32.totalorder %s250, %s252
      %p256 = scmp.eq.s32.totalorder %s32, 0
      %p257 = por %p255, %p256
      %p258 = scmp.ne.s32.totalorder %s250, %s252
      %p259 = scmp.eq.s32.totalorder %s37, 2
      %p260 = por %p258, %p259
      %p261 = scmp.ne.s32.totalorder %s252, %s253
      %p262 = scmp.eq.s32.totalorder %s37, 0
      %p263 = por %p261, %p262
      %p264 = scmp.ne.s32.totalorder %s252, %s253
      %p265 = scmp.eq.s32.totalorder %s38, 2
      %p266 = por %p264, %p265
      %p268 = scmp.ne.s32.totalorder %s253, %s267
      %p269 = scmp.eq.s32.totalorder %s38, 0
      %p270 = por %p268, %p269
      %s272 = sadd.s32 %s271, 1
      %p275 = scmp.eq.s32.totalorder %s32, 2
      %p276 = scmp.ne.s32.totalorder %s271, %s273
      %p277 = scmp.eq.s32.totalorder %s32, 0
      %p278 = por %p276, %p277
      %p279 = scmp.ne.s32.totalorder %s271, %s273
      %p280 = scmp.eq.s32.totalorder %s37, 2
      %p281 = por %p279, %p280
      %p282 = scmp.ne.s32.totalorder %s273, %s274
      %p283 = scmp.eq.s32.totalorder %s37, 0
      %p284 = por %p282, %p283
      %p285 = scmp.ne.s32.totalorder %s273, %s274
      %p286 = scmp.eq.s32.totalorder %s38, 2
      %p287 = por %p285, %p286
      %p289 = scmp.ne.s32.totalorder %s274, %s288
      %p290 = scmp.eq.s32.totalorder %s38, 0
      %p291 = por %p289, %p290
      %s292 = ssub.s32 %s32, %s39
      %p293 = scmp.eq.s32.totalorder %s292, 0
      %s295 = sadd.s32 %s294, 1
      %s296 = scalar_select %p293, %s294, %s295
      %p299 = pneg %p293
      %p300 = scmp.eq.s32.totalorder %s32, 2
      %p301 = por %p299, %p300
      %p302 = scmp.ne.s32.totalorder %s294, %s297
      %p303 = scmp.eq.s32.totalorder %s32, 0
      %p304 = por %p302, %p303
      %p305 = scmp.ne.s32.totalorder %s294, %s297
      %p306 = scmp.eq.s32.totalorder %s37, 2
      %p307 = por %p305, %p306
      %p308 = scmp.ne.s32.totalorder %s297, %s298
      %p309 = scmp.eq.s32.totalorder %s37, 0
      %p310 = por %p308, %p309
      %p311 = scmp.ne.s32.totalorder %s297, %s298
      %p312 = scmp.eq.s32.totalorder %s38, 2
      %p313 = por %p311, %p312
      %p315 = scmp.ne.s32.totalorder %s298, %s314
      %p316 = scmp.eq.s32.totalorder %s38, 0
      %p317 = por %p315, %p316
      %s318 = ssub.s32 %s32, %s39
      %p319 = scmp.eq.s32.totalorder %s318, 0
      %s321 = sadd.s32 %s320, 1
      %s322 = scalar_select %p319, %s320, %s321
      %p325 = pneg %p319
      %p326 = scmp.eq.s32.totalorder %s32, 2
      %p327 = por %p325, %p326
      %p328 = scmp.ne.s32.totalorder %s320, %s323
      %p329 = scmp.eq.s32.totalorder %s32, 0
      %p330 = por %p328, %p329
      %p331 = scmp.ne.s32.totalorder %s320, %s323
      %p332 = scmp.eq.s32.totalorder %s37, 2
      %p333 = por %p331, %p332
      %p334 = scmp.ne.s32.totalorder %s323, %s324
      %p335 = scmp.eq.s32.totalorder %s37, 0
      %p336 = por %p334, %p335
      %p337 = scmp.ne.s32.totalorder %s323, %s324
      %p338 = scmp.eq.s32.totalorder %s38, 2
      %p339 = por %p337, %p338
      %p341 = scmp.ne.s32.totalorder %s324, %s340
      %p342 = scmp.eq.s32.totalorder %s38, 0
      %p343 = por %p341, %p342
      %s344 = ssub.s32 %s32, %s39
      %p345 = scmp.eq.s32.totalorder %s344, 0
      %s347 = sadd.s32 %s346, 1
      %s348 = scalar_select %p345, %s346, %s347
      %p351 = pneg %p345
      %p352 = scmp.eq.s32.totalorder %s32, 2
      %p353 = por %p351, %p352
      %p354 = scmp.ne.s32.totalorder %s346, %s349
      %p355 = scmp.eq.s32.totalorder %s32, 0
      %p356 = por %p354, %p355
      %p357 = scmp.ne.s32.totalorder %s346, %s349
      %p358 = scmp.eq.s32.totalorder %s37, 2
      %p359 = por %p357, %p358
      %p360 = scmp.ne.s32.totalorder %s349, %s350
      %p361 = scmp.eq.s32.totalorder %s37, 0
      %p362 = por %p360, %p361
      %p363 = scmp.ne.s32.totalorder %s349, %s350
      %p364 = scmp.eq.s32.totalorder %s38, 2
      %p365 = por %p363, %p364
      %p367 = scmp.ne.s32.totalorder %s350, %s366
      %p368 = scmp.eq.s32.totalorder %s38, 0
      %p369 = por %p367, %p368
      %p370 = scmp.le.s32.totalorder 1, %s32
      %p371 = scmp.lt.s32.totalorder %s32, 4
      %p372 = pnand %p370, %p371
      %p373 = pneg %p372
      // Predicated region
      $region9: #{tpu_custom_call.1} parent=5 // pred_check
        _
      $region10: #{tpu_custom_call.1} parent=5 // pred_check_branch
        %375 = sbr.rel (%p372) target = $region12
      $region11: #{tpu_custom_call.1} parent=5 // pred_region
        %s376 = ssub.s32 %s32, 1
        // Predicated region
        $region13: #{tpu_custom_call.1} parent=11 // pred_check
          %p377 = pneg %p53
        $region14: #{tpu_custom_call.1} parent=11 // pred_check_branch
          %379 = sbr.rel (%p377) target = $region16
        $region15: #{tpu_custom_call.1} parent=11 // pred_region
          _
        $region16: #{tpu_custom_call.1} parent=11 // pred_fallthru
          _
        // Predicated region
        $region17: #{tpu_custom_call.1} parent=11 // pred_check
          %p380 = pneg %p74
        $region18: #{tpu_custom_call.1} parent=11 // pred_check_branch
          %382 = sbr.rel (%p380) target = $region20
        $region19: #{tpu_custom_call.1} parent=11 // pred_region
          %s384 = ssub.s32 1024, 1024
          %385 = vsyncadd [#allocation4], %s384
          %s386 = sshll.u32 [#allocation3], 4
          %s387 = int_to_ptr.vmem [resolvable:$true] %s386
          %392 = dma.hbm_to_vmem [thread:$0]  %s1, 1024, %s387, [#allocation4], 64, 64, 4
        $region20: #{tpu_custom_call.1} parent=11 // pred_fallthru
          _
        // Predicated region
        $region21: #{tpu_custom_call.1} parent=11 // pred_check
          %p393 = pneg %p95
        $region22: #{tpu_custom_call.1} parent=11 // pred_check_branch
          %395 = sbr.rel (%p393) target = $region24
        $region23: #{tpu_custom_call.1} parent=11 // pred_region
          %s397 = ssub.s32 3072, 3072
          %398 = vsyncadd [#allocation7], %s397
          %s399 = sshll.u32 [#allocation6], 4
          %s400 = int_to_ptr.vmem [resolvable:$true] %s399
          %405 = dma.hbm_to_vmem [thread:$0]  %s2, 3072, %s400, [#allocation7], 64, 64, 4
        $region24: #{tpu_custom_call.1} parent=11 // pred_fallthru
          _
        // Predicated region
        $region25: #{tpu_custom_call.1} parent=11 // pred_check
          %p406 = pneg %p116
        $region26: #{tpu_custom_call.1} parent=11 // pred_check_branch
          %408 = sbr.rel (%p406) target = $region28
        $region27: #{tpu_custom_call.1} parent=11 // pred_region
          %s410 = ssub.s32 16, 16
          %411 = vsyncadd [#allocation7], %s410
          %s413 = sshll.u32 [#allocation8], 4
          %s414 = int_to_ptr.vmem [resolvable:$true] %s413
          %416 = dma.hbm_to_vmem [thread:$0]  %s3, 16, %s414, [#allocation7]
        $region28: #{tpu_custom_call.1} parent=11 // pred_fallthru
          _
        // Predicated region
        $region29: #{tpu_custom_call.1} parent=11 // pred_check
          %p417 = pneg %p137
        $region30: #{tpu_custom_call.1} parent=11 // pred_check_branch
          %419 = sbr.rel (%p417) target = $region32
        $region31: #{tpu_custom_call.1} parent=11 // pred_region
          %s421 = ssub.s32 16, 16
          %422 = vsyncadd [#allocation10], %s421
          %s424 = sshll.u32 [#allocation9], 4
          %s425 = int_to_ptr.vmem [resolvable:$true] %s424
          %427 = dma.hbm_to_vmem [thread:$0]  %s4, 16, %s425, [#allocation10]
        $region32: #{tpu_custom_call.1} parent=11 // pred_fallthru
          _
        // Predicated region
        $region33: #{tpu_custom_call.1} parent=11 // pred_check
          %p428 = pneg %p158
        $region34: #{tpu_custom_call.1} parent=11 // pred_check_branch
          %430 = sbr.rel (%p428) target = $region36
        $region35: #{tpu_custom_call.1} parent=11 // pred_region
          %s432 = ssub.s32 16, 16
          %433 = vsyncadd [#allocation10], %s432
          %s435 = sshll.u32 [#allocation11], 4
          %s436 = int_to_ptr.vmem [resolvable:$true] %s435
          %438 = dma.hbm_to_vmem [thread:$0]  %s5, 16, %s436, [#allocation10]
        $region36: #{tpu_custom_call.1} parent=11 // pred_fallthru
          _
        // Predicated region
        $region37: #{tpu_custom_call.1} parent=11 // pred_check
          %p439 = pneg %p179
        $region38: #{tpu_custom_call.1} parent=11 // pred_check_branch
          %441 = sbr.rel (%p439) target = $region40
        $region39: #{tpu_custom_call.1} parent=11 // pred_region
          %s443 = ssub.s32 3072, 3072
          %444 = vsyncadd [#allocation13], %s443
          %s445 = sshll.u32 [#allocation12], 4
          %s446 = int_to_ptr.vmem [resolvable:$true] %s445
          %451 = dma.hbm_to_vmem [thread:$0]  %s6, 3072, %s446, [#allocation13], 64, 64, 4
        $region40: #{tpu_custom_call.1} parent=11 // pred_fallthru
          _
        // Predicated region
        $region41: #{tpu_custom_call.1} parent=11 // pred_check
          %p452 = pneg %p200
        $region42: #{tpu_custom_call.1} parent=11 // pred_check_branch
          %454 = sbr.rel (%p452) target = $region44
        $region43: #{tpu_custom_call.1} parent=11 // pred_region
          %s456 = ssub.s32 16, 16
          %457 = vsyncadd [#allocation13], %s456
          %s459 = sshll.u32 [#allocation14], 4
          %s460 = int_to_ptr.vmem [resolvable:$true] %s459
          %462 = dma.hbm_to_vmem [thread:$0]  %s7, 16, %s460, [#allocation13]
        $region44: #{tpu_custom_call.1} parent=11 // pred_fallthru
          _
        // Predicated region
        $region45: #{tpu_custom_call.1} parent=11 // pred_check
          %p463 = pneg %p221
        $region46: #{tpu_custom_call.1} parent=11 // pred_check_branch
          %465 = sbr.rel (%p463) target = $region48
        $region47: #{tpu_custom_call.1} parent=11 // pred_region
          %s467 = ssub.s32 16, 16
          %468 = vsyncadd [#allocation16], %s467
          %s470 = sshll.u32 [#allocation15], 4
          %s471 = int_to_ptr.vmem [resolvable:$true] %s470
          %473 = dma.hbm_to_vmem [thread:$0]  %s8, 16, %s471, [#allocation16]
        $region48: #{tpu_custom_call.1} parent=11 // pred_fallthru
          _
        // Predicated region
        $region49: #{tpu_custom_call.1} parent=11 // pred_check
          %p474 = pneg %p242
        $region50: #{tpu_custom_call.1} parent=11 // pred_check_branch
          %476 = sbr.rel (%p474) target = $region52
        $region51: #{tpu_custom_call.1} parent=11 // pred_region
          %s478 = ssub.s32 16, 16
          %479 = vsyncadd [#allocation16], %s478
          %s481 = sshll.u32 [#allocation17], 4
          %s482 = int_to_ptr.vmem [resolvable:$true] %s481
          %484 = dma.hbm_to_vmem [thread:$0]  %s9, 16, %s482, [#allocation16]
        $region52: #{tpu_custom_call.1} parent=11 // pred_fallthru
          _
        // Predicated region
        $region53: #{tpu_custom_call.1} parent=11 // pred_check
          %p485 = pneg %p263
        $region54: #{tpu_custom_call.1} parent=11 // pred_check_branch
          %487 = sbr.rel (%p485) target = $region56
        $region55: #{tpu_custom_call.1} parent=11 // pred_region
          %s489 = ssub.s32 8192, 8192
          %490 = vsyncadd [#allocation19], %s489
          %s491 = sshll.u32 [#allocation18], 4
          %s492 = int_to_ptr.vmem [resolvable:$true] %s491
          %497 = dma.hbm_to_vmem [thread:$0]  %s10, 8192, %s492, [#allocation19], 64, 64, 4
        $region56: #{tpu_custom_call.1} parent=11 // pred_fallthru
          _
        // Predicated region
        $region57: #{tpu_custom_call.1} parent=11 // pred_check
          %p498 = pneg %p284
        $region58: #{tpu_custom_call.1} parent=11 // pred_check_branch
          %500 = sbr.rel (%p498) target = $region60
        $region59: #{tpu_custom_call.1} parent=11 // pred_region
          %s502 = ssub.s32 16, 16
          %503 = vsyncadd [#allocation19], %s502
          %s505 = sshll.u32 [#allocation20], 4
          %s506 = int_to_ptr.vmem [resolvable:$true] %s505
          %508 = dma.hbm_to_vmem [thread:$0]  %s11, 16, %s506, [#allocation19]
        $region60: #{tpu_custom_call.1} parent=11 // pred_fallthru
          _
      $region12: #{tpu_custom_call.1} parent=5 // pred_fallthru
        _
      %p509 = scmp.lt.s32.totalorder %s32, 3
      // Predicated region
      $region61: #{tpu_custom_call.1} parent=5 // pred_check
        %p510 = pneg %p509
      $region62: #{tpu_custom_call.1} parent=5 // pred_check_branch
        %512 = sbr.rel (%p510) target = $region64
      $region63: #{tpu_custom_call.1} parent=5 // pred_region
        // Predicated region
        $region65: #{tpu_custom_call.1} parent=63 // pred_check
          %p513 = pneg %p304
        $region66: #{tpu_custom_call.1} parent=63 // pred_check_branch
          %515 = sbr.rel (%p513) target = $region68
        $region67: #{tpu_custom_call.1} parent=63 // pred_region
          %s516 = sand.u32 %s32, 1
          %s517 = scalar_lea.sflag [#allocation22], %s516
          %s518 = sand.u32 %s294, 1
          %s519 = smul.addr %s518, 2048
          %s520 = scalar_lea.vmem [#allocation21], %s519
          %s521 = smul.u32 32, %s32
          %s523 = ssub.s32 32768, 32768
          %524 = vsyncadd %s517, %s523
          %s525 = smul.addr %s521, 64
          %s526 = scalar_lea.hbm %s12, %s525
          %s527 = sshll.u32 %s520, 4
          %s528 = int_to_ptr.vmem [resolvable:$true] %s527
          %533 = dma.hbm_to_vmem [thread:$0]  %s526, 32768, %s528, %s517, 6144, 2048, 128
        $region68: #{tpu_custom_call.1} parent=63 // pred_fallthru
          _
        // Predicated region
        $region69: #{tpu_custom_call.1} parent=63 // pred_check
          %p534 = pneg %p330
        $region70: #{tpu_custom_call.1} parent=63 // pred_check_branch
          %536 = sbr.rel (%p534) target = $region72
        $region71: #{tpu_custom_call.1} parent=63 // pred_region
          %s537 = sand.u32 %s32, 1
          %s538 = scalar_lea.sflag [#allocation22], %s537
          %s539 = sand.u32 %s320, 1
          %s540 = smul.addr %s539, 32
          %s541 = scalar_lea.vmem [#allocation23], %s540
          %s542 = smul.u32 32, %s32
          %s544 = ssub.s32 512, 512
          %545 = vsyncadd %s538, %s544
          %s546 = smul.addr %s542, 16
          %s547 = scalar_lea.hbm %s13, %s546
          %s549 = sshll.u32 %s541, 4
          %s550 = int_to_ptr.vmem [resolvable:$true] %s549
          %552 = dma.hbm_to_vmem [thread:$0]  %s547, 512, %s550, %s538
        $region72: #{tpu_custom_call.1} parent=63 // pred_fallthru
          _
      $region64: #{tpu_custom_call.1} parent=5 // pred_fallthru
        _
      %p553 = scmp.le.s32.totalorder 1, %s32
      %p554 = scmp.lt.s32.totalorder %s32, 4
      %p555 = pnand %p553, %p554
      %p556 = pneg %p555
      // Predicated region
      $region73: #{tpu_custom_call.1} parent=5 // pred_check
        _
      $region74: #{tpu_custom_call.1} parent=5 // pred_check_branch
        %558 = sbr.rel (%p555) target = $region76
      $region75: #{tpu_custom_call.1} parent=5 // pred_region
        %s559 = ssub.s32 %s32, 1
        // Predicated region
        $region77: #{tpu_custom_call.1} parent=75 // pred_check
          %p560 = pneg %p74
        $region78: #{tpu_custom_call.1} parent=75 // pred_check_branch
          %562 = sbr.rel (%p560) target = $region80
        $region79: #{tpu_custom_call.1} parent=75 // pred_region
          %563 = dma.done [#allocation4], 1024
        $region80: #{tpu_custom_call.1} parent=75 // pred_fallthru
          _
        // Predicated region
        $region81: #{tpu_custom_call.1} parent=75 // pred_check
          %p564 = pneg %p95
        $region82: #{tpu_custom_call.1} parent=75 // pred_check_branch
          %566 = sbr.rel (%p564) target = $region84
        $region83: #{tpu_custom_call.1} parent=75 // pred_region
          %567 = dma.done [#allocation7], 3072
        $region84: #{tpu_custom_call.1} parent=75 // pred_fallthru
          _
        // Predicated region
        $region85: #{tpu_custom_call.1} parent=75 // pred_check
          %p568 = pneg %p116
        $region86: #{tpu_custom_call.1} parent=75 // pred_check_branch
          %570 = sbr.rel (%p568) target = $region88
        $region87: #{tpu_custom_call.1} parent=75 // pred_region
          %571 = dma.done [#allocation7], 16
        $region88: #{tpu_custom_call.1} parent=75 // pred_fallthru
          _
        // Predicated region
        $region89: #{tpu_custom_call.1} parent=75 // pred_check
          %p572 = pneg %p137
        $region90: #{tpu_custom_call.1} parent=75 // pred_check_branch
          %574 = sbr.rel (%p572) target = $region92
        $region91: #{tpu_custom_call.1} parent=75 // pred_region
          %575 = dma.done [#allocation10], 16
        $region92: #{tpu_custom_call.1} parent=75 // pred_fallthru
          _
        // Predicated region
        $region93: #{tpu_custom_call.1} parent=75 // pred_check
          %p576 = pneg %p158
        $region94: #{tpu_custom_call.1} parent=75 // pred_check_branch
          %578 = sbr.rel (%p576) target = $region96
        $region95: #{tpu_custom_call.1} parent=75 // pred_region
          %579 = dma.done [#allocation10], 16
        $region96: #{tpu_custom_call.1} parent=75 // pred_fallthru
          _
        // Predicated region
        $region97: #{tpu_custom_call.1} parent=75 // pred_check
          %p580 = pneg %p179
        $region98: #{tpu_custom_call.1} parent=75 // pred_check_branch
          %582 = sbr.rel (%p580) target = $region100
        $region99: #{tpu_custom_call.1} parent=75 // pred_region
          %583 = dma.done [#allocation13], 3072
        $region100: #{tpu_custom_call.1} parent=75 // pred_fallthru
          _
        // Predicated region
        $region101: #{tpu_custom_call.1} parent=75 // pred_check
          %p584 = pneg %p200
        $region102: #{tpu_custom_call.1} parent=75 // pred_check_branch
          %586 = sbr.rel (%p584) target = $region104
        $region103: #{tpu_custom_call.1} parent=75 // pred_region
          %587 = dma.done [#allocation13], 16
        $region104: #{tpu_custom_call.1} parent=75 // pred_fallthru
          _
        // Predicated region
        $region105: #{tpu_custom_call.1} parent=75 // pred_check
          %p588 = pneg %p221
        $region106: #{tpu_custom_call.1} parent=75 // pred_check_branch
          %590 = sbr.rel (%p588) target = $region108
        $region107: #{tpu_custom_call.1} parent=75 // pred_region
          %591 = dma.done [#allocation16], 16
        $region108: #{tpu_custom_call.1} parent=75 // pred_fallthru
          _
        // Predicated region
        $region109: #{tpu_custom_call.1} parent=75 // pred_check
          %p592 = pneg %p242
        $region110: #{tpu_custom_call.1} parent=75 // pred_check_branch
          %594 = sbr.rel (%p592) target = $region112
        $region111: #{tpu_custom_call.1} parent=75 // pred_region
          %595 = dma.done [#allocation16], 16
        $region112: #{tpu_custom_call.1} parent=75 // pred_fallthru
          _
        // Predicated region
        $region113: #{tpu_custom_call.1} parent=75 // pred_check
          %p596 = pneg %p263
        $region114: #{tpu_custom_call.1} parent=75 // pred_check_branch
          %598 = sbr.rel (%p596) target = $region116
        $region115: #{tpu_custom_call.1} parent=75 // pred_region
          %599 = dma.done [#allocation19], 8192
        $region116: #{tpu_custom_call.1} parent=75 // pred_fallthru
          _
        // Predicated region
        $region117: #{tpu_custom_call.1} parent=75 // pred_check
          %p600 = pneg %p284
        $region118: #{tpu_custom_call.1} parent=75 // pred_check_branch
          %602 = sbr.rel (%p600) target = $region120
        $region119: #{tpu_custom_call.1} parent=75 // pred_region
          %603 = dma.done [#allocation19], 16
        $region120: #{tpu_custom_call.1} parent=75 // pred_fallthru
          _
        %s604 = sand.u32 %s37, 1
        %s605 = scalar_lea.sflag [#allocation22], %s604
        %s606 = sand.u32 %s297, 1
        %s607 = smul.addr %s606, 2048
        %s608 = scalar_lea.vmem [#allocation21], %s607
        // Predicated region
        $region121: #{tpu_custom_call.1} parent=75 // pred_check
          %p609 = pneg %p310
        $region122: #{tpu_custom_call.1} parent=75 // pred_check_branch
          %611 = sbr.rel (%p609) target = $region124
        $region123: #{tpu_custom_call.1} parent=75 // pred_region
          %612 = dma.done %s605, 32768
        $region124: #{tpu_custom_call.1} parent=75 // pred_fallthru
          _
        %s613 = sand.u32 %s37, 1
        %s614 = scalar_lea.sflag [#allocation22], %s613
        %s615 = sand.u32 %s323, 1
        %s616 = smul.addr %s615, 32
        %s617 = scalar_lea.vmem [#allocation23], %s616
        // Predicated region
        $region125: #{tpu_custom_call.1} parent=75 // pred_check
          %p618 = pneg %p336
        $region126: #{tpu_custom_call.1} parent=75 // pred_check_branch
          %620 = sbr.rel (%p618) target = $region128
        $region127: #{tpu_custom_call.1} parent=75 // pred_region
          %621 = dma.done %s614, 512
        $region128: #{tpu_custom_call.1} parent=75 // pred_fallthru
          _
        %p622 = pneg %p53
        %p623 = pneg %p50
        %p624 = pneg %p74
        %p625 = pneg %p71
        %p626 = pneg %p95
        %p627 = pneg %p92
        %p628 = pneg %p116
        %p629 = pneg %p113
        %p630 = pneg %p137
        %p631 = pneg %p134
        %p632 = pneg %p158
        %p633 = pneg %p155
        %p634 = pneg %p179
        %p635 = pneg %p176
        %p636 = pneg %p200
        %p637 = pneg %p197
        %p638 = pneg %p221
        %p639 = pneg %p218
        %p640 = pneg %p242
        %p641 = pneg %p239
        %p642 = pneg %p263
        %p643 = pneg %p260
        %p644 = pneg %p284
        %p645 = pneg %p281
        %s646 = sand.u32 %s37, 1
        %s647 = scalar_lea.sflag [#allocation22], %s646
        %s648 = sand.u32 %s297, 1
        %s649 = smul.addr %s648, 2048
        %s650 = scalar_lea.vmem [#allocation21], %s649
        %p651 = pneg %p310
        %p652 = pneg %p307
        %s653 = sand.u32 %s37, 1
        %s654 = scalar_lea.sflag [#allocation22], %s653
        %s655 = sand.u32 %s323, 1
        %s656 = smul.addr %s655, 32
        %s657 = scalar_lea.vmem [#allocation23], %s656
        %p658 = pneg %p336
        %p659 = pneg %p333
        %p660 = pneg %p362
        %p661 = pneg %p359
        %s662 = sand.u32 %s349, 1
        %s663 = scalar_lea.sflag [#allocation5], %s662
        %s664 = sand.u32 %s349, 1
        %s665 = smul.addr %s664, 64
        %s666 = scalar_lea.vmem [#allocation24], %s665
        %s667 = smul.u32 32, %s37
        %s668 = smul.u32 32, %s37
        %s669 = smul.u32 32, %s37
        %p671 = scmp.eq.s32.totalorder %s37, 0
        // Predicated region
        $region129: #{tpu_custom_call.1} parent=75 // pred_check
          %p672 = pneg %p671
        $region130: #{tpu_custom_call.1} parent=75 // pred_check_branch
          %674 = sbr.rel (%p672) target = $region132
        $region131: #{tpu_custom_call.1} parent=75 // pred_region
          %v675 = vld [vmem:[%s0] sm:$0xff]
          %v676 = vld [vmem:[%s0 + $0x8] sm:$0xff]
          %v677 = vlaneseq
          %v678 = vand.u32 %v677, 127
          %679 = vset.pattern.permute.xlu0 0
          %680 = vperm.xlu0 %679, %v675
          %v681 = vpop.permute.xlu0 %680
          %682 = vset.pattern.permute.xlu0 0
          %683 = vperm.xlu0 %682, %v676
          %v684 = vpop.permute.xlu0 %683
          %vm685 = vcmp.eq.s32.totalorder %v681, %v678
          %vm686 = vcmp.eq.s32.totalorder %v684, %v678
          %v687 = vsel %vm685, 1.0, 0.0
          %v688 = vsel %vm686, 1.0, 0.0
          %v689 = vpack.c.bf16 %v688, %v687
          %v690 = vld [vmem:[#allocation3] sm:$0xf]
          %v691 = vld [vmem:[#allocation3 + $0x4] sm:$0xf]
          %v692 = vld [vmem:[#allocation3 + $0x8] sm:$0xf]
          %v693 = vld [vmem:[#allocation3 + $0xc] sm:$0xf]
          %v694 = vld [vmem:[#allocation3 + $0x10] sm:$0xf]
          %v695 = vld [vmem:[#allocation3 + $0x14] sm:$0xf]
          %v696 = vld [vmem:[#allocation3 + $0x18] sm:$0xf]
          %v697 = vld [vmem:[#allocation3 + $0x1c] sm:$0xf]
          %v698 = vld [vmem:[#allocation3 + $0x20] sm:$0xf]
          %v699 = vld [vmem:[#allocation3 + $0x24] sm:$0xf]
          %v700 = vld [vmem:[#allocation3 + $0x28] sm:$0xf]
          %v701 = vld [vmem:[#allocation3 + $0x2c] sm:$0xf]
          %v702 = vld [vmem:[#allocation3 + $0x30] sm:$0xf]
          %v703 = vld [vmem:[#allocation3 + $0x34] sm:$0xf]
          %v704 = vld [vmem:[#allocation3 + $0x38] sm:$0xf]
          %v705 = vld [vmem:[#allocation3 + $0x3c] sm:$0xf]
          %v722 = vunpack.c.l.b16 %v690
          %v723 = vunpack.c.l.b16 %v691
          %v724 = vunpack.c.l.b16 %v692
          %v725 = vunpack.c.l.b16 %v693
          %v726 = vunpack.c.l.b16 %v694
          %v727 = vunpack.c.l.b16 %v695
          %v728 = vunpack.c.l.b16 %v696
          %v729 = vunpack.c.l.b16 %v697
          %v730 = vunpack.c.l.b16 %v698
          %v731 = vunpack.c.l.b16 %v699
          %v732 = vunpack.c.l.b16 %v700
          %v733 = vunpack.c.l.b16 %v701
          %v734 = vunpack.c.l.b16 %v702
          %v735 = vunpack.c.l.b16 %v703
          %v736 = vunpack.c.l.b16 %v704
          %v737 = vunpack.c.l.b16 %v705
          %v738 = vpack.c.b16 %v723, %v722
          %v739 = vpack.c.b16 %v725, %v724
          %v740 = vpack.c.b16 %v727, %v726
          %v741 = vpack.c.b16 %v729, %v728
          %v742 = vpack.c.b16 %v731, %v730
          %v743 = vpack.c.b16 %v733, %v732
          %v744 = vpack.c.b16 %v735, %v734
          %v745 = vpack.c.b16 %v737, %v736
          %754 = vmatprep.subr.bf16.mxu0 0
          %755 = vmatpush1.bf16.msra.mxu0 %v745
          %756 = vmatprep.subr.bf16.mxu0 0
          %757 = vmatpush1.bf16.msra.mxu0 %v744
          %758 = vmatprep.subr.bf16.mxu0 0
          %759 = vmatpush1.bf16.msra.mxu0 %v743
          %760 = vmatprep.subr.bf16.mxu0 0
          %761 = vmatpush1.bf16.msra.mxu0 %v742
          %762 = vmatprep.subr.bf16.mxu0 0
          %763 = vmatpush1.bf16.msra.mxu0 %v741
          %764 = vmatprep.subr.bf16.mxu0 0
          %765 = vmatpush1.bf16.msra.mxu0 %v740
          %766 = vmatprep.subr.bf16.mxu0 0
          %767 = vmatpush1.bf16.msra.mxu0 %v739
          %768 = vmatprep.subr.bf16.mxu0 0
          %769 = vmatpush1.bf16.msra.mxu0 %v738
          %770 = vmatprep.subr.bf16.mxu0 0
          %771 = vmatpush2.bf16.msra.mxu0 0
          %772 = vmatprep.subr.bf16.mxu0 0
          %773 = vmatpush2.bf16.msra.mxu0 0
          %774 = vmatprep.subr.bf16.mxu0 0
          %775 = vmatpush2.bf16.msra.mxu0 0
          %776 = vmatprep.subr.bf16.mxu0 0
          %777 = vmatpush2.bf16.msra.mxu0 0
          %778 = vmatprep.subr.bf16.mxu0 0
          %779 = vmatpush2.bf16.msra.mxu0 0
          %780 = vmatprep.subr.bf16.mxu0 0
          %781 = vmatpush2.bf16.msra.mxu0 0
          %782 = vmatprep.subr.bf16.mxu0 0
          %783 = vmatpush2.bf16.msra.mxu0 0
          %784 = vmatprep.subr.bf16.mxu0 0
          %785 = vmatpush2.bf16.msra.mxu0 0
          %786 = vmatprep.mubr.bf16.mxu0 0
          %787 = vmatmul.mubr.bf16.gmra.mxu0 %v689
          %v788 = vpop.f32.mrf.mxu0
          %v789 = vadd.f32 0.0, %v788
          %v790 = vpop.f32.mrf.mxu0
          %v791 = vpop.f32.mrf.mxu0
          %v792 = vadd.f32 0.0, %v791
          %v793 = vpop.f32.mrf.mxu0
          %794 = vdwg.mxu0
          %v795 = vpack.c.bf16 %v792, %v789
          %v796 = vld [vmem:[#allocation6] sm:$0xf]
          %v797 = vld [vmem:[#allocation6 + $0x4] sm:$0xf]
          %v798 = vld [vmem:[#allocation6 + $0x8] sm:$0xf]
          %v799 = vld [vmem:[#allocation6 + $0xc] sm:$0xf]
          %v800 = vld [vmem:[#allocation6 + $0x10] sm:$0xf]
          %v801 = vld [vmem:[#allocation6 + $0x14] sm:$0xf]
          %v802 = vld [vmem:[#allocation6 + $0x18] sm:$0xf]
          %v803 = vld [vmem:[#allocation6 + $0x1c] sm:$0xf]
          %v804 = vld [vmem:[#allocation6 + $0x20] sm:$0xf]
          %v805 = vld [vmem:[#allocation6 + $0x24] sm:$0xf]
          %v806 = vld [vmem:[#allocation6 + $0x28] sm:$0xf]
          %v807 = vld [vmem:[#allocation6 + $0x2c] sm:$0xf]
          %v808 = vld [vmem:[#allocation6 + $0x30] sm:$0xf]
          %v809 = vld [vmem:[#allocation6 + $0x34] sm:$0xf]
          %v810 = vld [vmem:[#allocation6 + $0x38] sm:$0xf]
          %v811 = vld [vmem:[#allocation6 + $0x3c] sm:$0xf]
          %v828 = vunpack.c.l.b16 %v796
          %v829 = vunpack.c.l.b16 %v797
          %v830 = vunpack.c.l.b16 %v798
          %v831 = vunpack.c.l.b16 %v799
          %v832 = vunpack.c.l.b16 %v800
          %v833 = vunpack.c.l.b16 %v801
          %v834 = vunpack.c.l.b16 %v802
          %v835 = vunpack.c.l.b16 %v803
          %v836 = vunpack.c.l.b16 %v804
          %v837 = vunpack.c.l.b16 %v805
          %v838 = vunpack.c.l.b16 %v806
          %v839 = vunpack.c.l.b16 %v807
          %v840 = vunpack.c.l.b16 %v808
          %v841 = vunpack.c.l.b16 %v809
          %v842 = vunpack.c.l.b16 %v810
          %v843 = vunpack.c.l.b16 %v811
          %v844 = vpack.c.b16 %v829, %v828
          %v845 = vpack.c.b16 %v831, %v830
          %v846 = vpack.c.b16 %v833, %v832
          %v847 = vpack.c.b16 %v835, %v834
          %v848 = vpack.c.b16 %v837, %v836
          %v849 = vpack.c.b16 %v839, %v838
          %v850 = vpack.c.b16 %v841, %v840
          %v851 = vpack.c.b16 %v843, %v842
          %860 = vmatprep.subr.bf16.mxu0 0
          %861 = vmatpush1.bf16.msra.mxu0 %v851
          %862 = vmatprep.subr.bf16.mxu0 0
          %863 = vmatpush1.bf16.msra.mxu0 %v850
          %864 = vmatprep.subr.bf16.mxu0 0
          %865 = vmatpush1.bf16.msra.mxu0 %v849
          %866 = vmatprep.subr.bf16.mxu0 0
          %867 = vmatpush1.bf16.msra.mxu0 %v848
          %868 = vmatprep.subr.bf16.mxu0 0
          %869 = vmatpush1.bf16.msra.mxu0 %v847
          %870 = vmatprep.subr.bf16.mxu0 0
          %871 = vmatpush1.bf16.msra.mxu0 %v846
          %872 = vmatprep.subr.bf16.mxu0 0
          %873 = vmatpush1.bf16.msra.mxu0 %v845
          %874 = vmatprep.subr.bf16.mxu0 0
          %875 = vmatpush1.bf16.msra.mxu0 %v844
          %876 = vmatprep.subr.bf16.mxu0 0
          %877 = vmatpush2.bf16.msra.mxu0 0
          %878 = vmatprep.subr.bf16.mxu0 0
          %879 = vmatpush2.bf16.msra.mxu0 0
          %880 = vmatprep.subr.bf16.mxu0 0
          %881 = vmatpush2.bf16.msra.mxu0 0
          %882 = vmatprep.subr.bf16.mxu0 0
          %883 = vmatpush2.bf16.msra.mxu0 0
          %884 = vmatprep.subr.bf16.mxu0 0
          %885 = vmatpush2.bf16.msra.mxu0 0
          %886 = vmatprep.subr.bf16.mxu0 0
          %887 = vmatpush2.bf16.msra.mxu0 0
          %888 = vmatprep.subr.bf16.mxu0 0
          %889 = vmatpush2.bf16.msra.mxu0 0
          %890 = vmatprep.subr.bf16.mxu0 0
          %891 = vmatpush2.bf16.msra.mxu0 0
          %892 = vmatprep.mubr.bf16.mxu0 0
          %893 = vmatmul.mubr.bf16.gmra.mxu0 %v795
          %v894 = vpop.f32.mrf.mxu0
          %v895 = vadd.f32 0.0, %v894
          %v896 = vpop.f32.mrf.mxu0
          %v897 = vpop.f32.mrf.mxu0
          %v898 = vadd.f32 0.0, %v897
          %v899 = vpop.f32.mrf.mxu0
          %900 = vdwg.mxu0
          %s901 = scalar_lea.vmem [#allocation6], 64
          %v902 = vld [vmem:[%s901] sm:$0xf]
          %v903 = vld [vmem:[%s901 + $0x4] sm:$0xf]
          %v904 = vld [vmem:[%s901 + $0x8] sm:$0xf]
          %v905 = vld [vmem:[%s901 + $0xc] sm:$0xf]
          %v906 = vld [vmem:[%s901 + $0x10] sm:$0xf]
          %v907 = vld [vmem:[%s901 + $0x14] sm:$0xf]
          %v908 = vld [vmem:[%s901 + $0x18] sm:$0xf]
          %v909 = vld [vmem:[%s901 + $0x1c] sm:$0xf]
          %v910 = vld [vmem:[%s901 + $0x20] sm:$0xf]
          %v911 = vld [vmem:[%s901 + $0x24] sm:$0xf]
          %v912 = vld [vmem:[%s901 + $0x28] sm:$0xf]
          %v913 = vld [vmem:[%s901 + $0x2c] sm:$0xf]
          %v914 = vld [vmem:[%s901 + $0x30] sm:$0xf]
          %v915 = vld [vmem:[%s901 + $0x34] sm:$0xf]
          %v916 = vld [vmem:[%s901 + $0x38] sm:$0xf]
          %v917 = vld [vmem:[%s901 + $0x3c] sm:$0xf]
          %s918 = scalar_lea.vmem [#allocation6], 128
          %v919 = vld [vmem:[%s918] sm:$0xf]
          %v920 = vld [vmem:[%s918 + $0x4] sm:$0xf]
          %v921 = vld [vmem:[%s918 + $0x8] sm:$0xf]
          %v922 = vld [vmem:[%s918 + $0xc] sm:$0xf]
          %v923 = vld [vmem:[%s918 + $0x10] sm:$0xf]
          %v924 = vld [vmem:[%s918 + $0x14] sm:$0xf]
          %v925 = vld [vmem:[%s918 + $0x18] sm:$0xf]
          %v926 = vld [vmem:[%s918 + $0x1c] sm:$0xf]
          %v927 = vld [vmem:[%s918 + $0x20] sm:$0xf]
          %v928 = vld [vmem:[%s918 + $0x24] sm:$0xf]
          %v929 = vld [vmem:[%s918 + $0x28] sm:$0xf]
          %v930 = vld [vmem:[%s918 + $0x2c] sm:$0xf]
          %v931 = vld [vmem:[%s918 + $0x30] sm:$0xf]
          %v932 = vld [vmem:[%s918 + $0x34] sm:$0xf]
          %v933 = vld [vmem:[%s918 + $0x38] sm:$0xf]
          %v934 = vld [vmem:[%s918 + $0x3c] sm:$0xf]
          %v951 = vunpack.c.l.b16 %v919
          %v952 = vunpack.c.l.b16 %v920
          %v953 = vunpack.c.l.b16 %v921
          %v954 = vunpack.c.l.b16 %v922
          %v955 = vunpack.c.l.b16 %v923
          %v956 = vunpack.c.l.b16 %v924
          %v957 = vunpack.c.l.b16 %v925
          %v958 = vunpack.c.l.b16 %v926
          %v959 = vunpack.c.l.b16 %v927
          %v960 = vunpack.c.l.b16 %v928
          %v961 = vunpack.c.l.b16 %v929
          %v962 = vunpack.c.l.b16 %v930
          %v963 = vunpack.c.l.b16 %v931
          %v964 = vunpack.c.l.b16 %v932
          %v965 = vunpack.c.l.b16 %v933
          %v966 = vunpack.c.l.b16 %v934
          %v967 = vpack.c.b16 %v952, %v951
          %v968 = vpack.c.b16 %v954, %v953
          %v969 = vpack.c.b16 %v956, %v955
          %v970 = vpack.c.b16 %v958, %v957
          %v971 = vpack.c.b16 %v960, %v959
          %v972 = vpack.c.b16 %v962, %v961
          %v973 = vpack.c.b16 %v964, %v963
          %v974 = vpack.c.b16 %v966, %v965
          %983 = vmatprep.subr.bf16.mxu0 0
          %984 = vmatpush1.bf16.msra.mxu0 %v974
          %985 = vmatprep.subr.bf16.mxu0 0
          %986 = vmatpush1.bf16.msra.mxu0 %v973
          %987 = vmatprep.subr.bf16.mxu0 0
          %988 = vmatpush1.bf16.msra.mxu0 %v972
          %989 = vmatprep.subr.bf16.mxu0 0
          %990 = vmatpush1.bf16.msra.mxu0 %v971
          %991 = vmatprep.subr.bf16.mxu0 0
          %992 = vmatpush1.bf16.msra.mxu0 %v970
          %993 = vmatprep.subr.bf16.mxu0 0
          %994 = vmatpush1.bf16.msra.mxu0 %v969
          %995 = vmatprep.subr.bf16.mxu0 0
          %996 = vmatpush1.bf16.msra.mxu0 %v968
          %997 = vmatprep.subr.bf16.mxu0 0
          %998 = vmatpush1.bf16.msra.mxu0 %v967
          %999 = vmatprep.subr.bf16.mxu0 0
          %1000 = vmatpush2.bf16.msra.mxu0 0
          %1001 = vmatprep.subr.bf16.mxu0 0
          %1002 = vmatpush2.bf16.msra.mxu0 0
          %1003 = vmatprep.subr.bf16.mxu0 0
          %1004 = vmatpush2.bf16.msra.mxu0 0
          %1005 = vmatprep.subr.bf16.mxu0 0
          %1006 = vmatpush2.bf16.msra.mxu0 0
          %1007 = vmatprep.subr.bf16.mxu0 0
          %1008 = vmatpush2.bf16.msra.mxu0 0
          %1009 = vmatprep.subr.bf16.mxu0 0
          %1010 = vmatpush2.bf16.msra.mxu0 0
          %1011 = vmatprep.subr.bf16.mxu0 0
          %1012 = vmatpush2.bf16.msra.mxu0 0
          %1013 = vmatprep.subr.bf16.mxu0 0
          %1014 = vmatpush2.bf16.msra.mxu0 0
          %1015 = vmatprep.mubr.bf16.mxu0 0
          %1016 = vmatmul.mubr.bf16.gmra.mxu0 %v795
          %v1017 = vpop.f32.mrf.mxu0
          %v1018 = vadd.f32 0.0, %v1017
          %v1019 = vpop.f32.mrf.mxu0
          %v1020 = vpop.f32.mrf.mxu0
          %v1021 = vadd.f32 0.0, %v1020
          %v1022 = vpop.f32.mrf.mxu0
          %1023 = vdwg.mxu0
          %v1024 = vlaneseq
          %v1025 = vshrl.u32 %v1024, 7
          %v1026 = vadd.s32 %v1025, 8
          %vm1027 = vcmp.lt.s32.totalorder %v1025, 0
          %v1028 = vsub.s32 0, %v1025
          %v1029 = vsel %vm1027, %v1028, %v1025
          %v1030 = vshrl.u32 %v1029, 3
          %v1031 = vand.u32 %v1029, 7
          %v1032 = vsub.s32 0, %v1031
          %v1033 = vsel %vm1027, %v1032, %v1031
          %vm1034 = vcmp.lt.s32.totalorder %v1026, 0
          %v1035 = vsub.s32 0, %v1026
          %v1036 = vsel %vm1034, %v1035, %v1026
          %v1037 = vshrl.u32 %v1036, 3
          %v1038 = vand.u32 %v1036, 7
          %v1039 = vsub.s32 0, %v1038
          %v1040 = vsel %vm1034, %v1039, %v1038
          %vm1041 = vcmp.ne.s32.totalorder %v1033, 0
          %vm1042 = vcmp.ne.s32.totalorder %v1040, 0
          %vm1043 = vcmp.lt.s32.totalorder %v1033, 0
          %vm1044 = vcmp.lt.s32.totalorder %v1040, 0
          %vm1045 = vmand %vm1043, %vm1041
          %vm1046 = vmand %vm1044, %vm1042
          %v1047 = vadd.s32 %v1033, 8
          %v1048 = vadd.s32 %v1040, 8
          %v1049 = vsel %vm1045, %v1047, %v1033
          %v1050 = vsel %vm1046, %v1048, %v1040
          %vm1051 = vcmp.ge.s32.totalorder %v1049, 1
          %vm1052 = vcmp.ge.s32.totalorder %v1050, 1
          %v1053 = vrot.slane %v895, 7
          %v1054 = vrot.slane %v898, 7
          %vm1055 = vcmp.lt.s32.totalorder %v1025, 1
          %v1056 = vsel %vm1055, %v1053, %v1054
          %v1057 = vsel %vm1055, %v1054, %v1053
          %v1058 = vsel %vm1051, %v1057, 0.0
          %v1059 = vsel %vm1052, %v1056, 0.0
          %v1076 = vunpack.c.l.b16 %v902
          %v1077 = vunpack.c.l.b16 %v903
          %v1078 = vunpack.c.l.b16 %v904
          %v1079 = vunpack.c.l.b16 %v905
          %v1080 = vunpack.c.l.b16 %v906
          %v1081 = vunpack.c.l.b16 %v907
          %v1082 = vunpack.c.l.b16 %v908
          %v1083 = vunpack.c.l.b16 %v909
          %v1084 = vunpack.c.l.b16 %v910
          %v1085 = vunpack.c.l.b16 %v911
          %v1086 = vunpack.c.l.b16 %v912
          %v1087 = vunpack.c.l.b16 %v913
          %v1088 = vunpack.c.l.b16 %v914
          %v1089 = vunpack.c.l.b16 %v915
          %v1090 = vunpack.c.l.b16 %v916
          %v1091 = vunpack.c.l.b16 %v917
          %v1092 = vpack.c.b16 %v1077, %v1076
          %v1093 = vpack.c.b16 %v1079, %v1078
          %v1094 = vpack.c.b16 %v1081, %v1080
          %v1095 = vpack.c.b16 %v1083, %v1082
          %v1096 = vpack.c.b16 %v1085, %v1084
          %v1097 = vpack.c.b16 %v1087, %v1086
          %v1098 = vpack.c.b16 %v1089, %v1088
          %v1099 = vpack.c.b16 %v1091, %v1090
          %1108 = vmatprep.subr.bf16.mxu0 0
          %1109 = vmatpush1.bf16.msra.mxu0 %v1099
          %1110 = vmatprep.subr.bf16.mxu0 0
          %1111 = vmatpush1.bf16.msra.mxu0 %v1098
          %1112 = vmatprep.subr.bf16.mxu0 0
          %1113 = vmatpush1.bf16.msra.mxu0 %v1097
          %1114 = vmatprep.subr.bf16.mxu0 0
          %1115 = vmatpush1.bf16.msra.mxu0 %v1096
          %1116 = vmatprep.subr.bf16.mxu0 0
          %1117 = vmatpush1.bf16.msra.mxu0 %v1095
          %1118 = vmatprep.subr.bf16.mxu0 0
          %1119 = vmatpush1.bf16.msra.mxu0 %v1094
          %1120 = vmatprep.subr.bf16.mxu0 0
          %1121 = vmatpush1.bf16.msra.mxu0 %v1093
          %1122 = vmatprep.subr.bf16.mxu0 0
          %1123 = vmatpush1.bf16.msra.mxu0 %v1092
          %1124 = vmatprep.subr.bf16.mxu0 0
          %1125 = vmatpush2.bf16.msra.mxu0 0
          %1126 = vmatprep.subr.bf16.mxu0 0
          %1127 = vmatpush2.bf16.msra.mxu0 0
          %1128 = vmatprep.subr.bf16.mxu0 0
          %1129 = vmatpush2.bf16.msra.mxu0 0
          %1130 = vmatprep.subr.bf16.mxu0 0
          %1131 = vmatpush2.bf16.msra.mxu0 0
          %1132 = vmatprep.subr.bf16.mxu0 0
          %1133 = vmatpush2.bf16.msra.mxu0 0
          %1134 = vmatprep.subr.bf16.mxu0 0
          %1135 = vmatpush2.bf16.msra.mxu0 0
          %1136 = vmatprep.subr.bf16.mxu0 0
          %1137 = vmatpush2.bf16.msra.mxu0 0
          %1138 = vmatprep.subr.bf16.mxu0 0
          %1139 = vmatpush2.bf16.msra.mxu0 0
          %1140 = vmatprep.mubr.bf16.mxu0 0
          %1141 = vmatmul.mubr.bf16.gmra.mxu0 %v795
          %v1142 = vpop.f32.mrf.mxu0
          %v1143 = vadd.f32 %v1058, %v1142
          %v1144 = vpop.f32.mrf.mxu0
          %v1145 = vpop.f32.mrf.mxu0
          %v1146 = vadd.f32 %v1059, %v1145
          %v1147 = vpop.f32.mrf.mxu0
          %1148 = vdwg.mxu0
          %vm1149 = vcmp.le.s32.totalorder %v1049, 6
          %vm1150 = vcmp.le.s32.totalorder %v1050, 6
          %v1151 = vrot.slane %v1018, 1
          %v1152 = vrot.slane %v1021, 1
          %vm1153 = vcmp.lt.s32.totalorder %v1025, 7
          %v1154 = vsel %vm1153, %v1151, %v1152
          %v1155 = vsel %vm1153, %v1152, %v1151
          %v1156 = vsel %vm1149, %v1154, 0.0
          %v1157 = vsel %vm1150, %v1155, 0.0
          %v1158 = vadd.f32 %v1143, %v1156
          %v1159 = vadd.f32 %v1146, %v1157
          %v1160 = vld [vmem:[#allocation8] sm:$0x1]
          %v1162 = vlaneseq
          %v1163 = vshrl.u32 %v1162, 7
          %v1164 = vsub.s32 0, %v1163
          %v1165 = vrot.slane %v1160, %v1164
          %v1167 = vadd.f32 %v1158, %v1165
          %v1168 = vadd.f32 %v1159, %v1165
          %v1169 = vmax.f32 %v1167, 0.0
          %v1170 = vmax.f32 %v1168, 0.0
          %v1171 = vld [vmem:[#allocation9] sm:$0x1]
          %v1173 = vlaneseq
          %v1174 = vshrl.u32 %v1173, 7
          %v1175 = vsub.s32 0, %v1174
          %v1176 = vrot.slane %v1171, %v1175
          %v1178 = vmul.f32 %v1169, %v1176
          %v1179 = vmul.f32 %v1170, %v1176
          %v1180 = vld [vmem:[#allocation11] sm:$0x1]
          %v1182 = vlaneseq
          %v1183 = vshrl.u32 %v1182, 7
          %v1184 = vsub.s32 0, %v1183
          %v1185 = vrot.slane %v1180, %v1184
          %v1187 = vadd.f32 %v1178, %v1185
          %v1188 = vadd.f32 %v1179, %v1185
          %v1189 = vpack.c.bf16 %v1188, %v1187
          %v1190 = vld [vmem:[#allocation12] sm:$0xf]
          %v1191 = vld [vmem:[#allocation12 + $0x4] sm:$0xf]
          %v1192 = vld [vmem:[#allocation12 + $0x8] sm:$0xf]
          %v1193 = vld [vmem:[#allocation12 + $0xc] sm:$0xf]
          %v1194 = vld [vmem:[#allocation12 + $0x10] sm:$0xf]
          %v1195 = vld [vmem:[#allocation12 + $0x14] sm:$0xf]
          %v1196 = vld [vmem:[#allocation12 + $0x18] sm:$0xf]
          %v1197 = vld [vmem:[#allocation12 + $0x1c] sm:$0xf]
          %v1198 = vld [vmem:[#allocation12 + $0x20] sm:$0xf]
          %v1199 = vld [vmem:[#allocation12 + $0x24] sm:$0xf]
          %v1200 = vld [vmem:[#allocation12 + $0x28] sm:$0xf]
          %v1201 = vld [vmem:[#allocation12 + $0x2c] sm:$0xf]
          %v1202 = vld [vmem:[#allocation12 + $0x30] sm:$0xf]
          %v1203 = vld [vmem:[#allocation12 + $0x34] sm:$0xf]
          %v1204 = vld [vmem:[#allocation12 + $0x38] sm:$0xf]
          %v1205 = vld [vmem:[#allocation12 + $0x3c] sm:$0xf]
          %v1222 = vunpack.c.l.b16 %v1190
          %v1223 = vunpack.c.l.b16 %v1191
          %v1224 = vunpack.c.l.b16 %v1192
          %v1225 = vunpack.c.l.b16 %v1193
          %v1226 = vunpack.c.l.b16 %v1194
          %v1227 = vunpack.c.l.b16 %v1195
          %v1228 = vunpack.c.l.b16 %v1196
          %v1229 = vunpack.c.l.b16 %v1197
          %v1230 = vunpack.c.l.b16 %v1198
          %v1231 = vunpack.c.l.b16 %v1199
          %v1232 = vunpack.c.l.b16 %v1200
          %v1233 = vunpack.c.l.b16 %v1201
          %v1234 = vunpack.c.l.b16 %v1202
          %v1235 = vunpack.c.l.b16 %v1203
          %v1236 = vunpack.c.l.b16 %v1204
          %v1237 = vunpack.c.l.b16 %v1205
          %v1238 = vpack.c.b16 %v1223, %v1222
          %v1239 = vpack.c.b16 %v1225, %v1224
          %v1240 = vpack.c.b16 %v1227, %v1226
          %v1241 = vpack.c.b16 %v1229, %v1228
          %v1242 = vpack.c.b16 %v1231, %v1230
          %v1243 = vpack.c.b16 %v1233, %v1232
          %v1244 = vpack.c.b16 %v1235, %v1234
          %v1245 = vpack.c.b16 %v1237, %v1236
          %1254 = vmatprep.subr.bf16.mxu0 0
          %1255 = vmatpush1.bf16.msra.mxu0 %v1245
          %1256 = vmatprep.subr.bf16.mxu0 0
          %1257 = vmatpush1.bf16.msra.mxu0 %v1244
          %1258 = vmatprep.subr.bf16.mxu0 0
          %1259 = vmatpush1.bf16.msra.mxu0 %v1243
          %1260 = vmatprep.subr.bf16.mxu0 0
          %1261 = vmatpush1.bf16.msra.mxu0 %v1242
          %1262 = vmatprep.subr.bf16.mxu0 0
          %1263 = vmatpush1.bf16.msra.mxu0 %v1241
          %1264 = vmatprep.subr.bf16.mxu0 0
          %1265 = vmatpush1.bf16.msra.mxu0 %v1240
          %1266 = vmatprep.subr.bf16.mxu0 0
          %1267 = vmatpush1.bf16.msra.mxu0 %v1239
          %1268 = vmatprep.subr.bf16.mxu0 0
          %1269 = vmatpush1.bf16.msra.mxu0 %v1238
          %1270 = vmatprep.subr.bf16.mxu0 0
          %1271 = vmatpush2.bf16.msra.mxu0 0
          %1272 = vmatprep.subr.bf16.mxu0 0
          %1273 = vmatpush2.bf16.msra.mxu0 0
          %1274 = vmatprep.subr.bf16.mxu0 0
          %1275 = vmatpush2.bf16.msra.mxu0 0
          %1276 = vmatprep.subr.bf16.mxu0 0
          %1277 = vmatpush2.bf16.msra.mxu0 0
          %1278 = vmatprep.subr.bf16.mxu0 0
          %1279 = vmatpush2.bf16.msra.mxu0 0
          %1280 = vmatprep.subr.bf16.mxu0 0
          %1281 = vmatpush2.bf16.msra.mxu0 0
          %1282 = vmatprep.subr.bf16.mxu0 0
          %1283 = vmatpush2.bf16.msra.mxu0 0
          %1284 = vmatprep.subr.bf16.mxu0 0
          %1285 = vmatpush2.bf16.msra.mxu0 0
          %1286 = vmatprep.mubr.bf16.mxu0 0
          %1287 = vmatmul.mubr.bf16.gmra.mxu0 %v1189
          %v1288 = vpop.f32.mrf.mxu0
          %v1289 = vadd.f32 0.0, %v1288
          %v1290 = vpop.f32.mrf.mxu0
          %v1291 = vpop.f32.mrf.mxu0
          %v1292 = vadd.f32 0.0, %v1291
          %v1293 = vpop.f32.mrf.mxu0
          %1294 = vdwg.mxu0
          %s1295 = scalar_lea.vmem [#allocation12], 64
          %v1296 = vld [vmem:[%s1295] sm:$0xf]
          %v1297 = vld [vmem:[%s1295 + $0x4] sm:$0xf]
          %v1298 = vld [vmem:[%s1295 + $0x8] sm:$0xf]
          %v1299 = vld [vmem:[%s1295 + $0xc] sm:$0xf]
          %v1300 = vld [vmem:[%s1295 + $0x10] sm:$0xf]
          %v1301 = vld [vmem:[%s1295 + $0x14] sm:$0xf]
          %v1302 = vld [vmem:[%s1295 + $0x18] sm:$0xf]
          %v1303 = vld [vmem:[%s1295 + $0x1c] sm:$0xf]
          %v1304 = vld [vmem:[%s1295 + $0x20] sm:$0xf]
          %v1305 = vld [vmem:[%s1295 + $0x24] sm:$0xf]
          %v1306 = vld [vmem:[%s1295 + $0x28] sm:$0xf]
          %v1307 = vld [vmem:[%s1295 + $0x2c] sm:$0xf]
          %v1308 = vld [vmem:[%s1295 + $0x30] sm:$0xf]
          %v1309 = vld [vmem:[%s1295 + $0x34] sm:$0xf]
          %v1310 = vld [vmem:[%s1295 + $0x38] sm:$0xf]
          %v1311 = vld [vmem:[%s1295 + $0x3c] sm:$0xf]
          %s1312 = scalar_lea.vmem [#allocation12], 128
          %v1313 = vld [vmem:[%s1312] sm:$0xf]
          %v1314 = vld [vmem:[%s1312 + $0x4] sm:$0xf]
          %v1315 = vld [vmem:[%s1312 + $0x8] sm:$0xf]
          %v1316 = vld [vmem:[%s1312 + $0xc] sm:$0xf]
          %v1317 = vld [vmem:[%s1312 + $0x10] sm:$0xf]
          %v1318 = vld [vmem:[%s1312 + $0x14] sm:$0xf]
          %v1319 = vld [vmem:[%s1312 + $0x18] sm:$0xf]
          %v1320 = vld [vmem:[%s1312 + $0x1c] sm:$0xf]
          %v1321 = vld [vmem:[%s1312 + $0x20] sm:$0xf]
          %v1322 = vld [vmem:[%s1312 + $0x24] sm:$0xf]
          %v1323 = vld [vmem:[%s1312 + $0x28] sm:$0xf]
          %v1324 = vld [vmem:[%s1312 + $0x2c] sm:$0xf]
          %v1325 = vld [vmem:[%s1312 + $0x30] sm:$0xf]
          %v1326 = vld [vmem:[%s1312 + $0x34] sm:$0xf]
          %v1327 = vld [vmem:[%s1312 + $0x38] sm:$0xf]
          %v1328 = vld [vmem:[%s1312 + $0x3c] sm:$0xf]
          %v1345 = vunpack.c.l.b16 %v1313
          %v1346 = vunpack.c.l.b16 %v1314
          %v1347 = vunpack.c.l.b16 %v1315
          %v1348 = vunpack.c.l.b16 %v1316
          %v1349 = vunpack.c.l.b16 %v1317
          %v1350 = vunpack.c.l.b16 %v1318
          %v1351 = vunpack.c.l.b16 %v1319
          %v1352 = vunpack.c.l.b16 %v1320
          %v1353 = vunpack.c.l.b16 %v1321
          %v1354 = vunpack.c.l.b16 %v1322
          %v1355 = vunpack.c.l.b16 %v1323
          %v1356 = vunpack.c.l.b16 %v1324
          %v1357 = vunpack.c.l.b16 %v1325
          %v1358 = vunpack.c.l.b16 %v1326
          %v1359 = vunpack.c.l.b16 %v1327
          %v1360 = vunpack.c.l.b16 %v1328
          %v1361 = vpack.c.b16 %v1346, %v1345
          %v1362 = vpack.c.b16 %v1348, %v1347
          %v1363 = vpack.c.b16 %v1350, %v1349
          %v1364 = vpack.c.b16 %v1352, %v1351
          %v1365 = vpack.c.b16 %v1354, %v1353
          %v1366 = vpack.c.b16 %v1356, %v1355
          %v1367 = vpack.c.b16 %v1358, %v1357
          %v1368 = vpack.c.b16 %v1360, %v1359
          %1377 = vmatprep.subr.bf16.mxu0 0
          %1378 = vmatpush1.bf16.msra.mxu0 %v1368
          %1379 = vmatprep.subr.bf16.mxu0 0
          %1380 = vmatpush1.bf16.msra.mxu0 %v1367
          %1381 = vmatprep.subr.bf16.mxu0 0
          %1382 = vmatpush1.bf16.msra.mxu0 %v1366
          %1383 = vmatprep.subr.bf16.mxu0 0
          %1384 = vmatpush1.bf16.msra.mxu0 %v1365
          %1385 = vmatprep.subr.bf16.mxu0 0
          %1386 = vmatpush1.bf16.msra.mxu0 %v1364
          %1387 = vmatprep.subr.bf16.mxu0 0
          %1388 = vmatpush1.bf16.msra.mxu0 %v1363
          %1389 = vmatprep.subr.bf16.mxu0 0
          %1390 = vmatpush1.bf16.msra.mxu0 %v1362
          %1391 = vmatprep.subr.bf16.mxu0 0
          %1392 = vmatpush1.bf16.msra.mxu0 %v1361
          %1393 = vmatprep.subr.bf16.mxu0 0
          %1394 = vmatpush2.bf16.msra.mxu0 0
          %1395 = vmatprep.subr.bf16.mxu0 0
          %1396 = vmatpush2.bf16.msra.mxu0 0
          %1397 = vmatprep.subr.bf16.mxu0 0
          %1398 = vmatpush2.bf16.msra.mxu0 0
          %1399 = vmatprep.subr.bf16.mxu0 0
          %1400 = vmatpush2.bf16.msra.mxu0 0
          %1401 = vmatprep.subr.bf16.mxu0 0
          %1402 = vmatpush2.bf16.msra.mxu0 0
          %1403 = vmatprep.subr.bf16.mxu0 0
          %1404 = vmatpush2.bf16.msra.mxu0 0
          %1405 = vmatprep.subr.bf16.mxu0 0
          %1406 = vmatpush2.bf16.msra.mxu0 0
          %1407 = vmatprep.subr.bf16.mxu0 0
          %1408 = vmatpush2.bf16.msra.mxu0 0
          %1409 = vmatprep.mubr.bf16.mxu0 0
          %1410 = vmatmul.mubr.bf16.gmra.mxu0 %v1189
          %v1411 = vpop.f32.mrf.mxu0
          %v1412 = vadd.f32 0.0, %v1411
          %v1413 = vpop.f32.mrf.mxu0
          %v1414 = vpop.f32.mrf.mxu0
          %v1415 = vadd.f32 0.0, %v1414
          %v1416 = vpop.f32.mrf.mxu0
          %1417 = vdwg.mxu0
          %v1418 = vrot.slane %v1289, 7
          %v1419 = vrot.slane %v1292, 7
          %v1420 = vsel %vm1055, %v1418, %v1419
          %v1421 = vsel %vm1055, %v1419, %v1418
          %v1422 = vsel %vm1051, %v1421, 0.0
          %v1423 = vsel %vm1052, %v1420, 0.0
          %v1440 = vunpack.c.l.b16 %v1296
          %v1441 = vunpack.c.l.b16 %v1297
          %v1442 = vunpack.c.l.b16 %v1298
          %v1443 = vunpack.c.l.b16 %v1299
          %v1444 = vunpack.c.l.b16 %v1300
          %v1445 = vunpack.c.l.b16 %v1301
          %v1446 = vunpack.c.l.b16 %v1302
          %v1447 = vunpack.c.l.b16 %v1303
          %v1448 = vunpack.c.l.b16 %v1304
          %v1449 = vunpack.c.l.b16 %v1305
          %v1450 = vunpack.c.l.b16 %v1306
          %v1451 = vunpack.c.l.b16 %v1307
          %v1452 = vunpack.c.l.b16 %v1308
          %v1453 = vunpack.c.l.b16 %v1309
          %v1454 = vunpack.c.l.b16 %v1310
          %v1455 = vunpack.c.l.b16 %v1311
          %v1456 = vpack.c.b16 %v1441, %v1440
          %v1457 = vpack.c.b16 %v1443, %v1442
          %v1458 = vpack.c.b16 %v1445, %v1444
          %v1459 = vpack.c.b16 %v1447, %v1446
          %v1460 = vpack.c.b16 %v1449, %v1448
          %v1461 = vpack.c.b16 %v1451, %v1450
          %v1462 = vpack.c.b16 %v1453, %v1452
          %v1463 = vpack.c.b16 %v1455, %v1454
          %1472 = vmatprep.subr.bf16.mxu0 0
          %1473 = vmatpush1.bf16.msra.mxu0 %v1463
          %1474 = vmatprep.subr.bf16.mxu0 0
          %1475 = vmatpush1.bf16.msra.mxu0 %v1462
          %1476 = vmatprep.subr.bf16.mxu0 0
          %1477 = vmatpush1.bf16.msra.mxu0 %v1461
          %1478 = vmatprep.subr.bf16.mxu0 0
          %1479 = vmatpush1.bf16.msra.mxu0 %v1460
          %1480 = vmatprep.subr.bf16.mxu0 0
          %1481 = vmatpush1.bf16.msra.mxu0 %v1459
          %1482 = vmatprep.subr.bf16.mxu0 0
          %1483 = vmatpush1.bf16.msra.mxu0 %v1458
          %1484 = vmatprep.subr.bf16.mxu0 0
          %1485 = vmatpush1.bf16.msra.mxu0 %v1457
          %1486 = vmatprep.subr.bf16.mxu0 0
          %1487 = vmatpush1.bf16.msra.mxu0 %v1456
          %1488 = vmatprep.subr.bf16.mxu0 0
          %1489 = vmatpush2.bf16.msra.mxu0 0
          %1490 = vmatprep.subr.bf16.mxu0 0
          %1491 = vmatpush2.bf16.msra.mxu0 0
          %1492 = vmatprep.subr.bf16.mxu0 0
          %1493 = vmatpush2.bf16.msra.mxu0 0
          %1494 = vmatprep.subr.bf16.mxu0 0
          %1495 = vmatpush2.bf16.msra.mxu0 0
          %1496 = vmatprep.subr.bf16.mxu0 0
          %1497 = vmatpush2.bf16.msra.mxu0 0
          %1498 = vmatprep.subr.bf16.mxu0 0
          %1499 = vmatpush2.bf16.msra.mxu0 0
          %1500 = vmatprep.subr.bf16.mxu0 0
          %1501 = vmatpush2.bf16.msra.mxu0 0
          %1502 = vmatprep.subr.bf16.mxu0 0
          %1503 = vmatpush2.bf16.msra.mxu0 0
          %1504 = vmatprep.mubr.bf16.mxu0 0
          %1505 = vmatmul.mubr.bf16.gmra.mxu0 %v1189
          %v1506 = vpop.f32.mrf.mxu0
          %v1507 = vadd.f32 %v1422, %v1506
          %v1508 = vpop.f32.mrf.mxu0
          %v1509 = vpop.f32.mrf.mxu0
          %v1510 = vadd.f32 %v1423, %v1509
          %v1511 = vpop.f32.mrf.mxu0
          %1512 = vdwg.mxu0
          %v1513 = vrot.slane %v1412, 1
          %v1514 = vrot.slane %v1415, 1
          %v1515 = vsel %vm1153, %v1513, %v1514
          %v1516 = vsel %vm1153, %v1514, %v1513
          %v1517 = vsel %vm1149, %v1515, 0.0
          %v1518 = vsel %vm1150, %v1516, 0.0
          %v1519 = vadd.f32 %v1507, %v1517
          %v1520 = vadd.f32 %v1510, %v1518
          %v1521 = vld [vmem:[#allocation14] sm:$0x1]
          %v1523 = vlaneseq
          %v1524 = vshrl.u32 %v1523, 7
          %v1525 = vsub.s32 0, %v1524
          %v1526 = vrot.slane %v1521, %v1525
          %v1528 = vadd.f32 %v1519, %v1526
          %v1529 = vadd.f32 %v1520, %v1526
          %v1530 = vmax.f32 %v1528, 0.0
          %v1531 = vmax.f32 %v1529, 0.0
          %v1532 = vld [vmem:[#allocation15] sm:$0x1]
          %v1534 = vlaneseq
          %v1535 = vshrl.u32 %v1534, 7
          %v1536 = vsub.s32 0, %v1535
          %v1537 = vrot.slane %v1532, %v1536
          %v1539 = vmul.f32 %v1530, %v1537
          %v1540 = vmul.f32 %v1531, %v1537
          %v1541 = vld [vmem:[#allocation17] sm:$0x1]
          %v1543 = vlaneseq
          %v1544 = vshrl.u32 %v1543, 7
          %v1545 = vsub.s32 0, %v1544
          %v1546 = vrot.slane %v1541, %v1545
          %v1548 = vadd.f32 %v1539, %v1546
          %v1549 = vadd.f32 %v1540, %v1546
          %v1550 = vpack.c.bf16 %v1549, %v1548
          %v1552 = vunpack.i.l.s16 %v1550
          %v1553 = vunpack.i.h.s16 %v1550
          %v1554 = vpack.c.b16 %v1553, %v1552
          %v1555 = vunpack.i.l.s16 %v1554
          %v1556 = vunpack.i.h.s16 %v1554
          %v1557 = vpack.c.b16 %v1556, %v1555
          %v1558 = vunpack.i.l.s16 %v1557
          %v1559 = vunpack.i.h.s16 %v1557
          %v1560 = vpack.c.b16 %v1559, %v1558
          %v1561 = vld [vmem:[#allocation18] sm:$0xf]
          %v1562 = vld [vmem:[#allocation18 + $0x4] sm:$0xf]
          %v1563 = vld [vmem:[#allocation18 + $0x8] sm:$0xf]
          %v1564 = vld [vmem:[#allocation18 + $0xc] sm:$0xf]
          %v1565 = vld [vmem:[#allocation18 + $0x10] sm:$0xf]
          %v1566 = vld [vmem:[#allocation18 + $0x14] sm:$0xf]
          %v1567 = vld [vmem:[#allocation18 + $0x18] sm:$0xf]
          %v1568 = vld [vmem:[#allocation18 + $0x1c] sm:$0xf]
          %v1569 = vld [vmem:[#allocation18 + $0x20] sm:$0xf]
          %v1570 = vld [vmem:[#allocation18 + $0x24] sm:$0xf]
          %v1571 = vld [vmem:[#allocation18 + $0x28] sm:$0xf]
          %v1572 = vld [vmem:[#allocation18 + $0x2c] sm:$0xf]
          %v1573 = vld [vmem:[#allocation18 + $0x30] sm:$0xf]
          %v1574 = vld [vmem:[#allocation18 + $0x34] sm:$0xf]
          %v1575 = vld [vmem:[#allocation18 + $0x38] sm:$0xf]
          %v1576 = vld [vmem:[#allocation18 + $0x3c] sm:$0xf]
          %v1577 = vld [vmem:[#allocation18 + $0x40] sm:$0xf]
          %v1578 = vld [vmem:[#allocation18 + $0x44] sm:$0xf]
          %v1579 = vld [vmem:[#allocation18 + $0x48] sm:$0xf]
          %v1580 = vld [vmem:[#allocation18 + $0x4c] sm:$0xf]
          %v1581 = vld [vmem:[#allocation18 + $0x50] sm:$0xf]
          %v1582 = vld [vmem:[#allocation18 + $0x54] sm:$0xf]
          %v1583 = vld [vmem:[#allocation18 + $0x58] sm:$0xf]
          %v1584 = vld [vmem:[#allocation18 + $0x5c] sm:$0xf]
          %v1585 = vld [vmem:[#allocation18 + $0x60] sm:$0xf]
          %v1586 = vld [vmem:[#allocation18 + $0x64] sm:$0xf]
          %v1587 = vld [vmem:[#allocation18 + $0x68] sm:$0xf]
          %v1588 = vld [vmem:[#allocation18 + $0x6c] sm:$0xf]
          %v1589 = vld [vmem:[#allocation18 + $0x70] sm:$0xf]
          %v1590 = vld [vmem:[#allocation18 + $0x74] sm:$0xf]
          %v1591 = vld [vmem:[#allocation18 + $0x78] sm:$0xf]
          %v1592 = vld [vmem:[#allocation18 + $0x7c] sm:$0xf]
          %v1593 = vld [vmem:[#allocation18 + $0x80] sm:$0xf]
          %v1594 = vld [vmem:[#allocation18 + $0x84] sm:$0xf]
          %v1595 = vld [vmem:[#allocation18 + $0x88] sm:$0xf]
          %v1596 = vld [vmem:[#allocation18 + $0x8c] sm:$0xf]
          %v1597 = vld [vmem:[#allocation18 + $0x90] sm:$0xf]
          %v1598 = vld [vmem:[#allocation18 + $0x94] sm:$0xf]
          %v1599 = vld [vmem:[#allocation18 + $0x98] sm:$0xf]
          %v1600 = vld [vmem:[#allocation18 + $0x9c] sm:$0xf]
          %v1601 = vld [vmem:[#allocation18 + $0xa0] sm:$0xf]
          %v1602 = vld [vmem:[#allocation18 + $0xa4] sm:$0xf]
          %v1603 = vld [vmem:[#allocation18 + $0xa8] sm:$0xf]
          %v1604 = vld [vmem:[#allocation18 + $0xac] sm:$0xf]
          %v1605 = vld [vmem:[#allocation18 + $0xb0] sm:$0xf]
          %v1606 = vld [vmem:[#allocation18 + $0xb4] sm:$0xf]
          %v1607 = vld [vmem:[#allocation18 + $0xb8] sm:$0xf]
          %v1608 = vld [vmem:[#allocation18 + $0xbc] sm:$0xf]
          %v1609 = vld [vmem:[#allocation18 + $0xc0] sm:$0xf]
          %v1610 = vld [vmem:[#allocation18 + $0xc4] sm:$0xf]
          %v1611 = vld [vmem:[#allocation18 + $0xc8] sm:$0xf]
          %v1612 = vld [vmem:[#allocation18 + $0xcc] sm:$0xf]
          %v1613 = vld [vmem:[#allocation18 + $0xd0] sm:$0xf]
          %v1614 = vld [vmem:[#allocation18 + $0xd4] sm:$0xf]
          %v1615 = vld [vmem:[#allocation18 + $0xd8] sm:$0xf]
          %v1616 = vld [vmem:[#allocation18 + $0xdc] sm:$0xf]
          %v1617 = vld [vmem:[#allocation18 + $0xe0] sm:$0xf]
          %v1618 = vld [vmem:[#allocation18 + $0xe4] sm:$0xf]
          %v1619 = vld [vmem:[#allocation18 + $0xe8] sm:$0xf]
          %v1620 = vld [vmem:[#allocation18 + $0xec] sm:$0xf]
          %v1621 = vld [vmem:[#allocation18 + $0xf0] sm:$0xf]
          %v1622 = vld [vmem:[#allocation18 + $0xf4] sm:$0xf]
          %v1623 = vld [vmem:[#allocation18 + $0xf8] sm:$0xf]
          %v1624 = vld [vmem:[#allocation18 + $0xfc] sm:$0xf]
          %v1625 = vld [vmem:[#allocation18 + $0x100] sm:$0xf]
          %v1626 = vld [vmem:[#allocation18 + $0x104] sm:$0xf]
          %v1627 = vld [vmem:[#allocation18 + $0x108] sm:$0xf]
          %v1628 = vld [vmem:[#allocation18 + $0x10c] sm:$0xf]
          %v1629 = vld [vmem:[#allocation18 + $0x110] sm:$0xf]
          %v1630 = vld [vmem:[#allocation18 + $0x114] sm:$0xf]
          %v1631 = vld [vmem:[#allocation18 + $0x118] sm:$0xf]
          %v1632 = vld [vmem:[#allocation18 + $0x11c] sm:$0xf]
          %v1633 = vld [vmem:[#allocation18 + $0x120] sm:$0xf]
          %v1634 = vld [vmem:[#allocation18 + $0x124] sm:$0xf]
          %v1635 = vld [vmem:[#allocation18 + $0x128] sm:$0xf]
          %v1636 = vld [vmem:[#allocation18 + $0x12c] sm:$0xf]
          %v1637 = vld [vmem:[#allocation18 + $0x130] sm:$0xf]
          %v1638 = vld [vmem:[#allocation18 + $0x134] sm:$0xf]
          %v1639 = vld [vmem:[#allocation18 + $0x138] sm:$0xf]
          %v1640 = vld [vmem:[#allocation18 + $0x13c] sm:$0xf]
          %v1641 = vld [vmem:[#allocation18 + $0x140] sm:$0xf]
          %v1642 = vld [vmem:[#allocation18 + $0x144] sm:$0xf]
          %v1643 = vld [vmem:[#allocation18 + $0x148] sm:$0xf]
          %v1644 = vld [vmem:[#allocation18 + $0x14c] sm:$0xf]
          %v1645 = vld [vmem:[#allocation18 + $0x150] sm:$0xf]
          %v1646 = vld [vmem:[#allocation18 + $0x154] sm:$0xf]
          %v1647 = vld [vmem:[#allocation18 + $0x158] sm:$0xf]
          %v1648 = vld [vmem:[#allocation18 + $0x15c] sm:$0xf]
          %v1649 = vld [vmem:[#allocation18 + $0x160] sm:$0xf]
          %v1650 = vld [vmem:[#allocation18 + $0x164] sm:$0xf]
          %v1651 = vld [vmem:[#allocation18 + $0x168] sm:$0xf]
          %v1652 = vld [vmem:[#allocation18 + $0x16c] sm:$0xf]
          %v1653 = vld [vmem:[#allocation18 + $0x170] sm:$0xf]
          %v1654 = vld [vmem:[#allocation18 + $0x174] sm:$0xf]
          %v1655 = vld [vmem:[#allocation18 + $0x178] sm:$0xf]
          %v1656 = vld [vmem:[#allocation18 + $0x17c] sm:$0xf]
          %v1657 = vld [vmem:[#allocation18 + $0x180] sm:$0xf]
          %v1658 = vld [vmem:[#allocation18 + $0x184] sm:$0xf]
          %v1659 = vld [vmem:[#allocation18 + $0x188] sm:$0xf]
          %v1660 = vld [vmem:[#allocation18 + $0x18c] sm:$0xf]
          %v1661 = vld [vmem:[#allocation18 + $0x190] sm:$0xf]
          %v1662 = vld [vmem:[#allocation18 + $0x194] sm:$0xf]
          %v1663 = vld [vmem:[#allocation18 + $0x198] sm:$0xf]
          %v1664 = vld [vmem:[#allocation18 + $0x19c] sm:$0xf]
          %v1665 = vld [vmem:[#allocation18 + $0x1a0] sm:$0xf]
          %v1666 = vld [vmem:[#allocation18 + $0x1a4] sm:$0xf]
          %v1667 = vld [vmem:[#allocation18 + $0x1a8] sm:$0xf]
          %v1668 = vld [vmem:[#allocation18 + $0x1ac] sm:$0xf]
          %v1669 = vld [vmem:[#allocation18 + $0x1b0] sm:$0xf]
          %v1670 = vld [vmem:[#allocation18 + $0x1b4] sm:$0xf]
          %v1671 = vld [vmem:[#allocation18 + $0x1b8] sm:$0xf]
          %v1672 = vld [vmem:[#allocation18 + $0x1bc] sm:$0xf]
          %v1673 = vld [vmem:[#allocation18 + $0x1c0] sm:$0xf]
          %v1674 = vld [vmem:[#allocation18 + $0x1c4] sm:$0xf]
          %v1675 = vld [vmem:[#allocation18 + $0x1c8] sm:$0xf]
          %v1676 = vld [vmem:[#allocation18 + $0x1cc] sm:$0xf]
          %v1677 = vld [vmem:[#allocation18 + $0x1d0] sm:$0xf]
          %v1678 = vld [vmem:[#allocation18 + $0x1d4] sm:$0xf]
          %v1679 = vld [vmem:[#allocation18 + $0x1d8] sm:$0xf]
          %v1680 = vld [vmem:[#allocation18 + $0x1dc] sm:$0xf]
          %v1681 = vld [vmem:[#allocation18 + $0x1e0] sm:$0xf]
          %v1682 = vld [vmem:[#allocation18 + $0x1e4] sm:$0xf]
          %v1683 = vld [vmem:[#allocation18 + $0x1e8] sm:$0xf]
          %v1684 = vld [vmem:[#allocation18 + $0x1ec] sm:$0xf]
          %v1685 = vld [vmem:[#allocation18 + $0x1f0] sm:$0xf]
          %v1686 = vld [vmem:[#allocation18 + $0x1f4] sm:$0xf]
          %v1687 = vld [vmem:[#allocation18 + $0x1f8] sm:$0xf]
          %v1688 = vld [vmem:[#allocation18 + $0x1fc] sm:$0xf]
          %v1689 = vld [vmem:[#allocation20] sm:$0x1]
          %v1691 = vlaneseq
          %v1692 = vshrl.u32 %v1691, 7
          %v1693 = vsub.s32 0, %v1692
          %v1694 = vrot.slane %v1689, %v1693
          %v1696 = vcombine.high %v1560, %v1560
          %v1698 = vunpack.c.l.s4 1966171168
          %v1699 = vunpack.c.0.s8 %v1698
          %v1700 = vlaneseq
          %v1701 = vshrl.u32 %v1700, 7
          %v1702 = vsub.s32 %v1699, %v1701
          %v1703 = vrot.slane %v1560, %v1702
          %v1705 = vunpack.c.l.s4 1966171168
          %v1706 = vunpack.c.0.s8 %v1705
          %v1707 = vlaneseq
          %v1708 = vshrl.u32 %v1707, 7
          %v1709 = vsub.s32 %v1706, %v1708
          %v1710 = vrot.slane %v1696, %v1709
          %v1711 = vcombine.high %v1703, %v1703
          %v1712 = vcombine.high %v1710, %v1710
          %v1714 = vunpack.c.l.s4 1966171168
          %v1715 = vunpack.c.0.s8 %v1714
          %v1716 = vlaneseq
          %v1717 = vshrl.u32 %v1716, 7
          %v1718 = vsub.s32 %v1715, %v1717
          %v1719 = vrot.slane %v1703, %v1718
          %v1721 = vunpack.c.l.s4 1966171168
          %v1722 = vunpack.c.0.s8 %v1721
          %v1723 = vlaneseq
          %v1724 = vshrl.u32 %v1723, 7
          %v1725 = vsub.s32 %v1722, %v1724
          %v1726 = vrot.slane %v1710, %v1725
          %v1728 = vunpack.c.l.s4 1966171168
          %v1729 = vunpack.c.0.s8 %v1728
          %v1730 = vlaneseq
          %v1731 = vshrl.u32 %v1730, 7
          %v1732 = vsub.s32 %v1729, %v1731
          %v1733 = vrot.slane %v1711, %v1732
          %v1735 = vunpack.c.l.s4 1966171168
          %v1736 = vunpack.c.0.s8 %v1735
          %v1737 = vlaneseq
          %v1738 = vshrl.u32 %v1737, 7
          %v1739 = vsub.s32 %v1736, %v1738
          %v1740 = vrot.slane %v1712, %v1739
          %v1741 = vcombine.high %v1719, %v1719
          %v1742 = vcombine.high %v1726, %v1726
          %v1743 = vcombine.high %v1733, %v1733
          %v1744 = vcombine.high %v1740, %v1740
          %v1881 = vunpack.c.l.b16 %v1561
          %v1882 = vunpack.c.l.b16 %v1562
          %v1883 = vunpack.c.l.b16 %v1563
          %v1884 = vunpack.c.l.b16 %v1564
          %v1885 = vunpack.c.l.b16 %v1565
          %v1886 = vunpack.c.l.b16 %v1566
          %v1887 = vunpack.c.l.b16 %v1567
          %v1888 = vunpack.c.l.b16 %v1568
          %v1889 = vunpack.c.l.b16 %v1569
          %v1890 = vunpack.c.l.b16 %v1570
          %v1891 = vunpack.c.l.b16 %v1571
          %v1892 = vunpack.c.l.b16 %v1572
          %v1893 = vunpack.c.l.b16 %v1573
          %v1894 = vunpack.c.l.b16 %v1574
          %v1895 = vunpack.c.l.b16 %v1575
          %v1896 = vunpack.c.l.b16 %v1576
          %v1897 = vunpack.c.l.b16 %v1577
          %v1898 = vunpack.c.l.b16 %v1578
          %v1899 = vunpack.c.l.b16 %v1579
          %v1900 = vunpack.c.l.b16 %v1580
          %v1901 = vunpack.c.l.b16 %v1581
          %v1902 = vunpack.c.l.b16 %v1582
          %v1903 = vunpack.c.l.b16 %v1583
          %v1904 = vunpack.c.l.b16 %v1584
          %v1905 = vunpack.c.l.b16 %v1585
          %v1906 = vunpack.c.l.b16 %v1586
          %v1907 = vunpack.c.l.b16 %v1587
          %v1908 = vunpack.c.l.b16 %v1588
          %v1909 = vunpack.c.l.b16 %v1589
          %v1910 = vunpack.c.l.b16 %v1590
          %v1911 = vunpack.c.l.b16 %v1591
          %v1912 = vunpack.c.l.b16 %v1592
          %v1913 = vunpack.c.l.b16 %v1593
          %v1914 = vunpack.c.l.b16 %v1594
          %v1915 = vunpack.c.l.b16 %v1595
          %v1916 = vunpack.c.l.b16 %v1596
          %v1917 = vunpack.c.l.b16 %v1597
          %v1918 = vunpack.c.l.b16 %v1598
          %v1919 = vunpack.c.l.b16 %v1599
          %v1920 = vunpack.c.l.b16 %v1600
          %v1921 = vunpack.c.l.b16 %v1601
          %v1922 = vunpack.c.l.b16 %v1602
          %v1923 = vunpack.c.l.b16 %v1603
          %v1924 = vunpack.c.l.b16 %v1604
          %v1925 = vunpack.c.l.b16 %v1605
          %v1926 = vunpack.c.l.b16 %v1606
          %v1927 = vunpack.c.l.b16 %v1607
          %v1928 = vunpack.c.l.b16 %v1608
          %v1929 = vunpack.c.l.b16 %v1609
          %v1930 = vunpack.c.l.b16 %v1610
          %v1931 = vunpack.c.l.b16 %v1611
          %v1932 = vunpack.c.l.b16 %v1612
          %v1933 = vunpack.c.l.b16 %v1613
          %v1934 = vunpack.c.l.b16 %v1614
          %v1935 = vunpack.c.l.b16 %v1615
          %v1936 = vunpack.c.l.b16 %v1616
          %v1937 = vunpack.c.l.b16 %v1617
          %v1938 = vunpack.c.l.b16 %v1618
          %v1939 = vunpack.c.l.b16 %v1619
          %v1940 = vunpack.c.l.b16 %v1620
          %v1941 = vunpack.c.l.b16 %v1621
          %v1942 = vunpack.c.l.b16 %v1622
          %v1943 = vunpack.c.l.b16 %v1623
          %v1944 = vunpack.c.l.b16 %v1624
          %v1945 = vunpack.c.l.b16 %v1625
          %v1946 = vunpack.c.l.b16 %v1626
          %v1947 = vunpack.c.l.b16 %v1627
          %v1948 = vunpack.c.l.b16 %v1628
          %v1949 = vunpack.c.l.b16 %v1629
          %v1950 = vunpack.c.l.b16 %v1630
          %v1951 = vunpack.c.l.b16 %v1631
          %v1952 = vunpack.c.l.b16 %v1632
          %v1953 = vunpack.c.l.b16 %v1633
          %v1954 = vunpack.c.l.b16 %v1634
          %v1955 = vunpack.c.l.b16 %v1635
          %v1956 = vunpack.c.l.b16 %v1636
          %v1957 = vunpack.c.l.b16 %v1637
          %v1958 = vunpack.c.l.b16 %v1638
          %v1959 = vunpack.c.l.b16 %v1639
          %v1960 = vunpack.c.l.b16 %v1640
          %v1961 = vunpack.c.l.b16 %v1641
          %v1962 = vunpack.c.l.b16 %v1642
          %v1963 = vunpack.c.l.b16 %v1643
          %v1964 = vunpack.c.l.b16 %v1644
          %v1965 = vunpack.c.l.b16 %v1645
          %v1966 = vunpack.c.l.b16 %v1646
          %v1967 = vunpack.c.l.b16 %v1647
          %v1968 = vunpack.c.l.b16 %v1648
          %v1969 = vunpack.c.l.b16 %v1649
          %v1970 = vunpack.c.l.b16 %v1650
          %v1971 = vunpack.c.l.b16 %v1651
          %v1972 = vunpack.c.l.b16 %v1652
          %v1973 = vunpack.c.l.b16 %v1653
          %v1974 = vunpack.c.l.b16 %v1654
          %v1975 = vunpack.c.l.b16 %v1655
          %v1976 = vunpack.c.l.b16 %v1656
          %v1977 = vunpack.c.l.b16 %v1657
          %v1978 = vunpack.c.l.b16 %v1658
          %v1979 = vunpack.c.l.b16 %v1659
          %v1980 = vunpack.c.l.b16 %v1660
          %v1981 = vunpack.c.l.b16 %v1661
          %v1982 = vunpack.c.l.b16 %v1662
          %v1983 = vunpack.c.l.b16 %v1663
          %v1984 = vunpack.c.l.b16 %v1664
          %v1985 = vunpack.c.l.b16 %v1665
          %v1986 = vunpack.c.l.b16 %v1666
          %v1987 = vunpack.c.l.b16 %v1667
          %v1988 = vunpack.c.l.b16 %v1668
          %v1989 = vunpack.c.l.b16 %v1669
          %v1990 = vunpack.c.l.b16 %v1670
          %v1991 = vunpack.c.l.b16 %v1671
          %v1992 = vunpack.c.l.b16 %v1672
          %v1993 = vunpack.c.l.b16 %v1673
          %v1994 = vunpack.c.l.b16 %v1674
          %v1995 = vunpack.c.l.b16 %v1675
          %v1996 = vunpack.c.l.b16 %v1676
          %v1997 = vunpack.c.l.b16 %v1677
          %v1998 = vunpack.c.l.b16 %v1678
          %v1999 = vunpack.c.l.b16 %v1679
          %v2000 = vunpack.c.l.b16 %v1680
          %v2001 = vunpack.c.l.b16 %v1681
          %v2002 = vunpack.c.l.b16 %v1682
          %v2003 = vunpack.c.l.b16 %v1683
          %v2004 = vunpack.c.l.b16 %v1684
          %v2005 = vunpack.c.l.b16 %v1685
          %v2006 = vunpack.c.l.b16 %v1686
          %v2007 = vunpack.c.l.b16 %v1687
          %v2008 = vunpack.c.l.b16 %v1688
          %v2009 = vpack.c.b16 %v1882, %v1881
          %v2010 = vpack.c.b16 %v1884, %v1883
          %v2011 = vpack.c.b16 %v1886, %v1885
          %v2012 = vpack.c.b16 %v1888, %v1887
          %v2013 = vpack.c.b16 %v1890, %v1889
          %v2014 = vpack.c.b16 %v1892, %v1891
          %v2015 = vpack.c.b16 %v1894, %v1893
          %v2016 = vpack.c.b16 %v1896, %v1895
          %v2017 = vpack.c.b16 %v1898, %v1897
          %v2018 = vpack.c.b16 %v1900, %v1899
          %v2019 = vpack.c.b16 %v1902, %v1901
          %v2020 = vpack.c.b16 %v1904, %v1903
          %v2021 = vpack.c.b16 %v1906, %v1905
          %v2022 = vpack.c.b16 %v1908, %v1907
          %v2023 = vpack.c.b16 %v1910, %v1909
          %v2024 = vpack.c.b16 %v1912, %v1911
          %v2025 = vpack.c.b16 %v1914, %v1913
          %v2026 = vpack.c.b16 %v1916, %v1915
          %v2027 = vpack.c.b16 %v1918, %v1917
          %v2028 = vpack.c.b16 %v1920, %v1919
          %v2029 = vpack.c.b16 %v1922, %v1921
          %v2030 = vpack.c.b16 %v1924, %v1923
          %v2031 = vpack.c.b16 %v1926, %v1925
          %v2032 = vpack.c.b16 %v1928, %v1927
          %v2033 = vpack.c.b16 %v1930, %v1929
          %v2034 = vpack.c.b16 %v1932, %v1931
          %v2035 = vpack.c.b16 %v1934, %v1933
          %v2036 = vpack.c.b16 %v1936, %v1935
          %v2037 = vpack.c.b16 %v1938, %v1937
          %v2038 = vpack.c.b16 %v1940, %v1939
          %v2039 = vpack.c.b16 %v1942, %v1941
          %v2040 = vpack.c.b16 %v1944, %v1943
          %v2041 = vpack.c.b16 %v1946, %v1945
          %v2042 = vpack.c.b16 %v1948, %v1947
          %v2043 = vpack.c.b16 %v1950, %v1949
          %v2044 = vpack.c.b16 %v1952, %v1951
          %v2045 = vpack.c.b16 %v1954, %v1953
          %v2046 = vpack.c.b16 %v1956, %v1955
          %v2047 = vpack.c.b16 %v1958, %v1957
          %v2048 = vpack.c.b16 %v1960, %v1959
          %v2049 = vpack.c.b16 %v1962, %v1961
          %v2050 = vpack.c.b16 %v1964, %v1963
          %v2051 = vpack.c.b16 %v1966, %v1965
          %v2052 = vpack.c.b16 %v1968, %v1967
          %v2053 = vpack.c.b16 %v1970, %v1969
          %v2054 = vpack.c.b16 %v1972, %v1971
          %v2055 = vpack.c.b16 %v1974, %v1973
          %v2056 = vpack.c.b16 %v1976, %v1975
          %v2057 = vpack.c.b16 %v1978, %v1977
          %v2058 = vpack.c.b16 %v1980, %v1979
          %v2059 = vpack.c.b16 %v1982, %v1981
          %v2060 = vpack.c.b16 %v1984, %v1983
          %v2061 = vpack.c.b16 %v1986, %v1985
          %v2062 = vpack.c.b16 %v1988, %v1987
          %v2063 = vpack.c.b16 %v1990, %v1989
          %v2064 = vpack.c.b16 %v1992, %v1991
          %v2065 = vpack.c.b16 %v1994, %v1993
          %v2066 = vpack.c.b16 %v1996, %v1995
          %v2067 = vpack.c.b16 %v1998, %v1997
          %v2068 = vpack.c.b16 %v2000, %v1999
          %v2069 = vpack.c.b16 %v2002, %v2001
          %v2070 = vpack.c.b16 %v2004, %v2003
          %v2071 = vpack.c.b16 %v2006, %v2005
          %v2072 = vpack.c.b16 %v2008, %v2007
          %2137 = vmatprep.subr.bf16.mxu0 0
          %2138 = vmatpush1.bf16.msra.mxu0 %v2016
          %2139 = vmatprep.subr.bf16.mxu0 0
          %2140 = vmatpush1.bf16.msra.mxu0 %v2015
          %2141 = vmatprep.subr.bf16.mxu0 0
          %2142 = vmatpush1.bf16.msra.mxu0 %v2014
          %2143 = vmatprep.subr.bf16.mxu0 0
          %2144 = vmatpush1.bf16.msra.mxu0 %v2013
          %2145 = vmatprep.subr.bf16.mxu0 0
          %2146 = vmatpush1.bf16.msra.mxu0 %v2012
          %2147 = vmatprep.subr.bf16.mxu0 0
          %2148 = vmatpush1.bf16.msra.mxu0 %v2011
          %2149 = vmatprep.subr.bf16.mxu0 0
          %2150 = vmatpush1.bf16.msra.mxu0 %v2010
          %2151 = vmatprep.subr.bf16.mxu0 0
          %2152 = vmatpush1.bf16.msra.mxu0 %v2009
          %2153 = vmatprep.subr.bf16.mxu0 0
          %2154 = vmatpush2.bf16.msra.mxu0 %v2024
          %2155 = vmatprep.subr.bf16.mxu0 0
          %2156 = vmatpush2.bf16.msra.mxu0 %v2023
          %2157 = vmatprep.subr.bf16.mxu0 0
          %2158 = vmatpush2.bf16.msra.mxu0 %v2022
          %2159 = vmatprep.subr.bf16.mxu0 0
          %2160 = vmatpush2.bf16.msra.mxu0 %v2021
          %2161 = vmatprep.subr.bf16.mxu0 0
          %2162 = vmatpush2.bf16.msra.mxu0 %v2020
          %2163 = vmatprep.subr.bf16.mxu0 0
          %2164 = vmatpush2.bf16.msra.mxu0 %v2019
          %2165 = vmatprep.subr.bf16.mxu0 0
          %2166 = vmatpush2.bf16.msra.mxu0 %v2018
          %2167 = vmatprep.subr.bf16.mxu0 0
          %2168 = vmatpush2.bf16.msra.mxu0 %v2017
          %2169 = vmatprep.mubr.bf16.mxu0 %v1733
          %2170 = vmatmul.mubr.bf16.gmra.mxu0 %v1719
          %v2171 = vpop.f32.mrf.mxu0
          %v2172 = vadd.f32 %v1694, %v2171
          %v2173 = vpop.f32.mrf.mxu0
          %v2174 = vpop.f32.mrf.mxu0
          %v2175 = vpop.f32.mrf.mxu0
          %2176 = vdwg.mxu0
          %2177 = vmatprep.subr.bf16.mxu0 0
          %2178 = vmatpush1.bf16.msra.mxu0 %v2032
          %2179 = vmatprep.subr.bf16.mxu0 0
          %2180 = vmatpush1.bf16.msra.mxu0 %v2031
          %2181 = vmatprep.subr.bf16.mxu0 0
          %2182 = vmatpush1.bf16.msra.mxu0 %v2030
          %2183 = vmatprep.subr.bf16.mxu0 0
          %2184 = vmatpush1.bf16.msra.mxu0 %v2029
          %2185 = vmatprep.subr.bf16.mxu0 0
          %2186 = vmatpush1.bf16.msra.mxu0 %v2028
          %2187 = vmatprep.subr.bf16.mxu0 0
          %2188 = vmatpush1.bf16.msra.mxu0 %v2027
          %2189 = vmatprep.subr.bf16.mxu0 0
          %2190 = vmatpush1.bf16.msra.mxu0 %v2026
          %2191 = vmatprep.subr.bf16.mxu0 0
          %2192 = vmatpush1.bf16.msra.mxu0 %v2025
          %2193 = vmatprep.subr.bf16.mxu0 0
          %2194 = vmatpush2.bf16.msra.mxu0 %v2040
          %2195 = vmatprep.subr.bf16.mxu0 0
          %2196 = vmatpush2.bf16.msra.mxu0 %v2039
          %2197 = vmatprep.subr.bf16.mxu0 0
          %2198 = vmatpush2.bf16.msra.mxu0 %v2038
          %2199 = vmatprep.subr.bf16.mxu0 0
          %2200 = vmatpush2.bf16.msra.mxu0 %v2037
          %2201 = vmatprep.subr.bf16.mxu0 0
          %2202 = vmatpush2.bf16.msra.mxu0 %v2036
          %2203 = vmatprep.subr.bf16.mxu0 0
          %2204 = vmatpush2.bf16.msra.mxu0 %v2035
          %2205 = vmatprep.subr.bf16.mxu0 0
          %2206 = vmatpush2.bf16.msra.mxu0 %v2034
          %2207 = vmatprep.subr.bf16.mxu0 0
          %2208 = vmatpush2.bf16.msra.mxu0 %v2033
          %2209 = vmatprep.mubr.bf16.mxu0 %v1743
          %2210 = vmatmul.mubr.bf16.gmra.mxu0 %v1741
          %v2211 = vpop.f32.mrf.mxu0
          %v2212 = vadd.f32 %v2172, %v2211
          %v2213 = vpop.f32.mrf.mxu0
          %v2214 = vpop.f32.mrf.mxu0
          %v2215 = vpop.f32.mrf.mxu0
          %2216 = vdwg.mxu0
          %2217 = vmatprep.subr.bf16.mxu0 0
          %2218 = vmatpush1.bf16.msra.mxu0 %v2048
          %2219 = vmatprep.subr.bf16.mxu0 0
          %2220 = vmatpush1.bf16.msra.mxu0 %v2047
          %2221 = vmatprep.subr.bf16.mxu0 0
          %2222 = vmatpush1.bf16.msra.mxu0 %v2046
          %2223 = vmatprep.subr.bf16.mxu0 0
          %2224 = vmatpush1.bf16.msra.mxu0 %v2045
          %2225 = vmatprep.subr.bf16.mxu0 0
          %2226 = vmatpush1.bf16.msra.mxu0 %v2044
          %2227 = vmatprep.subr.bf16.mxu0 0
          %2228 = vmatpush1.bf16.msra.mxu0 %v2043
          %2229 = vmatprep.subr.bf16.mxu0 0
          %2230 = vmatpush1.bf16.msra.mxu0 %v2042
          %2231 = vmatprep.subr.bf16.mxu0 0
          %2232 = vmatpush1.bf16.msra.mxu0 %v2041
          %2233 = vmatprep.subr.bf16.mxu0 0
          %2234 = vmatpush2.bf16.msra.mxu0 %v2056
          %2235 = vmatprep.subr.bf16.mxu0 0
          %2236 = vmatpush2.bf16.msra.mxu0 %v2055
          %2237 = vmatprep.subr.bf16.mxu0 0
          %2238 = vmatpush2.bf16.msra.mxu0 %v2054
          %2239 = vmatprep.subr.bf16.mxu0 0
          %2240 = vmatpush2.bf16.msra.mxu0 %v2053
          %2241 = vmatprep.subr.bf16.mxu0 0
          %2242 = vmatpush2.bf16.msra.mxu0 %v2052
          %2243 = vmatprep.subr.bf16.mxu0 0
          %2244 = vmatpush2.bf16.msra.mxu0 %v2051
          %2245 = vmatprep.subr.bf16.mxu0 0
          %2246 = vmatpush2.bf16.msra.mxu0 %v2050
          %2247 = vmatprep.subr.bf16.mxu0 0
          %2248 = vmatpush2.bf16.msra.mxu0 %v2049
          %2249 = vmatprep.mubr.bf16.mxu0 %v1740
          %2250 = vmatmul.mubr.bf16.gmra.mxu0 %v1726
          %v2251 = vpop.f32.mrf.mxu0
          %v2252 = vadd.f32 %v2212, %v2251
          %v2253 = vpop.f32.mrf.mxu0
          %v2254 = vpop.f32.mrf.mxu0
          %v2255 = vpop.f32.mrf.mxu0
          %2256 = vdwg.mxu0
          %2257 = vmatprep.subr.bf16.mxu0 0
          %2258 = vmatpush1.bf16.msra.mxu0 %v2064
          %2259 = vmatprep.subr.bf16.mxu0 0
          %2260 = vmatpush1.bf16.msra.mxu0 %v2063
          %2261 = vmatprep.subr.bf16.mxu0 0
          %2262 = vmatpush1.bf16.msra.mxu0 %v2062
          %2263 = vmatprep.subr.bf16.mxu0 0
          %2264 = vmatpush1.bf16.msra.mxu0 %v2061
          %2265 = vmatprep.subr.bf16.mxu0 0
          %2266 = vmatpush1.bf16.msra.mxu0 %v2060
          %2267 = vmatprep.subr.bf16.mxu0 0
          %2268 = vmatpush1.bf16.msra.mxu0 %v2059
          %2269 = vmatprep.subr.bf16.mxu0 0
          %2270 = vmatpush1.bf16.msra.mxu0 %v2058
          %2271 = vmatprep.subr.bf16.mxu0 0
          %2272 = vmatpush1.bf16.msra.mxu0 %v2057
          %2273 = vmatprep.subr.bf16.mxu0 0
          %2274 = vmatpush2.bf16.msra.mxu0 %v2072
          %2275 = vmatprep.subr.bf16.mxu0 0
          %2276 = vmatpush2.bf16.msra.mxu0 %v2071
          %2277 = vmatprep.subr.bf16.mxu0 0
          %2278 = vmatpush2.bf16.msra.mxu0 %v2070
          %2279 = vmatprep.subr.bf16.mxu0 0
          %2280 = vmatpush2.bf16.msra.mxu0 %v2069
          %2281 = vmatprep.subr.bf16.mxu0 0
          %2282 = vmatpush2.bf16.msra.mxu0 %v2068
          %2283 = vmatprep.subr.bf16.mxu0 0
          %2284 = vmatpush2.bf16.msra.mxu0 %v2067
          %2285 = vmatprep.subr.bf16.mxu0 0
          %2286 = vmatpush2.bf16.msra.mxu0 %v2066
          %2287 = vmatprep.subr.bf16.mxu0 0
          %2288 = vmatpush2.bf16.msra.mxu0 %v2065
          %2289 = vmatprep.mubr.bf16.mxu0 %v1744
          %2290 = vmatmul.mubr.bf16.gmra.mxu0 %v1742
          %v2291 = vpop.f32.mrf.mxu0
          %v2292 = vadd.f32 %v2252, %v2291
          %v2293 = vpop.f32.mrf.mxu0
          %v2294 = vpop.f32.mrf.mxu0
          %v2295 = vpop.f32.mrf.mxu0
          %2296 = vdwg.mxu0
          %v2297 = vmax.f32 %v2292, 0.0
          %v2298 = vpack.c.bf16 %v2297, %v2297
          %2299 = vst [vmem:[#allocation2] sm:$0x1] %v2298
        $region132: #{tpu_custom_call.1} parent=75 // pred_fallthru
          _
        %v2300 = vld [vmem:[#allocation2] sm:$0x1]
        %v2301 = vld [vmem:[%s608] sm:$0xff]
        %v2302 = vld [vmem:[%s608 + $0x8] sm:$0xff]
        %v2303 = vld [vmem:[%s608 + $0x10] sm:$0xff]
        %v2304 = vld [vmem:[%s608 + $0x18] sm:$0xff]
        %v2305 = vld [vmem:[%s608 + $0x20] sm:$0xff]
        %v2306 = vld [vmem:[%s608 + $0x28] sm:$0xff]
        %v2307 = vld [vmem:[%s608 + $0x30] sm:$0xff]
        %v2308 = vld [vmem:[%s608 + $0x38] sm:$0xff]
        %v2309 = vld [vmem:[%s608 + $0x40] sm:$0xff]
        %v2310 = vld [vmem:[%s608 + $0x48] sm:$0xff]
        %v2311 = vld [vmem:[%s608 + $0x50] sm:$0xff]
        %v2312 = vld [vmem:[%s608 + $0x58] sm:$0xff]
        %v2313 = vld [vmem:[%s608 + $0x60] sm:$0xff]
        %v2314 = vld [vmem:[%s608 + $0x68] sm:$0xff]
        %v2315 = vld [vmem:[%s608 + $0x70] sm:$0xff]
        %v2316 = vld [vmem:[%s608 + $0x78] sm:$0xff]
        %v2317 = vld [vmem:[%s608 + $0x80] sm:$0xff]
        %v2318 = vld [vmem:[%s608 + $0x88] sm:$0xff]
        %v2319 = vld [vmem:[%s608 + $0x90] sm:$0xff]
        %v2320 = vld [vmem:[%s608 + $0x98] sm:$0xff]
        %v2321 = vld [vmem:[%s608 + $0xa0] sm:$0xff]
        %v2322 = vld [vmem:[%s608 + $0xa8] sm:$0xff]
        %v2323 = vld [vmem:[%s608 + $0xb0] sm:$0xff]
        %v2324 = vld [vmem:[%s608 + $0xb8] sm:$0xff]
        %v2325 = vld [vmem:[%s608 + $0xc0] sm:$0xff]
        %v2326 = vld [vmem:[%s608 + $0xc8] sm:$0xff]
        %v2327 = vld [vmem:[%s608 + $0xd0] sm:$0xff]
        %v2328 = vld [vmem:[%s608 + $0xd8] sm:$0xff]
        %v2329 = vld [vmem:[%s608 + $0xe0] sm:$0xff]
        %v2330 = vld [vmem:[%s608 + $0xe8] sm:$0xff]
        %v2331 = vld [vmem:[%s608 + $0xf0] sm:$0xff]
        %v2332 = vld [vmem:[%s608 + $0xf8] sm:$0xff]
        %v2333 = vld [vmem:[%s608 + $0x100] sm:$0xff]
        %v2334 = vld [vmem:[%s608 + $0x108] sm:$0xff]
        %v2335 = vld [vmem:[%s608 + $0x110] sm:$0xff]
        %v2336 = vld [vmem:[%s608 + $0x118] sm:$0xff]
        %v2337 = vld [vmem:[%s608 + $0x120] sm:$0xff]
        %v2338 = vld [vmem:[%s608 + $0x128] sm:$0xff]
        %v2339 = vld [vmem:[%s608 + $0x130] sm:$0xff]
        %v2340 = vld [vmem:[%s608 + $0x138] sm:$0xff]
        %v2341 = vld [vmem:[%s608 + $0x140] sm:$0xff]
        %v2342 = vld [vmem:[%s608 + $0x148] sm:$0xff]
        %v2343 = vld [vmem:[%s608 + $0x150] sm:$0xff]
        %v2344 = vld [vmem:[%s608 + $0x158] sm:$0xff]
        %v2345 = vld [vmem:[%s608 + $0x160] sm:$0xff]
        %v2346 = vld [vmem:[%s608 + $0x168] sm:$0xff]
        %v2347 = vld [vmem:[%s608 + $0x170] sm:$0xff]
        %v2348 = vld [vmem:[%s608 + $0x178] sm:$0xff]
        %v2349 = vld [vmem:[%s608 + $0x180] sm:$0xff]
        %v2350 = vld [vmem:[%s608 + $0x188] sm:$0xff]
        %v2351 = vld [vmem:[%s608 + $0x190] sm:$0xff]
        %v2352 = vld [vmem:[%s608 + $0x198] sm:$0xff]
        %v2353 = vld [vmem:[%s608 + $0x1a0] sm:$0xff]
        %v2354 = vld [vmem:[%s608 + $0x1a8] sm:$0xff]
        %v2355 = vld [vmem:[%s608 + $0x1b0] sm:$0xff]
        %v2356 = vld [vmem:[%s608 + $0x1b8] sm:$0xff]
        %v2357 = vld [vmem:[%s608 + $0x1c0] sm:$0xff]
        %v2358 = vld [vmem:[%s608 + $0x1c8] sm:$0xff]
        %v2359 = vld [vmem:[%s608 + $0x1d0] sm:$0xff]
        %v2360 = vld [vmem:[%s608 + $0x1d8] sm:$0xff]
        %v2361 = vld [vmem:[%s608 + $0x1e0] sm:$0xff]
        %v2362 = vld [vmem:[%s608 + $0x1e8] sm:$0xff]
        %v2363 = vld [vmem:[%s608 + $0x1f0] sm:$0xff]
        %v2364 = vld [vmem:[%s608 + $0x1f8] sm:$0xff]
        %v2365 = vld [vmem:[%s608 + $0x200] sm:$0xff]
        %v2366 = vld [vmem:[%s608 + $0x208] sm:$0xff]
        %v2367 = vld [vmem:[%s608 + $0x210] sm:$0xff]
        %v2368 = vld [vmem:[%s608 + $0x218] sm:$0xff]
        %v2369 = vld [vmem:[%s608 + $0x220] sm:$0xff]
        %v2370 = vld [vmem:[%s608 + $0x228] sm:$0xff]
        %v2371 = vld [vmem:[%s608 + $0x230] sm:$0xff]
        %v2372 = vld [vmem:[%s608 + $0x238] sm:$0xff]
        %v2373 = vld [vmem:[%s608 + $0x240] sm:$0xff]
        %v2374 = vld [vmem:[%s608 + $0x248] sm:$0xff]
        %v2375 = vld [vmem:[%s608 + $0x250] sm:$0xff]
        %v2376 = vld [vmem:[%s608 + $0x258] sm:$0xff]
        %v2377 = vld [vmem:[%s608 + $0x260] sm:$0xff]
        %v2378 = vld [vmem:[%s608 + $0x268] sm:$0xff]
        %v2379 = vld [vmem:[%s608 + $0x270] sm:$0xff]
        %v2380 = vld [vmem:[%s608 + $0x278] sm:$0xff]
        %v2381 = vld [vmem:[%s608 + $0x280] sm:$0xff]
        %v2382 = vld [vmem:[%s608 + $0x288] sm:$0xff]
        %v2383 = vld [vmem:[%s608 + $0x290] sm:$0xff]
        %v2384 = vld [vmem:[%s608 + $0x298] sm:$0xff]
        %v2385 = vld [vmem:[%s608 + $0x2a0] sm:$0xff]
        %v2386 = vld [vmem:[%s608 + $0x2a8] sm:$0xff]
        %v2387 = vld [vmem:[%s608 + $0x2b0] sm:$0xff]
        %v2388 = vld [vmem:[%s608 + $0x2b8] sm:$0xff]
        %v2389 = vld [vmem:[%s608 + $0x2c0] sm:$0xff]
        %v2390 = vld [vmem:[%s608 + $0x2c8] sm:$0xff]
        %v2391 = vld [vmem:[%s608 + $0x2d0] sm:$0xff]
        %v2392 = vld [vmem:[%s608 + $0x2d8] sm:$0xff]
        %v2393 = vld [vmem:[%s608 + $0x2e0] sm:$0xff]
        %v2394 = vld [vmem:[%s608 + $0x2e8] sm:$0xff]
        %v2395 = vld [vmem:[%s608 + $0x2f0] sm:$0xff]
        %v2396 = vld [vmem:[%s608 + $0x2f8] sm:$0xff]
        %v2397 = vld [vmem:[%s608 + $0x300] sm:$0xff]
        %v2398 = vld [vmem:[%s608 + $0x308] sm:$0xff]
        %v2399 = vld [vmem:[%s608 + $0x310] sm:$0xff]
        %v2400 = vld [vmem:[%s608 + $0x318] sm:$0xff]
        %v2401 = vld [vmem:[%s608 + $0x320] sm:$0xff]
        %v2402 = vld [vmem:[%s608 + $0x328] sm:$0xff]
        %v2403 = vld [vmem:[%s608 + $0x330] sm:$0xff]
        %v2404 = vld [vmem:[%s608 + $0x338] sm:$0xff]
        %v2405 = vld [vmem:[%s608 + $0x340] sm:$0xff]
        %v2406 = vld [vmem:[%s608 + $0x348] sm:$0xff]
        %v2407 = vld [vmem:[%s608 + $0x350] sm:$0xff]
        %v2408 = vld [vmem:[%s608 + $0x358] sm:$0xff]
        %v2409 = vld [vmem:[%s608 + $0x360] sm:$0xff]
        %v2410 = vld [vmem:[%s608 + $0x368] sm:$0xff]
        %v2411 = vld [vmem:[%s608 + $0x370] sm:$0xff]
        %v2412 = vld [vmem:[%s608 + $0x378] sm:$0xff]
        %v2413 = vld [vmem:[%s608 + $0x380] sm:$0xff]
        %v2414 = vld [vmem:[%s608 + $0x388] sm:$0xff]
        %v2415 = vld [vmem:[%s608 + $0x390] sm:$0xff]
        %v2416 = vld [vmem:[%s608 + $0x398] sm:$0xff]
        %v2417 = vld [vmem:[%s608 + $0x3a0] sm:$0xff]
        %v2418 = vld [vmem:[%s608 + $0x3a8] sm:$0xff]
        %v2419 = vld [vmem:[%s608 + $0x3b0] sm:$0xff]
        %v2420 = vld [vmem:[%s608 + $0x3b8] sm:$0xff]
        %v2421 = vld [vmem:[%s608 + $0x3c0] sm:$0xff]
        %v2422 = vld [vmem:[%s608 + $0x3c8] sm:$0xff]
        %v2423 = vld [vmem:[%s608 + $0x3d0] sm:$0xff]
        %v2424 = vld [vmem:[%s608 + $0x3d8] sm:$0xff]
        %v2425 = vld [vmem:[%s608 + $0x3e0] sm:$0xff]
        %v2426 = vld [vmem:[%s608 + $0x3e8] sm:$0xff]
        %v2427 = vld [vmem:[%s608 + $0x3f0] sm:$0xff]
        %v2428 = vld [vmem:[%s608 + $0x3f8] sm:$0xff]
        %v2429 = vld [vmem:[%s608 + $0x400] sm:$0xff]
        %v2430 = vld [vmem:[%s608 + $0x408] sm:$0xff]
        %v2431 = vld [vmem:[%s608 + $0x410] sm:$0xff]
        %v2432 = vld [vmem:[%s608 + $0x418] sm:$0xff]
        %v2433 = vld [vmem:[%s608 + $0x420] sm:$0xff]
        %v2434 = vld [vmem:[%s608 + $0x428] sm:$0xff]
        %v2435 = vld [vmem:[%s608 + $0x430] sm:$0xff]
        %v2436 = vld [vmem:[%s608 + $0x438] sm:$0xff]
        %v2437 = vld [vmem:[%s608 + $0x440] sm:$0xff]
        %v2438 = vld [vmem:[%s608 + $0x448] sm:$0xff]
        %v2439 = vld [vmem:[%s608 + $0x450] sm:$0xff]
        %v2440 = vld [vmem:[%s608 + $0x458] sm:$0xff]
        %v2441 = vld [vmem:[%s608 + $0x460] sm:$0xff]
        %v2442 = vld [vmem:[%s608 + $0x468] sm:$0xff]
        %v2443 = vld [vmem:[%s608 + $0x470] sm:$0xff]
        %v2444 = vld [vmem:[%s608 + $0x478] sm:$0xff]
        %v2445 = vld [vmem:[%s608 + $0x480] sm:$0xff]
        %v2446 = vld [vmem:[%s608 + $0x488] sm:$0xff]
        %v2447 = vld [vmem:[%s608 + $0x490] sm:$0xff]
        %v2448 = vld [vmem:[%s608 + $0x498] sm:$0xff]
        %v2449 = vld [vmem:[%s608 + $0x4a0] sm:$0xff]
        %v2450 = vld [vmem:[%s608 + $0x4a8] sm:$0xff]
        %v2451 = vld [vmem:[%s608 + $0x4b0] sm:$0xff]
        %v2452 = vld [vmem:[%s608 + $0x4b8] sm:$0xff]
        %v2453 = vld [vmem:[%s608 + $0x4c0] sm:$0xff]
        %v2454 = vld [vmem:[%s608 + $0x4c8] sm:$0xff]
        %v2455 = vld [vmem:[%s608 + $0x4d0] sm:$0xff]
        %v2456 = vld [vmem:[%s608 + $0x4d8] sm:$0xff]
        %v2457 = vld [vmem:[%s608 + $0x4e0] sm:$0xff]
        %v2458 = vld [vmem:[%s608 + $0x4e8] sm:$0xff]
        %v2459 = vld [vmem:[%s608 + $0x4f0] sm:$0xff]
        %v2460 = vld [vmem:[%s608 + $0x4f8] sm:$0xff]
        %v2461 = vld [vmem:[%s608 + $0x500] sm:$0xff]
        %v2462 = vld [vmem:[%s608 + $0x508] sm:$0xff]
        %v2463 = vld [vmem:[%s608 + $0x510] sm:$0xff]
        %v2464 = vld [vmem:[%s608 + $0x518] sm:$0xff]
        %v2465 = vld [vmem:[%s608 + $0x520] sm:$0xff]
        %v2466 = vld [vmem:[%s608 + $0x528] sm:$0xff]
        %v2467 = vld [vmem:[%s608 + $0x530] sm:$0xff]
        %v2468 = vld [vmem:[%s608 + $0x538] sm:$0xff]
        %v2469 = vld [vmem:[%s608 + $0x540] sm:$0xff]
        %v2470 = vld [vmem:[%s608 + $0x548] sm:$0xff]
        %v2471 = vld [vmem:[%s608 + $0x550] sm:$0xff]
        %v2472 = vld [vmem:[%s608 + $0x558] sm:$0xff]
        %v2473 = vld [vmem:[%s608 + $0x560] sm:$0xff]
        %v2474 = vld [vmem:[%s608 + $0x568] sm:$0xff]
        %v2475 = vld [vmem:[%s608 + $0x570] sm:$0xff]
        %v2476 = vld [vmem:[%s608 + $0x578] sm:$0xff]
        %v2477 = vld [vmem:[%s608 + $0x580] sm:$0xff]
        %v2478 = vld [vmem:[%s608 + $0x588] sm:$0xff]
        %v2479 = vld [vmem:[%s608 + $0x590] sm:$0xff]
        %v2480 = vld [vmem:[%s608 + $0x598] sm:$0xff]
        %v2481 = vld [vmem:[%s608 + $0x5a0] sm:$0xff]
        %v2482 = vld [vmem:[%s608 + $0x5a8] sm:$0xff]
        %v2483 = vld [vmem:[%s608 + $0x5b0] sm:$0xff]
        %v2484 = vld [vmem:[%s608 + $0x5b8] sm:$0xff]
        %v2485 = vld [vmem:[%s608 + $0x5c0] sm:$0xff]
        %v2486 = vld [vmem:[%s608 + $0x5c8] sm:$0xff]
        %v2487 = vld [vmem:[%s608 + $0x5d0] sm:$0xff]
        %v2488 = vld [vmem:[%s608 + $0x5d8] sm:$0xff]
        %v2489 = vld [vmem:[%s608 + $0x5e0] sm:$0xff]
        %v2490 = vld [vmem:[%s608 + $0x5e8] sm:$0xff]
        %v2491 = vld [vmem:[%s608 + $0x5f0] sm:$0xff]
        %v2492 = vld [vmem:[%s608 + $0x5f8] sm:$0xff]
        %v2493 = vld [vmem:[%s608 + $0x600] sm:$0xff]
        %v2494 = vld [vmem:[%s608 + $0x608] sm:$0xff]
        %v2495 = vld [vmem:[%s608 + $0x610] sm:$0xff]
        %v2496 = vld [vmem:[%s608 + $0x618] sm:$0xff]
        %v2497 = vld [vmem:[%s608 + $0x620] sm:$0xff]
        %v2498 = vld [vmem:[%s608 + $0x628] sm:$0xff]
        %v2499 = vld [vmem:[%s608 + $0x630] sm:$0xff]
        %v2500 = vld [vmem:[%s608 + $0x638] sm:$0xff]
        %v2501 = vld [vmem:[%s608 + $0x640] sm:$0xff]
        %v2502 = vld [vmem:[%s608 + $0x648] sm:$0xff]
        %v2503 = vld [vmem:[%s608 + $0x650] sm:$0xff]
        %v2504 = vld [vmem:[%s608 + $0x658] sm:$0xff]
        %v2505 = vld [vmem:[%s608 + $0x660] sm:$0xff]
        %v2506 = vld [vmem:[%s608 + $0x668] sm:$0xff]
        %v2507 = vld [vmem:[%s608 + $0x670] sm:$0xff]
        %v2508 = vld [vmem:[%s608 + $0x678] sm:$0xff]
        %v2509 = vld [vmem:[%s608 + $0x680] sm:$0xff]
        %v2510 = vld [vmem:[%s608 + $0x688] sm:$0xff]
        %v2511 = vld [vmem:[%s608 + $0x690] sm:$0xff]
        %v2512 = vld [vmem:[%s608 + $0x698] sm:$0xff]
        %v2513 = vld [vmem:[%s608 + $0x6a0] sm:$0xff]
        %v2514 = vld [vmem:[%s608 + $0x6a8] sm:$0xff]
        %v2515 = vld [vmem:[%s608 + $0x6b0] sm:$0xff]
        %v2516 = vld [vmem:[%s608 + $0x6b8] sm:$0xff]
        %v2517 = vld [vmem:[%s608 + $0x6c0] sm:$0xff]
        %v2518 = vld [vmem:[%s608 + $0x6c8] sm:$0xff]
        %v2519 = vld [vmem:[%s608 + $0x6d0] sm:$0xff]
        %v2520 = vld [vmem:[%s608 + $0x6d8] sm:$0xff]
        %v2521 = vld [vmem:[%s608 + $0x6e0] sm:$0xff]
        %v2522 = vld [vmem:[%s608 + $0x6e8] sm:$0xff]
        %v2523 = vld [vmem:[%s608 + $0x6f0] sm:$0xff]
        %v2524 = vld [vmem:[%s608 + $0x6f8] sm:$0xff]
        %v2525 = vld [vmem:[%s608 + $0x700] sm:$0xff]
        %v2526 = vld [vmem:[%s608 + $0x708] sm:$0xff]
        %v2527 = vld [vmem:[%s608 + $0x710] sm:$0xff]
        %v2528 = vld [vmem:[%s608 + $0x718] sm:$0xff]
        %v2529 = vld [vmem:[%s608 + $0x720] sm:$0xff]
        %v2530 = vld [vmem:[%s608 + $0x728] sm:$0xff]
        %v2531 = vld [vmem:[%s608 + $0x730] sm:$0xff]
        %v2532 = vld [vmem:[%s608 + $0x738] sm:$0xff]
        %v2533 = vld [vmem:[%s608 + $0x740] sm:$0xff]
        %v2534 = vld [vmem:[%s608 + $0x748] sm:$0xff]
        %v2535 = vld [vmem:[%s608 + $0x750] sm:$0xff]
        %v2536 = vld [vmem:[%s608 + $0x758] sm:$0xff]
        %v2537 = vld [vmem:[%s608 + $0x760] sm:$0xff]
        %v2538 = vld [vmem:[%s608 + $0x768] sm:$0xff]
        %v2539 = vld [vmem:[%s608 + $0x770] sm:$0xff]
        %v2540 = vld [vmem:[%s608 + $0x778] sm:$0xff]
        %v2541 = vld [vmem:[%s608 + $0x780] sm:$0xff]
        %v2542 = vld [vmem:[%s608 + $0x788] sm:$0xff]
        %v2543 = vld [vmem:[%s608 + $0x790] sm:$0xff]
        %v2544 = vld [vmem:[%s608 + $0x798] sm:$0xff]
        %v2545 = vld [vmem:[%s608 + $0x7a0] sm:$0xff]
        %v2546 = vld [vmem:[%s608 + $0x7a8] sm:$0xff]
        %v2547 = vld [vmem:[%s608 + $0x7b0] sm:$0xff]
        %v2548 = vld [vmem:[%s608 + $0x7b8] sm:$0xff]
        %v2549 = vld [vmem:[%s608 + $0x7c0] sm:$0xff]
        %v2550 = vld [vmem:[%s608 + $0x7c8] sm:$0xff]
        %v2551 = vld [vmem:[%s608 + $0x7d0] sm:$0xff]
        %v2552 = vld [vmem:[%s608 + $0x7d8] sm:$0xff]
        %v2553 = vld [vmem:[%s608 + $0x7e0] sm:$0xff]
        %v2554 = vld [vmem:[%s608 + $0x7e8] sm:$0xff]
        %v2555 = vld [vmem:[%s608 + $0x7f0] sm:$0xff]
        %v2556 = vld [vmem:[%s608 + $0x7f8] sm:$0xff]
        %v2557 = vld [vmem:[%s617] sm:$0xff]
        %v2558 = vld [vmem:[%s617 + $0x8] sm:$0xff]
        %v2559 = vld [vmem:[%s617 + $0x10] sm:$0xff]
        %v2560 = vld [vmem:[%s617 + $0x18] sm:$0xff]
        %v2565 = vlaneseq
        %v2566 = vshrl.u32 %v2565, 7
        %v2567 = vsub.s32 0, %v2566
        %v2568 = vrot.slane %v2557, %v2567
        %v2569 = vlaneseq
        %v2570 = vshrl.u32 %v2569, 7
        %v2571 = vsub.s32 1, %v2570
        %v2572 = vrot.slane %v2557, %v2571
        %v2573 = vlaneseq
        %v2574 = vshrl.u32 %v2573, 7
        %v2575 = vsub.s32 2, %v2574
        %v2576 = vrot.slane %v2557, %v2575
        %v2577 = vlaneseq
        %v2578 = vshrl.u32 %v2577, 7
        %v2579 = vsub.s32 3, %v2578
        %v2580 = vrot.slane %v2557, %v2579
        %v2581 = vlaneseq
        %v2582 = vshrl.u32 %v2581, 7
        %v2583 = vsub.s32 4, %v2582
        %v2584 = vrot.slane %v2557, %v2583
        %v2585 = vlaneseq
        %v2586 = vshrl.u32 %v2585, 7
        %v2587 = vsub.s32 5, %v2586
        %v2588 = vrot.slane %v2557, %v2587
        %v2589 = vlaneseq
        %v2590 = vshrl.u32 %v2589, 7
        %v2591 = vsub.s32 6, %v2590
        %v2592 = vrot.slane %v2557, %v2591
        %v2593 = vlaneseq
        %v2594 = vshrl.u32 %v2593, 7
        %v2595 = vsub.s32 7, %v2594
        %v2596 = vrot.slane %v2557, %v2595
        %v2597 = vlaneseq
        %v2598 = vshrl.u32 %v2597, 7
        %v2599 = vsub.s32 0, %v2598
        %v2600 = vrot.slane %v2558, %v2599
        %v2601 = vlaneseq
        %v2602 = vshrl.u32 %v2601, 7
        %v2603 = vsub.s32 1, %v2602
        %v2604 = vrot.slane %v2558, %v2603
        %v2605 = vlaneseq
        %v2606 = vshrl.u32 %v2605, 7
        %v2607 = vsub.s32 2, %v2606
        %v2608 = vrot.slane %v2558, %v2607
        %v2609 = vlaneseq
        %v2610 = vshrl.u32 %v2609, 7
        %v2611 = vsub.s32 3, %v2610
        %v2612 = vrot.slane %v2558, %v2611
        %v2613 = vlaneseq
        %v2614 = vshrl.u32 %v2613, 7
        %v2615 = vsub.s32 4, %v2614
        %v2616 = vrot.slane %v2558, %v2615
        %v2617 = vlaneseq
        %v2618 = vshrl.u32 %v2617, 7
        %v2619 = vsub.s32 5, %v2618
        %v2620 = vrot.slane %v2558, %v2619
        %v2621 = vlaneseq
        %v2622 = vshrl.u32 %v2621, 7
        %v2623 = vsub.s32 6, %v2622
        %v2624 = vrot.slane %v2558, %v2623
        %v2625 = vlaneseq
        %v2626 = vshrl.u32 %v2625, 7
        %v2627 = vsub.s32 7, %v2626
        %v2628 = vrot.slane %v2558, %v2627
        %v2629 = vlaneseq
        %v2630 = vshrl.u32 %v2629, 7
        %v2631 = vsub.s32 0, %v2630
        %v2632 = vrot.slane %v2559, %v2631
        %v2633 = vlaneseq
        %v2634 = vshrl.u32 %v2633, 7
        %v2635 = vsub.s32 1, %v2634
        %v2636 = vrot.slane %v2559, %v2635
        %v2637 = vlaneseq
        %v2638 = vshrl.u32 %v2637, 7
        %v2639 = vsub.s32 2, %v2638
        %v2640 = vrot.slane %v2559, %v2639
        %v2641 = vlaneseq
        %v2642 = vshrl.u32 %v2641, 7
        %v2643 = vsub.s32 3, %v2642
        %v2644 = vrot.slane %v2559, %v2643
        %v2645 = vlaneseq
        %v2646 = vshrl.u32 %v2645, 7
        %v2647 = vsub.s32 4, %v2646
        %v2648 = vrot.slane %v2559, %v2647
        %v2649 = vlaneseq
        %v2650 = vshrl.u32 %v2649, 7
        %v2651 = vsub.s32 5, %v2650
        %v2652 = vrot.slane %v2559, %v2651
        %v2653 = vlaneseq
        %v2654 = vshrl.u32 %v2653, 7
        %v2655 = vsub.s32 6, %v2654
        %v2656 = vrot.slane %v2559, %v2655
        %v2657 = vlaneseq
        %v2658 = vshrl.u32 %v2657, 7
        %v2659 = vsub.s32 7, %v2658
        %v2660 = vrot.slane %v2559, %v2659
        %v2661 = vlaneseq
        %v2662 = vshrl.u32 %v2661, 7
        %v2663 = vsub.s32 0, %v2662
        %v2664 = vrot.slane %v2560, %v2663
        %v2665 = vlaneseq
        %v2666 = vshrl.u32 %v2665, 7
        %v2667 = vsub.s32 1, %v2666
        %v2668 = vrot.slane %v2560, %v2667
        %v2669 = vlaneseq
        %v2670 = vshrl.u32 %v2669, 7
        %v2671 = vsub.s32 2, %v2670
        %v2672 = vrot.slane %v2560, %v2671
        %v2673 = vlaneseq
        %v2674 = vshrl.u32 %v2673, 7
        %v2675 = vsub.s32 3, %v2674
        %v2676 = vrot.slane %v2560, %v2675
        %v2677 = vlaneseq
        %v2678 = vshrl.u32 %v2677, 7
        %v2679 = vsub.s32 4, %v2678
        %v2680 = vrot.slane %v2560, %v2679
        %v2681 = vlaneseq
        %v2682 = vshrl.u32 %v2681, 7
        %v2683 = vsub.s32 5, %v2682
        %v2684 = vrot.slane %v2560, %v2683
        %v2685 = vlaneseq
        %v2686 = vshrl.u32 %v2685, 7
        %v2687 = vsub.s32 6, %v2686
        %v2688 = vrot.slane %v2560, %v2687
        %v2689 = vlaneseq
        %v2690 = vshrl.u32 %v2689, 7
        %v2691 = vsub.s32 7, %v2690
        %v2692 = vrot.slane %v2560, %v2691
        %v2981 = vunpack.c.l.b16 %v2301
        %v2982 = vunpack.c.h.b16 %v2301
        %v2983 = vunpack.c.l.b16 %v2302
        %v2984 = vunpack.c.h.b16 %v2302
        %v2985 = vunpack.c.l.b16 %v2303
        %v2986 = vunpack.c.h.b16 %v2303
        %v2987 = vunpack.c.l.b16 %v2304
        %v2988 = vunpack.c.h.b16 %v2304
        %v2989 = vunpack.c.l.b16 %v2305
        %v2990 = vunpack.c.h.b16 %v2305
        %v2991 = vunpack.c.l.b16 %v2306
        %v2992 = vunpack.c.h.b16 %v2306
        %v2993 = vunpack.c.l.b16 %v2307
        %v2994 = vunpack.c.h.b16 %v2307
        %v2995 = vunpack.c.l.b16 %v2308
        %v2996 = vunpack.c.h.b16 %v2308
        %v2997 = vunpack.c.l.b16 %v2309
        %v2998 = vunpack.c.h.b16 %v2309
        %v2999 = vunpack.c.l.b16 %v2310
        %v3000 = vunpack.c.h.b16 %v2310
        %v3001 = vunpack.c.l.b16 %v2311
        %v3002 = vunpack.c.h.b16 %v2311
        %v3003 = vunpack.c.l.b16 %v2312
        %v3004 = vunpack.c.h.b16 %v2312
        %v3005 = vunpack.c.l.b16 %v2313
        %v3006 = vunpack.c.h.b16 %v2313
        %v3007 = vunpack.c.l.b16 %v2314
        %v3008 = vunpack.c.h.b16 %v2314
        %v3009 = vunpack.c.l.b16 %v2315
        %v3010 = vunpack.c.h.b16 %v2315
        %v3011 = vunpack.c.l.b16 %v2316
        %v3012 = vunpack.c.h.b16 %v2316
        %v3013 = vunpack.c.l.b16 %v2317
        %v3014 = vunpack.c.h.b16 %v2317
        %v3015 = vunpack.c.l.b16 %v2318
        %v3016 = vunpack.c.h.b16 %v2318
        %v3017 = vunpack.c.l.b16 %v2319
        %v3018 = vunpack.c.h.b16 %v2319
        %v3019 = vunpack.c.l.b16 %v2320
        %v3020 = vunpack.c.h.b16 %v2320
        %v3021 = vunpack.c.l.b16 %v2321
        %v3022 = vunpack.c.h.b16 %v2321
        %v3023 = vunpack.c.l.b16 %v2322
        %v3024 = vunpack.c.h.b16 %v2322
        %v3025 = vunpack.c.l.b16 %v2323
        %v3026 = vunpack.c.h.b16 %v2323
        %v3027 = vunpack.c.l.b16 %v2324
        %v3028 = vunpack.c.h.b16 %v2324
        %v3029 = vunpack.c.l.b16 %v2325
        %v3030 = vunpack.c.h.b16 %v2325
        %v3031 = vunpack.c.l.b16 %v2326
        %v3032 = vunpack.c.h.b16 %v2326
        %v3033 = vunpack.c.l.b16 %v2327
        %v3034 = vunpack.c.h.b16 %v2327
        %v3035 = vunpack.c.l.b16 %v2328
        %v3036 = vunpack.c.h.b16 %v2328
        %v3037 = vunpack.c.l.b16 %v2329
        %v3038 = vunpack.c.h.b16 %v2329
        %v3039 = vunpack.c.l.b16 %v2330
        %v3040 = vunpack.c.h.b16 %v2330
        %v3041 = vunpack.c.l.b16 %v2331
        %v3042 = vunpack.c.h.b16 %v2331
        %v3043 = vunpack.c.l.b16 %v2332
        %v3044 = vunpack.c.h.b16 %v2332
        %v3045 = vunpack.c.l.b16 %v2333
        %v3046 = vunpack.c.h.b16 %v2333
        %v3047 = vunpack.c.l.b16 %v2334
        %v3048 = vunpack.c.h.b16 %v2334
        %v3049 = vunpack.c.l.b16 %v2335
        %v3050 = vunpack.c.h.b16 %v2335
        %v3051 = vunpack.c.l.b16 %v2336
        %v3052 = vunpack.c.h.b16 %v2336
        %v3053 = vunpack.c.l.b16 %v2337
        %v3054 = vunpack.c.h.b16 %v2337
        %v3055 = vunpack.c.l.b16 %v2338
        %v3056 = vunpack.c.h.b16 %v2338
        %v3057 = vunpack.c.l.b16 %v2339
        %v3058 = vunpack.c.h.b16 %v2339
        %v3059 = vunpack.c.l.b16 %v2340
        %v3060 = vunpack.c.h.b16 %v2340
        %v3061 = vunpack.c.l.b16 %v2341
        %v3062 = vunpack.c.h.b16 %v2341
        %v3063 = vunpack.c.l.b16 %v2342
        %v3064 = vunpack.c.h.b16 %v2342
        %v3065 = vunpack.c.l.b16 %v2343
        %v3066 = vunpack.c.h.b16 %v2343
        %v3067 = vunpack.c.l.b16 %v2344
        %v3068 = vunpack.c.h.b16 %v2344
        %v3069 = vunpack.c.l.b16 %v2345
        %v3070 = vunpack.c.h.b16 %v2345
        %v3071 = vunpack.c.l.b16 %v2346
        %v3072 = vunpack.c.h.b16 %v2346
        %v3073 = vunpack.c.l.b16 %v2347
        %v3074 = vunpack.c.h.b16 %v2347
        %v3075 = vunpack.c.l.b16 %v2348
        %v3076 = vunpack.c.h.b16 %v2348
        %v3077 = vunpack.c.l.b16 %v2349
        %v3078 = vunpack.c.h.b16 %v2349
        %v3079 = vunpack.c.l.b16 %v2350
        %v3080 = vunpack.c.h.b16 %v2350
        %v3081 = vunpack.c.l.b16 %v2351
        %v3082 = vunpack.c.h.b16 %v2351
        %v3083 = vunpack.c.l.b16 %v2352
        %v3084 = vunpack.c.h.b16 %v2352
        %v3085 = vunpack.c.l.b16 %v2353
        %v3086 = vunpack.c.h.b16 %v2353
        %v3087 = vunpack.c.l.b16 %v2354
        %v3088 = vunpack.c.h.b16 %v2354
        %v3089 = vunpack.c.l.b16 %v2355
        %v3090 = vunpack.c.h.b16 %v2355
        %v3091 = vunpack.c.l.b16 %v2356
        %v3092 = vunpack.c.h.b16 %v2356
        %v3093 = vunpack.c.l.b16 %v2357
        %v3094 = vunpack.c.h.b16 %v2357
        %v3095 = vunpack.c.l.b16 %v2358
        %v3096 = vunpack.c.h.b16 %v2358
        %v3097 = vunpack.c.l.b16 %v2359
        %v3098 = vunpack.c.h.b16 %v2359
        %v3099 = vunpack.c.l.b16 %v2360
        %v3100 = vunpack.c.h.b16 %v2360
        %v3101 = vunpack.c.l.b16 %v2361
        %v3102 = vunpack.c.h.b16 %v2361
        %v3103 = vunpack.c.l.b16 %v2362
        %v3104 = vunpack.c.h.b16 %v2362
        %v3105 = vunpack.c.l.b16 %v2363
        %v3106 = vunpack.c.h.b16 %v2363
        %v3107 = vunpack.c.l.b16 %v2364
        %v3108 = vunpack.c.h.b16 %v2364
        %v3109 = vunpack.c.l.b16 %v2365
        %v3110 = vunpack.c.h.b16 %v2365
        %v3111 = vunpack.c.l.b16 %v2366
        %v3112 = vunpack.c.h.b16 %v2366
        %v3113 = vunpack.c.l.b16 %v2367
        %v3114 = vunpack.c.h.b16 %v2367
        %v3115 = vunpack.c.l.b16 %v2368
        %v3116 = vunpack.c.h.b16 %v2368
        %v3117 = vunpack.c.l.b16 %v2369
        %v3118 = vunpack.c.h.b16 %v2369
        %v3119 = vunpack.c.l.b16 %v2370
        %v3120 = vunpack.c.h.b16 %v2370
        %v3121 = vunpack.c.l.b16 %v2371
        %v3122 = vunpack.c.h.b16 %v2371
        %v3123 = vunpack.c.l.b16 %v2372
        %v3124 = vunpack.c.h.b16 %v2372
        %v3125 = vunpack.c.l.b16 %v2373
        %v3126 = vunpack.c.h.b16 %v2373
        %v3127 = vunpack.c.l.b16 %v2374
        %v3128 = vunpack.c.h.b16 %v2374
        %v3129 = vunpack.c.l.b16 %v2375
        %v3130 = vunpack.c.h.b16 %v2375
        %v3131 = vunpack.c.l.b16 %v2376
        %v3132 = vunpack.c.h.b16 %v2376
        %v3133 = vunpack.c.l.b16 %v2377
        %v3134 = vunpack.c.h.b16 %v2377
        %v3135 = vunpack.c.l.b16 %v2378
        %v3136 = vunpack.c.h.b16 %v2378
        %v3137 = vunpack.c.l.b16 %v2379
        %v3138 = vunpack.c.h.b16 %v2379
        %v3139 = vunpack.c.l.b16 %v2380
        %v3140 = vunpack.c.h.b16 %v2380
        %v3141 = vunpack.c.l.b16 %v2381
        %v3142 = vunpack.c.h.b16 %v2381
        %v3143 = vunpack.c.l.b16 %v2382
        %v3144 = vunpack.c.h.b16 %v2382
        %v3145 = vunpack.c.l.b16 %v2383
        %v3146 = vunpack.c.h.b16 %v2383
        %v3147 = vunpack.c.l.b16 %v2384
        %v3148 = vunpack.c.h.b16 %v2384
        %v3149 = vunpack.c.l.b16 %v2385
        %v3150 = vunpack.c.h.b16 %v2385
        %v3151 = vunpack.c.l.b16 %v2386
        %v3152 = vunpack.c.h.b16 %v2386
        %v3153 = vunpack.c.l.b16 %v2387
        %v3154 = vunpack.c.h.b16 %v2387
        %v3155 = vunpack.c.l.b16 %v2388
        %v3156 = vunpack.c.h.b16 %v2388
        %v3157 = vunpack.c.l.b16 %v2389
        %v3158 = vunpack.c.h.b16 %v2389
        %v3159 = vunpack.c.l.b16 %v2390
        %v3160 = vunpack.c.h.b16 %v2390
        %v3161 = vunpack.c.l.b16 %v2391
        %v3162 = vunpack.c.h.b16 %v2391
        %v3163 = vunpack.c.l.b16 %v2392
        %v3164 = vunpack.c.h.b16 %v2392
        %v3165 = vunpack.c.l.b16 %v2393
        %v3166 = vunpack.c.h.b16 %v2393
        %v3167 = vunpack.c.l.b16 %v2394
        %v3168 = vunpack.c.h.b16 %v2394
        %v3169 = vunpack.c.l.b16 %v2395
        %v3170 = vunpack.c.h.b16 %v2395
        %v3171 = vunpack.c.l.b16 %v2396
        %v3172 = vunpack.c.h.b16 %v2396
        %v3173 = vunpack.c.l.b16 %v2397
        %v3174 = vunpack.c.h.b16 %v2397
        %v3175 = vunpack.c.l.b16 %v2398
        %v3176 = vunpack.c.h.b16 %v2398
        %v3177 = vunpack.c.l.b16 %v2399
        %v3178 = vunpack.c.h.b16 %v2399
        %v3179 = vunpack.c.l.b16 %v2400
        %v3180 = vunpack.c.h.b16 %v2400
        %v3181 = vunpack.c.l.b16 %v2401
        %v3182 = vunpack.c.h.b16 %v2401
        %v3183 = vunpack.c.l.b16 %v2402
        %v3184 = vunpack.c.h.b16 %v2402
        %v3185 = vunpack.c.l.b16 %v2403
        %v3186 = vunpack.c.h.b16 %v2403
        %v3187 = vunpack.c.l.b16 %v2404
        %v3188 = vunpack.c.h.b16 %v2404
        %v3189 = vunpack.c.l.b16 %v2405
        %v3190 = vunpack.c.h.b16 %v2405
        %v3191 = vunpack.c.l.b16 %v2406
        %v3192 = vunpack.c.h.b16 %v2406
        %v3193 = vunpack.c.l.b16 %v2407
        %v3194 = vunpack.c.h.b16 %v2407
        %v3195 = vunpack.c.l.b16 %v2408
        %v3196 = vunpack.c.h.b16 %v2408
        %v3197 = vunpack.c.l.b16 %v2409
        %v3198 = vunpack.c.h.b16 %v2409
        %v3199 = vunpack.c.l.b16 %v2410
        %v3200 = vunpack.c.h.b16 %v2410
        %v3201 = vunpack.c.l.b16 %v2411
        %v3202 = vunpack.c.h.b16 %v2411
        %v3203 = vunpack.c.l.b16 %v2412
        %v3204 = vunpack.c.h.b16 %v2412
        %v3205 = vunpack.c.l.b16 %v2413
        %v3206 = vunpack.c.h.b16 %v2413
        %v3207 = vunpack.c.l.b16 %v2414
        %v3208 = vunpack.c.h.b16 %v2414
        %v3209 = vunpack.c.l.b16 %v2415
        %v3210 = vunpack.c.h.b16 %v2415
        %v3211 = vunpack.c.l.b16 %v2416
        %v3212 = vunpack.c.h.b16 %v2416
        %v3213 = vunpack.c.l.b16 %v2417
        %v3214 = vunpack.c.h.b16 %v2417
        %v3215 = vunpack.c.l.b16 %v2418
        %v3216 = vunpack.c.h.b16 %v2418
        %v3217 = vunpack.c.l.b16 %v2419
        %v3218 = vunpack.c.h.b16 %v2419
        %v3219 = vunpack.c.l.b16 %v2420
        %v3220 = vunpack.c.h.b16 %v2420
        %v3221 = vunpack.c.l.b16 %v2421
        %v3222 = vunpack.c.h.b16 %v2421
        %v3223 = vunpack.c.l.b16 %v2422
        %v3224 = vunpack.c.h.b16 %v2422
        %v3225 = vunpack.c.l.b16 %v2423
        %v3226 = vunpack.c.h.b16 %v2423
        %v3227 = vunpack.c.l.b16 %v2424
        %v3228 = vunpack.c.h.b16 %v2424
        %v3229 = vunpack.c.l.b16 %v2425
        %v3230 = vunpack.c.h.b16 %v2425
        %v3231 = vunpack.c.l.b16 %v2426
        %v3232 = vunpack.c.h.b16 %v2426
        %v3233 = vunpack.c.l.b16 %v2427
        %v3234 = vunpack.c.h.b16 %v2427
        %v3235 = vunpack.c.l.b16 %v2428
        %v3236 = vunpack.c.h.b16 %v2428
        %v3237 = vunpack.c.l.b16 %v2429
        %v3238 = vunpack.c.h.b16 %v2429
        %v3239 = vunpack.c.l.b16 %v2430
        %v3240 = vunpack.c.h.b16 %v2430
        %v3241 = vunpack.c.l.b16 %v2431
        %v3242 = vunpack.c.h.b16 %v2431
        %v3243 = vunpack.c.l.b16 %v2432
        %v3244 = vunpack.c.h.b16 %v2432
        %v3245 = vunpack.c.l.b16 %v2433
        %v3246 = vunpack.c.h.b16 %v2433
        %v3247 = vunpack.c.l.b16 %v2434
        %v3248 = vunpack.c.h.b16 %v2434
        %v3249 = vunpack.c.l.b16 %v2435
        %v3250 = vunpack.c.h.b16 %v2435
        %v3251 = vunpack.c.l.b16 %v2436
        %v3252 = vunpack.c.h.b16 %v2436
        %v3253 = vunpack.c.l.b16 %v2437
        %v3254 = vunpack.c.h.b16 %v2437
        %v3255 = vunpack.c.l.b16 %v2438
        %v3256 = vunpack.c.h.b16 %v2438
        %v3257 = vunpack.c.l.b16 %v2439
        %v3258 = vunpack.c.h.b16 %v2439
        %v3259 = vunpack.c.l.b16 %v2440
        %v3260 = vunpack.c.h.b16 %v2440
        %v3261 = vunpack.c.l.b16 %v2441
        %v3262 = vunpack.c.h.b16 %v2441
        %v3263 = vunpack.c.l.b16 %v2442
        %v3264 = vunpack.c.h.b16 %v2442
        %v3265 = vunpack.c.l.b16 %v2443
        %v3266 = vunpack.c.h.b16 %v2443
        %v3267 = vunpack.c.l.b16 %v2444
        %v3268 = vunpack.c.h.b16 %v2444
        %v3269 = vunpack.c.l.b16 %v2445
        %v3270 = vunpack.c.h.b16 %v2445
        %v3271 = vunpack.c.l.b16 %v2446
        %v3272 = vunpack.c.h.b16 %v2446
        %v3273 = vunpack.c.l.b16 %v2447
        %v3274 = vunpack.c.h.b16 %v2447
        %v3275 = vunpack.c.l.b16 %v2448
        %v3276 = vunpack.c.h.b16 %v2448
        %v3277 = vunpack.c.l.b16 %v2449
        %v3278 = vunpack.c.h.b16 %v2449
        %v3279 = vunpack.c.l.b16 %v2450
        %v3280 = vunpack.c.h.b16 %v2450
        %v3281 = vunpack.c.l.b16 %v2451
        %v3282 = vunpack.c.h.b16 %v2451
        %v3283 = vunpack.c.l.b16 %v2452
        %v3284 = vunpack.c.h.b16 %v2452
        %v3285 = vunpack.c.l.b16 %v2453
        %v3286 = vunpack.c.h.b16 %v2453
        %v3287 = vunpack.c.l.b16 %v2454
        %v3288 = vunpack.c.h.b16 %v2454
        %v3289 = vunpack.c.l.b16 %v2455
        %v3290 = vunpack.c.h.b16 %v2455
        %v3291 = vunpack.c.l.b16 %v2456
        %v3292 = vunpack.c.h.b16 %v2456
        %v3293 = vunpack.c.l.b16 %v2457
        %v3294 = vunpack.c.h.b16 %v2457
        %v3295 = vunpack.c.l.b16 %v2458
        %v3296 = vunpack.c.h.b16 %v2458
        %v3297 = vunpack.c.l.b16 %v2459
        %v3298 = vunpack.c.h.b16 %v2459
        %v3299 = vunpack.c.l.b16 %v2460
        %v3300 = vunpack.c.h.b16 %v2460
        %v3301 = vunpack.c.l.b16 %v2461
        %v3302 = vunpack.c.h.b16 %v2461
        %v3303 = vunpack.c.l.b16 %v2462
        %v3304 = vunpack.c.h.b16 %v2462
        %v3305 = vunpack.c.l.b16 %v2463
        %v3306 = vunpack.c.h.b16 %v2463
        %v3307 = vunpack.c.l.b16 %v2464
        %v3308 = vunpack.c.h.b16 %v2464
        %v3309 = vunpack.c.l.b16 %v2465
        %v3310 = vunpack.c.h.b16 %v2465
        %v3311 = vunpack.c.l.b16 %v2466
        %v3312 = vunpack.c.h.b16 %v2466
        %v3313 = vunpack.c.l.b16 %v2467
        %v3314 = vunpack.c.h.b16 %v2467
        %v3315 = vunpack.c.l.b16 %v2468
        %v3316 = vunpack.c.h.b16 %v2468
        %v3317 = vunpack.c.l.b16 %v2469
        %v3318 = vunpack.c.h.b16 %v2469
        %v3319 = vunpack.c.l.b16 %v2470
        %v3320 = vunpack.c.h.b16 %v2470
        %v3321 = vunpack.c.l.b16 %v2471
        %v3322 = vunpack.c.h.b16 %v2471
        %v3323 = vunpack.c.l.b16 %v2472
        %v3324 = vunpack.c.h.b16 %v2472
        %v3325 = vunpack.c.l.b16 %v2473
        %v3326 = vunpack.c.h.b16 %v2473
        %v3327 = vunpack.c.l.b16 %v2474
        %v3328 = vunpack.c.h.b16 %v2474
        %v3329 = vunpack.c.l.b16 %v2475
        %v3330 = vunpack.c.h.b16 %v2475
        %v3331 = vunpack.c.l.b16 %v2476
        %v3332 = vunpack.c.h.b16 %v2476
        %v3333 = vunpack.c.l.b16 %v2477
        %v3334 = vunpack.c.h.b16 %v2477
        %v3335 = vunpack.c.l.b16 %v2478
        %v3336 = vunpack.c.h.b16 %v2478
        %v3337 = vunpack.c.l.b16 %v2479
        %v3338 = vunpack.c.h.b16 %v2479
        %v3339 = vunpack.c.l.b16 %v2480
        %v3340 = vunpack.c.h.b16 %v2480
        %v3341 = vunpack.c.l.b16 %v2481
        %v3342 = vunpack.c.h.b16 %v2481
        %v3343 = vunpack.c.l.b16 %v2482
        %v3344 = vunpack.c.h.b16 %v2482
        %v3345 = vunpack.c.l.b16 %v2483
        %v3346 = vunpack.c.h.b16 %v2483
        %v3347 = vunpack.c.l.b16 %v2484
        %v3348 = vunpack.c.h.b16 %v2484
        %v3349 = vunpack.c.l.b16 %v2485
        %v3350 = vunpack.c.h.b16 %v2485
        %v3351 = vunpack.c.l.b16 %v2486
        %v3352 = vunpack.c.h.b16 %v2486
        %v3353 = vunpack.c.l.b16 %v2487
        %v3354 = vunpack.c.h.b16 %v2487
        %v3355 = vunpack.c.l.b16 %v2488
        %v3356 = vunpack.c.h.b16 %v2488
        %v3357 = vunpack.c.l.b16 %v2489
        %v3358 = vunpack.c.h.b16 %v2489
        %v3359 = vunpack.c.l.b16 %v2490
        %v3360 = vunpack.c.h.b16 %v2490
        %v3361 = vunpack.c.l.b16 %v2491
        %v3362 = vunpack.c.h.b16 %v2491
        %v3363 = vunpack.c.l.b16 %v2492
        %v3364 = vunpack.c.h.b16 %v2492
        %v3365 = vunpack.c.l.b16 %v2493
        %v3366 = vunpack.c.h.b16 %v2493
        %v3367 = vunpack.c.l.b16 %v2494
        %v3368 = vunpack.c.h.b16 %v2494
        %v3369 = vunpack.c.l.b16 %v2495
        %v3370 = vunpack.c.h.b16 %v2495
        %v3371 = vunpack.c.l.b16 %v2496
        %v3372 = vunpack.c.h.b16 %v2496
        %v3373 = vunpack.c.l.b16 %v2497
        %v3374 = vunpack.c.h.b16 %v2497
        %v3375 = vunpack.c.l.b16 %v2498
        %v3376 = vunpack.c.h.b16 %v2498
        %v3377 = vunpack.c.l.b16 %v2499
        %v3378 = vunpack.c.h.b16 %v2499
        %v3379 = vunpack.c.l.b16 %v2500
        %v3380 = vunpack.c.h.b16 %v2500
        %v3381 = vunpack.c.l.b16 %v2501
        %v3382 = vunpack.c.h.b16 %v2501
        %v3383 = vunpack.c.l.b16 %v2502
        %v3384 = vunpack.c.h.b16 %v2502
        %v3385 = vunpack.c.l.b16 %v2503
        %v3386 = vunpack.c.h.b16 %v2503
        %v3387 = vunpack.c.l.b16 %v2504
        %v3388 = vunpack.c.h.b16 %v2504
        %v3389 = vunpack.c.l.b16 %v2505
        %v3390 = vunpack.c.h.b16 %v2505
        %v3391 = vunpack.c.l.b16 %v2506
        %v3392 = vunpack.c.h.b16 %v2506
        %v3393 = vunpack.c.l.b16 %v2507
        %v3394 = vunpack.c.h.b16 %v2507
        %v3395 = vunpack.c.l.b16 %v2508
        %v3396 = vunpack.c.h.b16 %v2508
        %v3397 = vunpack.c.l.b16 %v2509
        %v3398 = vunpack.c.h.b16 %v2509
        %v3399 = vunpack.c.l.b16 %v2510
        %v3400 = vunpack.c.h.b16 %v2510
        %v3401 = vunpack.c.l.b16 %v2511
        %v3402 = vunpack.c.h.b16 %v2511
        %v3403 = vunpack.c.l.b16 %v2512
        %v3404 = vunpack.c.h.b16 %v2512
        %v3405 = vunpack.c.l.b16 %v2513
        %v3406 = vunpack.c.h.b16 %v2513
        %v3407 = vunpack.c.l.b16 %v2514
        %v3408 = vunpack.c.h.b16 %v2514
        %v3409 = vunpack.c.l.b16 %v2515
        %v3410 = vunpack.c.h.b16 %v2515
        %v3411 = vunpack.c.l.b16 %v2516
        %v3412 = vunpack.c.h.b16 %v2516
        %v3413 = vunpack.c.l.b16 %v2517
        %v3414 = vunpack.c.h.b16 %v2517
        %v3415 = vunpack.c.l.b16 %v2518
        %v3416 = vunpack.c.h.b16 %v2518
        %v3417 = vunpack.c.l.b16 %v2519
        %v3418 = vunpack.c.h.b16 %v2519
        %v3419 = vunpack.c.l.b16 %v2520
        %v3420 = vunpack.c.h.b16 %v2520
        %v3421 = vunpack.c.l.b16 %v2521
        %v3422 = vunpack.c.h.b16 %v2521
        %v3423 = vunpack.c.l.b16 %v2522
        %v3424 = vunpack.c.h.b16 %v2522
        %v3425 = vunpack.c.l.b16 %v2523
        %v3426 = vunpack.c.h.b16 %v2523
        %v3427 = vunpack.c.l.b16 %v2524
        %v3428 = vunpack.c.h.b16 %v2524
        %v3429 = vunpack.c.l.b16 %v2525
        %v3430 = vunpack.c.h.b16 %v2525
        %v3431 = vunpack.c.l.b16 %v2526
        %v3432 = vunpack.c.h.b16 %v2526
        %v3433 = vunpack.c.l.b16 %v2527
        %v3434 = vunpack.c.h.b16 %v2527
        %v3435 = vunpack.c.l.b16 %v2528
        %v3436 = vunpack.c.h.b16 %v2528
        %v3437 = vunpack.c.l.b16 %v2529
        %v3438 = vunpack.c.h.b16 %v2529
        %v3439 = vunpack.c.l.b16 %v2530
        %v3440 = vunpack.c.h.b16 %v2530
        %v3441 = vunpack.c.l.b16 %v2531
        %v3442 = vunpack.c.h.b16 %v2531
        %v3443 = vunpack.c.l.b16 %v2532
        %v3444 = vunpack.c.h.b16 %v2532
        %v3445 = vunpack.c.l.b16 %v2533
        %v3446 = vunpack.c.h.b16 %v2533
        %v3447 = vunpack.c.l.b16 %v2534
        %v3448 = vunpack.c.h.b16 %v2534
        %v3449 = vunpack.c.l.b16 %v2535
        %v3450 = vunpack.c.h.b16 %v2535
        %v3451 = vunpack.c.l.b16 %v2536
        %v3452 = vunpack.c.h.b16 %v2536
        %v3453 = vunpack.c.l.b16 %v2537
        %v3454 = vunpack.c.h.b16 %v2537
        %v3455 = vunpack.c.l.b16 %v2538
        %v3456 = vunpack.c.h.b16 %v2538
        %v3457 = vunpack.c.l.b16 %v2539
        %v3458 = vunpack.c.h.b16 %v2539
        %v3459 = vunpack.c.l.b16 %v2540
        %v3460 = vunpack.c.h.b16 %v2540
        %v3461 = vunpack.c.l.b16 %v2541
        %v3462 = vunpack.c.h.b16 %v2541
        %v3463 = vunpack.c.l.b16 %v2542
        %v3464 = vunpack.c.h.b16 %v2542
        %v3465 = vunpack.c.l.b16 %v2543
        %v3466 = vunpack.c.h.b16 %v2543
        %v3467 = vunpack.c.l.b16 %v2544
        %v3468 = vunpack.c.h.b16 %v2544
        %v3469 = vunpack.c.l.b16 %v2545
        %v3470 = vunpack.c.h.b16 %v2545
        %v3471 = vunpack.c.l.b16 %v2546
        %v3472 = vunpack.c.h.b16 %v2546
        %v3473 = vunpack.c.l.b16 %v2547
        %v3474 = vunpack.c.h.b16 %v2547
        %v3475 = vunpack.c.l.b16 %v2548
        %v3476 = vunpack.c.h.b16 %v2548
        %v3477 = vunpack.c.l.b16 %v2549
        %v3478 = vunpack.c.h.b16 %v2549
        %v3479 = vunpack.c.l.b16 %v2550
        %v3480 = vunpack.c.h.b16 %v2550
        %v3481 = vunpack.c.l.b16 %v2551
        %v3482 = vunpack.c.h.b16 %v2551
        %v3483 = vunpack.c.l.b16 %v2552
        %v3484 = vunpack.c.h.b16 %v2552
        %v3485 = vunpack.c.l.b16 %v2553
        %v3486 = vunpack.c.h.b16 %v2553
        %v3487 = vunpack.c.l.b16 %v2554
        %v3488 = vunpack.c.h.b16 %v2554
        %v3489 = vunpack.c.l.b16 %v2555
        %v3490 = vunpack.c.h.b16 %v2555
        %v3491 = vunpack.c.l.b16 %v2556
        %v3492 = vunpack.c.h.b16 %v2556
        %v3493 = vpack.c.b16 %v3013, %v2981
        %v3494 = vpack.c.b16 %v3014, %v2982
        %v3495 = vpack.c.b16 %v3015, %v2983
        %v3496 = vpack.c.b16 %v3016, %v2984
        %v3497 = vpack.c.b16 %v3017, %v2985
        %v3498 = vpack.c.b16 %v3018, %v2986
        %v3499 = vpack.c.b16 %v3019, %v2987
        %v3500 = vpack.c.b16 %v3020, %v2988
        %v3501 = vpack.c.b16 %v3021, %v2989
        %v3502 = vpack.c.b16 %v3022, %v2990
        %v3503 = vpack.c.b16 %v3023, %v2991
        %v3504 = vpack.c.b16 %v3024, %v2992
        %v3505 = vpack.c.b16 %v3025, %v2993
        %v3506 = vpack.c.b16 %v3026, %v2994
        %v3507 = vpack.c.b16 %v3027, %v2995
        %v3508 = vpack.c.b16 %v3028, %v2996
        %v3509 = vpack.c.b16 %v3029, %v2997
        %v3510 = vpack.c.b16 %v3030, %v2998
        %v3511 = vpack.c.b16 %v3031, %v2999
        %v3512 = vpack.c.b16 %v3032, %v3000
        %v3513 = vpack.c.b16 %v3033, %v3001
        %v3514 = vpack.c.b16 %v3034, %v3002
        %v3515 = vpack.c.b16 %v3035, %v3003
        %v3516 = vpack.c.b16 %v3036, %v3004
        %v3517 = vpack.c.b16 %v3037, %v3005
        %v3518 = vpack.c.b16 %v3038, %v3006
        %v3519 = vpack.c.b16 %v3039, %v3007
        %v3520 = vpack.c.b16 %v3040, %v3008
        %v3521 = vpack.c.b16 %v3041, %v3009
        %v3522 = vpack.c.b16 %v3042, %v3010
        %v3523 = vpack.c.b16 %v3043, %v3011
        %v3524 = vpack.c.b16 %v3044, %v3012
        %v3525 = vpack.c.b16 %v3077, %v3045
        %v3526 = vpack.c.b16 %v3078, %v3046
        %v3527 = vpack.c.b16 %v3079, %v3047
        %v3528 = vpack.c.b16 %v3080, %v3048
        %v3529 = vpack.c.b16 %v3081, %v3049
        %v3530 = vpack.c.b16 %v3082, %v3050
        %v3531 = vpack.c.b16 %v3083, %v3051
        %v3532 = vpack.c.b16 %v3084, %v3052
        %v3533 = vpack.c.b16 %v3085, %v3053
        %v3534 = vpack.c.b16 %v3086, %v3054
        %v3535 = vpack.c.b16 %v3087, %v3055
        %v3536 = vpack.c.b16 %v3088, %v3056
        %v3537 = vpack.c.b16 %v3089, %v3057
        %v3538 = vpack.c.b16 %v3090, %v3058
        %v3539 = vpack.c.b16 %v3091, %v3059
        %v3540 = vpack.c.b16 %v3092, %v3060
        %v3541 = vpack.c.b16 %v3093, %v3061
        %v3542 = vpack.c.b16 %v3094, %v3062
        %v3543 = vpack.c.b16 %v3095, %v3063
        %v3544 = vpack.c.b16 %v3096, %v3064
        %v3545 = vpack.c.b16 %v3097, %v3065
        %v3546 = vpack.c.b16 %v3098, %v3066
        %v3547 = vpack.c.b16 %v3099, %v3067
        %v3548 = vpack.c.b16 %v3100, %v3068
        %v3549 = vpack.c.b16 %v3101, %v3069
        %v3550 = vpack.c.b16 %v3102, %v3070
        %v3551 = vpack.c.b16 %v3103, %v3071
        %v3552 = vpack.c.b16 %v3104, %v3072
        %v3553 = vpack.c.b16 %v3105, %v3073
        %v3554 = vpack.c.b16 %v3106, %v3074
        %v3555 = vpack.c.b16 %v3107, %v3075
        %v3556 = vpack.c.b16 %v3108, %v3076
        %v3557 = vpack.c.b16 %v3141, %v3109
        %v3558 = vpack.c.b16 %v3142, %v3110
        %v3559 = vpack.c.b16 %v3143, %v3111
        %v3560 = vpack.c.b16 %v3144, %v3112
        %v3561 = vpack.c.b16 %v3145, %v3113
        %v3562 = vpack.c.b16 %v3146, %v3114
        %v3563 = vpack.c.b16 %v3147, %v3115
        %v3564 = vpack.c.b16 %v3148, %v3116
        %v3565 = vpack.c.b16 %v3149, %v3117
        %v3566 = vpack.c.b16 %v3150, %v3118
        %v3567 = vpack.c.b16 %v3151, %v3119
        %v3568 = vpack.c.b16 %v3152, %v3120
        %v3569 = vpack.c.b16 %v3153, %v3121
        %v3570 = vpack.c.b16 %v3154, %v3122
        %v3571 = vpack.c.b16 %v3155, %v3123
        %v3572 = vpack.c.b16 %v3156, %v3124
        %v3573 = vpack.c.b16 %v3157, %v3125
        %v3574 = vpack.c.b16 %v3158, %v3126
        %v3575 = vpack.c.b16 %v3159, %v3127
        %v3576 = vpack.c.b16 %v3160, %v3128
        %v3577 = vpack.c.b16 %v3161, %v3129
        %v3578 = vpack.c.b16 %v3162, %v3130
        %v3579 = vpack.c.b16 %v3163, %v3131
        %v3580 = vpack.c.b16 %v3164, %v3132
        %v3581 = vpack.c.b16 %v3165, %v3133
        %v3582 = vpack.c.b16 %v3166, %v3134
        %v3583 = vpack.c.b16 %v3167, %v3135
        %v3584 = vpack.c.b16 %v3168, %v3136
        %v3585 = vpack.c.b16 %v3169, %v3137
        %v3586 = vpack.c.b16 %v3170, %v3138
        %v3587 = vpack.c.b16 %v3171, %v3139
        %v3588 = vpack.c.b16 %v3172, %v3140
        %v3589 = vpack.c.b16 %v3205, %v3173
        %v3590 = vpack.c.b16 %v3206, %v3174
        %v3591 = vpack.c.b16 %v3207, %v3175
        %v3592 = vpack.c.b16 %v3208, %v3176
        %v3593 = vpack.c.b16 %v3209, %v3177
        %v3594 = vpack.c.b16 %v3210, %v3178
        %v3595 = vpack.c.b16 %v3211, %v3179
        %v3596 = vpack.c.b16 %v3212, %v3180
        %v3597 = vpack.c.b16 %v3213, %v3181
        %v3598 = vpack.c.b16 %v3214, %v3182
        %v3599 = vpack.c.b16 %v3215, %v3183
        %v3600 = vpack.c.b16 %v3216, %v3184
        %v3601 = vpack.c.b16 %v3217, %v3185
        %v3602 = vpack.c.b16 %v3218, %v3186
        %v3603 = vpack.c.b16 %v3219, %v3187
        %v3604 = vpack.c.b16 %v3220, %v3188
        %v3605 = vpack.c.b16 %v3221, %v3189
        %v3606 = vpack.c.b16 %v3222, %v3190
        %v3607 = vpack.c.b16 %v3223, %v3191
        %v3608 = vpack.c.b16 %v3224, %v3192
        %v3609 = vpack.c.b16 %v3225, %v3193
        %v3610 = vpack.c.b16 %v3226, %v3194
        %v3611 = vpack.c.b16 %v3227, %v3195
        %v3612 = vpack.c.b16 %v3228, %v3196
        %v3613 = vpack.c.b16 %v3229, %v3197
        %v3614 = vpack.c.b16 %v3230, %v3198
        %v3615 = vpack.c.b16 %v3231, %v3199
        %v3616 = vpack.c.b16 %v3232, %v3200
        %v3617 = vpack.c.b16 %v3233, %v3201
        %v3618 = vpack.c.b16 %v3234, %v3202
        %v3619 = vpack.c.b16 %v3235, %v3203
        %v3620 = vpack.c.b16 %v3236, %v3204
        %v3621 = vpack.c.b16 %v3269, %v3237
        %v3622 = vpack.c.b16 %v3270, %v3238
        %v3623 = vpack.c.b16 %v3271, %v3239
        %v3624 = vpack.c.b16 %v3272, %v3240
        %v3625 = vpack.c.b16 %v3273, %v3241
        %v3626 = vpack.c.b16 %v3274, %v3242
        %v3627 = vpack.c.b16 %v3275, %v3243
        %v3628 = vpack.c.b16 %v3276, %v3244
        %v3629 = vpack.c.b16 %v3277, %v3245
        %v3630 = vpack.c.b16 %v3278, %v3246
        %v3631 = vpack.c.b16 %v3279, %v3247
        %v3632 = vpack.c.b16 %v3280, %v3248
        %v3633 = vpack.c.b16 %v3281, %v3249
        %v3634 = vpack.c.b16 %v3282, %v3250
        %v3635 = vpack.c.b16 %v3283, %v3251
        %v3636 = vpack.c.b16 %v3284, %v3252
        %v3637 = vpack.c.b16 %v3285, %v3253
        %v3638 = vpack.c.b16 %v3286, %v3254
        %v3639 = vpack.c.b16 %v3287, %v3255
        %v3640 = vpack.c.b16 %v3288, %v3256
        %v3641 = vpack.c.b16 %v3289, %v3257
        %v3642 = vpack.c.b16 %v3290, %v3258
        %v3643 = vpack.c.b16 %v3291, %v3259
        %v3644 = vpack.c.b16 %v3292, %v3260
        %v3645 = vpack.c.b16 %v3293, %v3261
        %v3646 = vpack.c.b16 %v3294, %v3262
        %v3647 = vpack.c.b16 %v3295, %v3263
        %v3648 = vpack.c.b16 %v3296, %v3264
        %v3649 = vpack.c.b16 %v3297, %v3265
        %v3650 = vpack.c.b16 %v3298, %v3266
        %v3651 = vpack.c.b16 %v3299, %v3267
        %v3652 = vpack.c.b16 %v3300, %v3268
        %v3653 = vpack.c.b16 %v3333, %v3301
        %v3654 = vpack.c.b16 %v3334, %v3302
        %v3655 = vpack.c.b16 %v3335, %v3303
        %v3656 = vpack.c.b16 %v3336, %v3304
        %v3657 = vpack.c.b16 %v3337, %v3305
        %v3658 = vpack.c.b16 %v3338, %v3306
        %v3659 = vpack.c.b16 %v3339, %v3307
        %v3660 = vpack.c.b16 %v3340, %v3308
        %v3661 = vpack.c.b16 %v3341, %v3309
        %v3662 = vpack.c.b16 %v3342, %v3310
        %v3663 = vpack.c.b16 %v3343, %v3311
        %v3664 = vpack.c.b16 %v3344, %v3312
        %v3665 = vpack.c.b16 %v3345, %v3313
        %v3666 = vpack.c.b16 %v3346, %v3314
        %v3667 = vpack.c.b16 %v3347, %v3315
        %v3668 = vpack.c.b16 %v3348, %v3316
        %v3669 = vpack.c.b16 %v3349, %v3317
        %v3670 = vpack.c.b16 %v3350, %v3318
        %v3671 = vpack.c.b16 %v3351, %v3319
        %v3672 = vpack.c.b16 %v3352, %v3320
        %v3673 = vpack.c.b16 %v3353, %v3321
        %v3674 = vpack.c.b16 %v3354, %v3322
        %v3675 = vpack.c.b16 %v3355, %v3323
        %v3676 = vpack.c.b16 %v3356, %v3324
        %v3677 = vpack.c.b16 %v3357, %v3325
        %v3678 = vpack.c.b16 %v3358, %v3326
        %v3679 = vpack.c.b16 %v3359, %v3327
        %v3680 = vpack.c.b16 %v3360, %v3328
        %v3681 = vpack.c.b16 %v3361, %v3329
        %v3682 = vpack.c.b16 %v3362, %v3330
        %v3683 = vpack.c.b16 %v3363, %v3331
        %v3684 = vpack.c.b16 %v3364, %v3332
        %v3685 = vpack.c.b16 %v3397, %v3365
        %v3686 = vpack.c.b16 %v3398, %v3366
        %v3687 = vpack.c.b16 %v3399, %v3367
        %v3688 = vpack.c.b16 %v3400, %v3368
        %v3689 = vpack.c.b16 %v3401, %v3369
        %v3690 = vpack.c.b16 %v3402, %v3370
        %v3691 = vpack.c.b16 %v3403, %v3371
        %v3692 = vpack.c.b16 %v3404, %v3372
        %v3693 = vpack.c.b16 %v3405, %v3373
        %v3694 = vpack.c.b16 %v3406, %v3374
        %v3695 = vpack.c.b16 %v3407, %v3375
        %v3696 = vpack.c.b16 %v3408, %v3376
        %v3697 = vpack.c.b16 %v3409, %v3377
        %v3698 = vpack.c.b16 %v3410, %v3378
        %v3699 = vpack.c.b16 %v3411, %v3379
        %v3700 = vpack.c.b16 %v3412, %v3380
        %v3701 = vpack.c.b16 %v3413, %v3381
        %v3702 = vpack.c.b16 %v3414, %v3382
        %v3703 = vpack.c.b16 %v3415, %v3383
        %v3704 = vpack.c.b16 %v3416, %v3384
        %v3705 = vpack.c.b16 %v3417, %v3385
        %v3706 = vpack.c.b16 %v3418, %v3386
        %v3707 = vpack.c.b16 %v3419, %v3387
        %v3708 = vpack.c.b16 %v3420, %v3388
        %v3709 = vpack.c.b16 %v3421, %v3389
        %v3710 = vpack.c.b16 %v3422, %v3390
        %v3711 = vpack.c.b16 %v3423, %v3391
        %v3712 = vpack.c.b16 %v3424, %v3392
        %v3713 = vpack.c.b16 %v3425, %v3393
        %v3714 = vpack.c.b16 %v3426, %v3394
        %v3715 = vpack.c.b16 %v3427, %v3395
        %v3716 = vpack.c.b16 %v3428, %v3396
        %v3717 = vpack.c.b16 %v3461, %v3429
        %v3718 = vpack.c.b16 %v3462, %v3430
        %v3719 = vpack.c.b16 %v3463, %v3431
        %v3720 = vpack.c.b16 %v3464, %v3432
        %v3721 = vpack.c.b16 %v3465, %v3433
        %v3722 = vpack.c.b16 %v3466, %v3434
        %v3723 = vpack.c.b16 %v3467, %v3435
        %v3724 = vpack.c.b16 %v3468, %v3436
        %v3725 = vpack.c.b16 %v3469, %v3437
        %v3726 = vpack.c.b16 %v3470, %v3438
        %v3727 = vpack.c.b16 %v3471, %v3439
        %v3728 = vpack.c.b16 %v3472, %v3440
        %v3729 = vpack.c.b16 %v3473, %v3441
        %v3730 = vpack.c.b16 %v3474, %v3442
        %v3731 = vpack.c.b16 %v3475, %v3443
        %v3732 = vpack.c.b16 %v3476, %v3444
        %v3733 = vpack.c.b16 %v3477, %v3445
        %v3734 = vpack.c.b16 %v3478, %v3446
        %v3735 = vpack.c.b16 %v3479, %v3447
        %v3736 = vpack.c.b16 %v3480, %v3448
        %v3737 = vpack.c.b16 %v3481, %v3449
        %v3738 = vpack.c.b16 %v3482, %v3450
        %v3739 = vpack.c.b16 %v3483, %v3451
        %v3740 = vpack.c.b16 %v3484, %v3452
        %v3741 = vpack.c.b16 %v3485, %v3453
        %v3742 = vpack.c.b16 %v3486, %v3454
        %v3743 = vpack.c.b16 %v3487, %v3455
        %v3744 = vpack.c.b16 %v3488, %v3456
        %v3745 = vpack.c.b16 %v3489, %v3457
        %v3746 = vpack.c.b16 %v3490, %v3458
        %v3747 = vpack.c.b16 %v3491, %v3459
        %v3748 = vpack.c.b16 %v3492, %v3460
        %4005 = vmatprep.subr.bf16.mxu0 %v3718
        %4006 = vmatpush1.bf16.msra.mxu0 %v3717
        %4007 = vmatprep.subr.bf16.mxu0 %v3686
        %4008 = vmatpush1.bf16.msra.mxu0 %v3685
        %4009 = vmatprep.subr.bf16.mxu0 %v3654
        %4010 = vmatpush1.bf16.msra.mxu0 %v3653
        %4011 = vmatprep.subr.bf16.mxu0 %v3622
        %4012 = vmatpush1.bf16.msra.mxu0 %v3621
        %4013 = vmatprep.subr.bf16.mxu0 %v3590
        %4014 = vmatpush1.bf16.msra.mxu0 %v3589
        %4015 = vmatprep.subr.bf16.mxu0 %v3558
        %4016 = vmatpush1.bf16.msra.mxu0 %v3557
        %4017 = vmatprep.subr.bf16.mxu0 %v3526
        %4018 = vmatpush1.bf16.msra.mxu0 %v3525
        %4019 = vmatprep.subr.bf16.mxu0 %v3494
        %4020 = vmatpush1.bf16.msra.mxu0 %v3493
        %4021 = vmatprep.subr.bf16.mxu0 0
        %4022 = vmatpush2.bf16.msra.mxu0 0
        %4023 = vmatprep.subr.bf16.mxu0 0
        %4024 = vmatpush2.bf16.msra.mxu0 0
        %4025 = vmatprep.subr.bf16.mxu0 0
        %4026 = vmatpush2.bf16.msra.mxu0 0
        %4027 = vmatprep.subr.bf16.mxu0 0
        %4028 = vmatpush2.bf16.msra.mxu0 0
        %4029 = vmatprep.subr.bf16.mxu0 0
        %4030 = vmatpush2.bf16.msra.mxu0 0
        %4031 = vmatprep.subr.bf16.mxu0 0
        %4032 = vmatpush2.bf16.msra.mxu0 0
        %4033 = vmatprep.subr.bf16.mxu0 0
        %4034 = vmatpush2.bf16.msra.mxu0 0
        %4035 = vmatprep.subr.bf16.mxu0 0
        %4036 = vmatpush2.bf16.msra.mxu0 0
        %4037 = vmatprep.mubr.bf16.mxu0 0
        %4038 = vmatmul.mubr.bf16.gmra.mxu0 %v2300
        %v4039 = vpop.f32.mrf.mxu0
        %v4040 = vadd.f32 %v2568, %v4039
        %v4041 = vpop.f32.mrf.mxu0
        %v4042 = vadd.f32 %v2572, %v4041
        %v4043 = vpop.f32.mrf.mxu0
        %v4044 = vpop.f32.mrf.mxu0
        %4045 = vdwg.mxu0
        %4046 = vmatprep.subr.bf16.mxu0 %v3720
        %4047 = vmatpush1.bf16.msra.mxu0 %v3719
        %4048 = vmatprep.subr.bf16.mxu0 %v3688
        %4049 = vmatpush1.bf16.msra.mxu0 %v3687
        %4050 = vmatprep.subr.bf16.mxu0 %v3656
        %4051 = vmatpush1.bf16.msra.mxu0 %v3655
        %4052 = vmatprep.subr.bf16.mxu0 %v3624
        %4053 = vmatpush1.bf16.msra.mxu0 %v3623
        %4054 = vmatprep.subr.bf16.mxu0 %v3592
        %4055 = vmatpush1.bf16.msra.mxu0 %v3591
        %4056 = vmatprep.subr.bf16.mxu0 %v3560
        %4057 = vmatpush1.bf16.msra.mxu0 %v3559
        %4058 = vmatprep.subr.bf16.mxu0 %v3528
        %4059 = vmatpush1.bf16.msra.mxu0 %v3527
        %4060 = vmatprep.subr.bf16.mxu0 %v3496
        %4061 = vmatpush1.bf16.msra.mxu0 %v3495
        %4062 = vmatprep.subr.bf16.mxu0 0
        %4063 = vmatpush2.bf16.msra.mxu0 0
        %4064 = vmatprep.subr.bf16.mxu0 0
        %4065 = vmatpush2.bf16.msra.mxu0 0
        %4066 = vmatprep.subr.bf16.mxu0 0
        %4067 = vmatpush2.bf16.msra.mxu0 0
        %4068 = vmatprep.subr.bf16.mxu0 0
        %4069 = vmatpush2.bf16.msra.mxu0 0
        %4070 = vmatprep.subr.bf16.mxu0 0
        %4071 = vmatpush2.bf16.msra.mxu0 0
        %4072 = vmatprep.subr.bf16.mxu0 0
        %4073 = vmatpush2.bf16.msra.mxu0 0
        %4074 = vmatprep.subr.bf16.mxu0 0
        %4075 = vmatpush2.bf16.msra.mxu0 0
        %4076 = vmatprep.subr.bf16.mxu0 0
        %4077 = vmatpush2.bf16.msra.mxu0 0
        %4078 = vmatprep.mubr.bf16.mxu0 0
        %4079 = vmatmul.mubr.bf16.gmra.mxu0 %v2300
        %v4080 = vpop.f32.mrf.mxu0
        %v4081 = vadd.f32 %v2576, %v4080
        %v4082 = vpop.f32.mrf.mxu0
        %v4083 = vadd.f32 %v2580, %v4082
        %v4084 = vpop.f32.mrf.mxu0
        %v4085 = vpop.f32.mrf.mxu0
        %4086 = vdwg.mxu0
        %4087 = vmatprep.subr.bf16.mxu0 %v3722
        %4088 = vmatpush1.bf16.msra.mxu0 %v3721
        %4089 = vmatprep.subr.bf16.mxu0 %v3690
        %4090 = vmatpush1.bf16.msra.mxu0 %v3689
        %4091 = vmatprep.subr.bf16.mxu0 %v3658
        %4092 = vmatpush1.bf16.msra.mxu0 %v3657
        %4093 = vmatprep.subr.bf16.mxu0 %v3626
        %4094 = vmatpush1.bf16.msra.mxu0 %v3625
        %4095 = vmatprep.subr.bf16.mxu0 %v3594
        %4096 = vmatpush1.bf16.msra.mxu0 %v3593
        %4097 = vmatprep.subr.bf16.mxu0 %v3562
        %4098 = vmatpush1.bf16.msra.mxu0 %v3561
        %4099 = vmatprep.subr.bf16.mxu0 %v3530
        %4100 = vmatpush1.bf16.msra.mxu0 %v3529
        %4101 = vmatprep.subr.bf16.mxu0 %v3498
        %4102 = vmatpush1.bf16.msra.mxu0 %v3497
        %4103 = vmatprep.subr.bf16.mxu0 0
        %4104 = vmatpush2.bf16.msra.mxu0 0
        %4105 = vmatprep.subr.bf16.mxu0 0
        %4106 = vmatpush2.bf16.msra.mxu0 0
        %4107 = vmatprep.subr.bf16.mxu0 0
        %4108 = vmatpush2.bf16.msra.mxu0 0
        %4109 = vmatprep.subr.bf16.mxu0 0
        %4110 = vmatpush2.bf16.msra.mxu0 0
        %4111 = vmatprep.subr.bf16.mxu0 0
        %4112 = vmatpush2.bf16.msra.mxu0 0
        %4113 = vmatprep.subr.bf16.mxu0 0
        %4114 = vmatpush2.bf16.msra.mxu0 0
        %4115 = vmatprep.subr.bf16.mxu0 0
        %4116 = vmatpush2.bf16.msra.mxu0 0
        %4117 = vmatprep.subr.bf16.mxu0 0
        %4118 = vmatpush2.bf16.msra.mxu0 0
        %4119 = vmatprep.mubr.bf16.mxu0 0
        %4120 = vmatmul.mubr.bf16.gmra.mxu0 %v2300
        %v4121 = vpop.f32.mrf.mxu0
        %v4122 = vadd.f32 %v2584, %v4121
        %v4123 = vpop.f32.mrf.mxu0
        %v4124 = vadd.f32 %v2588, %v4123
        %v4125 = vpop.f32.mrf.mxu0
        %v4126 = vpop.f32.mrf.mxu0
        %4127 = vdwg.mxu0
        %4128 = vmatprep.subr.bf16.mxu0 %v3724
        %4129 = vmatpush1.bf16.msra.mxu0 %v3723
        %4130 = vmatprep.subr.bf16.mxu0 %v3692
        %4131 = vmatpush1.bf16.msra.mxu0 %v3691
        %4132 = vmatprep.subr.bf16.mxu0 %v3660
        %4133 = vmatpush1.bf16.msra.mxu0 %v3659
        %4134 = vmatprep.subr.bf16.mxu0 %v3628
        %4135 = vmatpush1.bf16.msra.mxu0 %v3627
        %4136 = vmatprep.subr.bf16.mxu0 %v3596
        %4137 = vmatpush1.bf16.msra.mxu0 %v3595
        %4138 = vmatprep.subr.bf16.mxu0 %v3564
        %4139 = vmatpush1.bf16.msra.mxu0 %v3563
        %4140 = vmatprep.subr.bf16.mxu0 %v3532
        %4141 = vmatpush1.bf16.msra.mxu0 %v3531
        %4142 = vmatprep.subr.bf16.mxu0 %v3500
        %4143 = vmatpush1.bf16.msra.mxu0 %v3499
        %4144 = vmatprep.subr.bf16.mxu0 0
        %4145 = vmatpush2.bf16.msra.mxu0 0
        %4146 = vmatprep.subr.bf16.mxu0 0
        %4147 = vmatpush2.bf16.msra.mxu0 0
        %4148 = vmatprep.subr.bf16.mxu0 0
        %4149 = vmatpush2.bf16.msra.mxu0 0
        %4150 = vmatprep.subr.bf16.mxu0 0
        %4151 = vmatpush2.bf16.msra.mxu0 0
        %4152 = vmatprep.subr.bf16.mxu0 0
        %4153 = vmatpush2.bf16.msra.mxu0 0
        %4154 = vmatprep.subr.bf16.mxu0 0
        %4155 = vmatpush2.bf16.msra.mxu0 0
        %4156 = vmatprep.subr.bf16.mxu0 0
        %4157 = vmatpush2.bf16.msra.mxu0 0
        %4158 = vmatprep.subr.bf16.mxu0 0
        %4159 = vmatpush2.bf16.msra.mxu0 0
        %4160 = vmatprep.mubr.bf16.mxu0 0
        %4161 = vmatmul.mubr.bf16.gmra.mxu0 %v2300
        %v4162 = vpop.f32.mrf.mxu0
        %v4163 = vadd.f32 %v2592, %v4162
        %v4164 = vpop.f32.mrf.mxu0
        %v4165 = vadd.f32 %v2596, %v4164
        %v4166 = vpop.f32.mrf.mxu0
        %v4167 = vpop.f32.mrf.mxu0
        %4168 = vdwg.mxu0
        %4169 = vmatprep.subr.bf16.mxu0 %v3726
        %4170 = vmatpush1.bf16.msra.mxu0 %v3725
        %4171 = vmatprep.subr.bf16.mxu0 %v3694
        %4172 = vmatpush1.bf16.msra.mxu0 %v3693
        %4173 = vmatprep.subr.bf16.mxu0 %v3662
        %4174 = vmatpush1.bf16.msra.mxu0 %v3661
        %4175 = vmatprep.subr.bf16.mxu0 %v3630
        %4176 = vmatpush1.bf16.msra.mxu0 %v3629
        %4177 = vmatprep.subr.bf16.mxu0 %v3598
        %4178 = vmatpush1.bf16.msra.mxu0 %v3597
        %4179 = vmatprep.subr.bf16.mxu0 %v3566
        %4180 = vmatpush1.bf16.msra.mxu0 %v3565
        %4181 = vmatprep.subr.bf16.mxu0 %v3534
        %4182 = vmatpush1.bf16.msra.mxu0 %v3533
        %4183 = vmatprep.subr.bf16.mxu0 %v3502
        %4184 = vmatpush1.bf16.msra.mxu0 %v3501
        %4185 = vmatprep.subr.bf16.mxu0 0
        %4186 = vmatpush2.bf16.msra.mxu0 0
        %4187 = vmatprep.subr.bf16.mxu0 0
        %4188 = vmatpush2.bf16.msra.mxu0 0
        %4189 = vmatprep.subr.bf16.mxu0 0
        %4190 = vmatpush2.bf16.msra.mxu0 0
        %4191 = vmatprep.subr.bf16.mxu0 0
        %4192 = vmatpush2.bf16.msra.mxu0 0
        %4193 = vmatprep.subr.bf16.mxu0 0
        %4194 = vmatpush2.bf16.msra.mxu0 0
        %4195 = vmatprep.subr.bf16.mxu0 0
        %4196 = vmatpush2.bf16.msra.mxu0 0
        %4197 = vmatprep.subr.bf16.mxu0 0
        %4198 = vmatpush2.bf16.msra.mxu0 0
        %4199 = vmatprep.subr.bf16.mxu0 0
        %4200 = vmatpush2.bf16.msra.mxu0 0
        %4201 = vmatprep.mubr.bf16.mxu0 0
        %4202 = vmatmul.mubr.bf16.gmra.mxu0 %v2300
        %v4203 = vpop.f32.mrf.mxu0
        %v4204 = vadd.f32 %v2600, %v4203
        %v4205 = vpop.f32.mrf.mxu0
        %v4206 = vadd.f32 %v2604, %v4205
        %v4207 = vpop.f32.mrf.mxu0
        %v4208 = vpop.f32.mrf.mxu0
        %4209 = vdwg.mxu0
        %4210 = vmatprep.subr.bf16.mxu0 %v3728
        %4211 = vmatpush1.bf16.msra.mxu0 %v3727
        %4212 = vmatprep.subr.bf16.mxu0 %v3696
        %4213 = vmatpush1.bf16.msra.mxu0 %v3695
        %4214 = vmatprep.subr.bf16.mxu0 %v3664
        %4215 = vmatpush1.bf16.msra.mxu0 %v3663
        %4216 = vmatprep.subr.bf16.mxu0 %v3632
        %4217 = vmatpush1.bf16.msra.mxu0 %v3631
        %4218 = vmatprep.subr.bf16.mxu0 %v3600
        %4219 = vmatpush1.bf16.msra.mxu0 %v3599
        %4220 = vmatprep.subr.bf16.mxu0 %v3568
        %4221 = vmatpush1.bf16.msra.mxu0 %v3567
        %4222 = vmatprep.subr.bf16.mxu0 %v3536
        %4223 = vmatpush1.bf16.msra.mxu0 %v3535
        %4224 = vmatprep.subr.bf16.mxu0 %v3504
        %4225 = vmatpush1.bf16.msra.mxu0 %v3503
        %4226 = vmatprep.subr.bf16.mxu0 0
        %4227 = vmatpush2.bf16.msra.mxu0 0
        %4228 = vmatprep.subr.bf16.mxu0 0
        %4229 = vmatpush2.bf16.msra.mxu0 0
        %4230 = vmatprep.subr.bf16.mxu0 0
        %4231 = vmatpush2.bf16.msra.mxu0 0
        %4232 = vmatprep.subr.bf16.mxu0 0
        %4233 = vmatpush2.bf16.msra.mxu0 0
        %4234 = vmatprep.subr.bf16.mxu0 0
        %4235 = vmatpush2.bf16.msra.mxu0 0
        %4236 = vmatprep.subr.bf16.mxu0 0
        %4237 = vmatpush2.bf16.msra.mxu0 0
        %4238 = vmatprep.subr.bf16.mxu0 0
        %4239 = vmatpush2.bf16.msra.mxu0 0
        %4240 = vmatprep.subr.bf16.mxu0 0
        %4241 = vmatpush2.bf16.msra.mxu0 0
        %4242 = vmatprep.mubr.bf16.mxu0 0
        %4243 = vmatmul.mubr.bf16.gmra.mxu0 %v2300
        %v4244 = vpop.f32.mrf.mxu0
        %v4245 = vadd.f32 %v2608, %v4244
        %v4246 = vpop.f32.mrf.mxu0
        %v4247 = vadd.f32 %v2612, %v4246
        %v4248 = vpop.f32.mrf.mxu0
        %v4249 = vpop.f32.mrf.mxu0
        %4250 = vdwg.mxu0
        %4251 = vmatprep.subr.bf16.mxu0 %v3730
        %4252 = vmatpush1.bf16.msra.mxu0 %v3729
        %4253 = vmatprep.subr.bf16.mxu0 %v3698
        %4254 = vmatpush1.bf16.msra.mxu0 %v3697
        %4255 = vmatprep.subr.bf16.mxu0 %v3666
        %4256 = vmatpush1.bf16.msra.mxu0 %v3665
        %4257 = vmatprep.subr.bf16.mxu0 %v3634
        %4258 = vmatpush1.bf16.msra.mxu0 %v3633
        %4259 = vmatprep.subr.bf16.mxu0 %v3602
        %4260 = vmatpush1.bf16.msra.mxu0 %v3601
        %4261 = vmatprep.subr.bf16.mxu0 %v3570
        %4262 = vmatpush1.bf16.msra.mxu0 %v3569
        %4263 = vmatprep.subr.bf16.mxu0 %v3538
        %4264 = vmatpush1.bf16.msra.mxu0 %v3537
        %4265 = vmatprep.subr.bf16.mxu0 %v3506
        %4266 = vmatpush1.bf16.msra.mxu0 %v3505
        %4267 = vmatprep.subr.bf16.mxu0 0
        %4268 = vmatpush2.bf16.msra.mxu0 0
        %4269 = vmatprep.subr.bf16.mxu0 0
        %4270 = vmatpush2.bf16.msra.mxu0 0
        %4271 = vmatprep.subr.bf16.mxu0 0
        %4272 = vmatpush2.bf16.msra.mxu0 0
        %4273 = vmatprep.subr.bf16.mxu0 0
        %4274 = vmatpush2.bf16.msra.mxu0 0
        %4275 = vmatprep.subr.bf16.mxu0 0
        %4276 = vmatpush2.bf16.msra.mxu0 0
        %4277 = vmatprep.subr.bf16.mxu0 0
        %4278 = vmatpush2.bf16.msra.mxu0 0
        %4279 = vmatprep.subr.bf16.mxu0 0
        %4280 = vmatpush2.bf16.msra.mxu0 0
        %4281 = vmatprep.subr.bf16.mxu0 0
        %4282 = vmatpush2.bf16.msra.mxu0 0
        %4283 = vmatprep.mubr.bf16.mxu0 0
        %4284 = vmatmul.mubr.bf16.gmra.mxu0 %v2300
        %v4285 = vpop.f32.mrf.mxu0
        %v4286 = vadd.f32 %v2616, %v4285
        %v4287 = vpop.f32.mrf.mxu0
        %v4288 = vadd.f32 %v2620, %v4287
        %v4289 = vpop.f32.mrf.mxu0
        %v4290 = vpop.f32.mrf.mxu0
        %4291 = vdwg.mxu0
        %4292 = vmatprep.subr.bf16.mxu0 %v3732
        %4293 = vmatpush1.bf16.msra.mxu0 %v3731
        %4294 = vmatprep.subr.bf16.mxu0 %v3700
        %4295 = vmatpush1.bf16.msra.mxu0 %v3699
        %4296 = vmatprep.subr.bf16.mxu0 %v3668
        %4297 = vmatpush1.bf16.msra.mxu0 %v3667
        %4298 = vmatprep.subr.bf16.mxu0 %v3636
        %4299 = vmatpush1.bf16.msra.mxu0 %v3635
        %4300 = vmatprep.subr.bf16.mxu0 %v3604
        %4301 = vmatpush1.bf16.msra.mxu0 %v3603
        %4302 = vmatprep.subr.bf16.mxu0 %v3572
        %4303 = vmatpush1.bf16.msra.mxu0 %v3571
        %4304 = vmatprep.subr.bf16.mxu0 %v3540
        %4305 = vmatpush1.bf16.msra.mxu0 %v3539
        %4306 = vmatprep.subr.bf16.mxu0 %v3508
        %4307 = vmatpush1.bf16.msra.mxu0 %v3507
        %4308 = vmatprep.subr.bf16.mxu0 0
        %4309 = vmatpush2.bf16.msra.mxu0 0
        %4310 = vmatprep.subr.bf16.mxu0 0
        %4311 = vmatpush2.bf16.msra.mxu0 0
        %4312 = vmatprep.subr.bf16.mxu0 0
        %4313 = vmatpush2.bf16.msra.mxu0 0
        %4314 = vmatprep.subr.bf16.mxu0 0
        %4315 = vmatpush2.bf16.msra.mxu0 0
        %4316 = vmatprep.subr.bf16.mxu0 0
        %4317 = vmatpush2.bf16.msra.mxu0 0
        %4318 = vmatprep.subr.bf16.mxu0 0
        %4319 = vmatpush2.bf16.msra.mxu0 0
        %4320 = vmatprep.subr.bf16.mxu0 0
        %4321 = vmatpush2.bf16.msra.mxu0 0
        %4322 = vmatprep.subr.bf16.mxu0 0
        %4323 = vmatpush2.bf16.msra.mxu0 0
        %4324 = vmatprep.mubr.bf16.mxu0 0
        %4325 = vmatmul.mubr.bf16.gmra.mxu0 %v2300
        %v4326 = vpop.f32.mrf.mxu0
        %v4327 = vadd.f32 %v2624, %v4326
        %v4328 = vpop.f32.mrf.mxu0
        %v4329 = vadd.f32 %v2628, %v4328
        %v4330 = vpop.f32.mrf.mxu0
        %v4331 = vpop.f32.mrf.mxu0
        %4332 = vdwg.mxu0
        %4333 = vmatprep.subr.bf16.mxu0 %v3734
        %4334 = vmatpush1.bf16.msra.mxu0 %v3733
        %4335 = vmatprep.subr.bf16.mxu0 %v3702
        %4336 = vmatpush1.bf16.msra.mxu0 %v3701
        %4337 = vmatprep.subr.bf16.mxu0 %v3670
        %4338 = vmatpush1.bf16.msra.mxu0 %v3669
        %4339 = vmatprep.subr.bf16.mxu0 %v3638
        %4340 = vmatpush1.bf16.msra.mxu0 %v3637
        %4341 = vmatprep.subr.bf16.mxu0 %v3606
        %4342 = vmatpush1.bf16.msra.mxu0 %v3605
        %4343 = vmatprep.subr.bf16.mxu0 %v3574
        %4344 = vmatpush1.bf16.msra.mxu0 %v3573
        %4345 = vmatprep.subr.bf16.mxu0 %v3542
        %4346 = vmatpush1.bf16.msra.mxu0 %v3541
        %4347 = vmatprep.subr.bf16.mxu0 %v3510
        %4348 = vmatpush1.bf16.msra.mxu0 %v3509
        %4349 = vmatprep.subr.bf16.mxu0 0
        %4350 = vmatpush2.bf16.msra.mxu0 0
        %4351 = vmatprep.subr.bf16.mxu0 0
        %4352 = vmatpush2.bf16.msra.mxu0 0
        %4353 = vmatprep.subr.bf16.mxu0 0
        %4354 = vmatpush2.bf16.msra.mxu0 0
        %4355 = vmatprep.subr.bf16.mxu0 0
        %4356 = vmatpush2.bf16.msra.mxu0 0
        %4357 = vmatprep.subr.bf16.mxu0 0
        %4358 = vmatpush2.bf16.msra.mxu0 0
        %4359 = vmatprep.subr.bf16.mxu0 0
        %4360 = vmatpush2.bf16.msra.mxu0 0
        %4361 = vmatprep.subr.bf16.mxu0 0
        %4362 = vmatpush2.bf16.msra.mxu0 0
        %4363 = vmatprep.subr.bf16.mxu0 0
        %4364 = vmatpush2.bf16.msra.mxu0 0
        %4365 = vmatprep.mubr.bf16.mxu0 0
        %4366 = vmatmul.mubr.bf16.gmra.mxu0 %v2300
        %v4367 = vpop.f32.mrf.mxu0
        %v4368 = vadd.f32 %v2632, %v4367
        %v4369 = vpop.f32.mrf.mxu0
        %v4370 = vadd.f32 %v2636, %v4369
        %v4371 = vpop.f32.mrf.mxu0
        %v4372 = vpop.f32.mrf.mxu0
        %4373 = vdwg.mxu0
        %4374 = vmatprep.subr.bf16.mxu0 %v3736
        %4375 = vmatpush1.bf16.msra.mxu0 %v3735
        %4376 = vmatprep.subr.bf16.mxu0 %v3704
        %4377 = vmatpush1.bf16.msra.mxu0 %v3703
        %4378 = vmatprep.subr.bf16.mxu0 %v3672
        %4379 = vmatpush1.bf16.msra.mxu0 %v3671
        %4380 = vmatprep.subr.bf16.mxu0 %v3640
        %4381 = vmatpush1.bf16.msra.mxu0 %v3639
        %4382 = vmatprep.subr.bf16.mxu0 %v3608
        %4383 = vmatpush1.bf16.msra.mxu0 %v3607
        %4384 = vmatprep.subr.bf16.mxu0 %v3576
        %4385 = vmatpush1.bf16.msra.mxu0 %v3575
        %4386 = vmatprep.subr.bf16.mxu0 %v3544
        %4387 = vmatpush1.bf16.msra.mxu0 %v3543
        %4388 = vmatprep.subr.bf16.mxu0 %v3512
        %4389 = vmatpush1.bf16.msra.mxu0 %v3511
        %4390 = vmatprep.subr.bf16.mxu0 0
        %4391 = vmatpush2.bf16.msra.mxu0 0
        %4392 = vmatprep.subr.bf16.mxu0 0
        %4393 = vmatpush2.bf16.msra.mxu0 0
        %4394 = vmatprep.subr.bf16.mxu0 0
        %4395 = vmatpush2.bf16.msra.mxu0 0
        %4396 = vmatprep.subr.bf16.mxu0 0
        %4397 = vmatpush2.bf16.msra.mxu0 0
        %4398 = vmatprep.subr.bf16.mxu0 0
        %4399 = vmatpush2.bf16.msra.mxu0 0
        %4400 = vmatprep.subr.bf16.mxu0 0
        %4401 = vmatpush2.bf16.msra.mxu0 0
        %4402 = vmatprep.subr.bf16.mxu0 0
        %4403 = vmatpush2.bf16.msra.mxu0 0
        %4404 = vmatprep.subr.bf16.mxu0 0
        %4405 = vmatpush2.bf16.msra.mxu0 0
        %4406 = vmatprep.mubr.bf16.mxu0 0
        %4407 = vmatmul.mubr.bf16.gmra.mxu0 %v2300
        %v4408 = vpop.f32.mrf.mxu0
        %v4409 = vadd.f32 %v2640, %v4408
        %v4410 = vpop.f32.mrf.mxu0
        %v4411 = vadd.f32 %v2644, %v4410
        %v4412 = vpop.f32.mrf.mxu0
        %v4413 = vpop.f32.mrf.mxu0
        %4414 = vdwg.mxu0
        %4415 = vmatprep.subr.bf16.mxu0 %v3738
        %4416 = vmatpush1.bf16.msra.mxu0 %v3737
        %4417 = vmatprep.subr.bf16.mxu0 %v3706
        %4418 = vmatpush1.bf16.msra.mxu0 %v3705
        %4419 = vmatprep.subr.bf16.mxu0 %v3674
        %4420 = vmatpush1.bf16.msra.mxu0 %v3673
        %4421 = vmatprep.subr.bf16.mxu0 %v3642
        %4422 = vmatpush1.bf16.msra.mxu0 %v3641
        %4423 = vmatprep.subr.bf16.mxu0 %v3610
        %4424 = vmatpush1.bf16.msra.mxu0 %v3609
        %4425 = vmatprep.subr.bf16.mxu0 %v3578
        %4426 = vmatpush1.bf16.msra.mxu0 %v3577
        %4427 = vmatprep.subr.bf16.mxu0 %v3546
        %4428 = vmatpush1.bf16.msra.mxu0 %v3545
        %4429 = vmatprep.subr.bf16.mxu0 %v3514
        %4430 = vmatpush1.bf16.msra.mxu0 %v3513
        %4431 = vmatprep.subr.bf16.mxu0 0
        %4432 = vmatpush2.bf16.msra.mxu0 0
        %4433 = vmatprep.subr.bf16.mxu0 0
        %4434 = vmatpush2.bf16.msra.mxu0 0
        %4435 = vmatprep.subr.bf16.mxu0 0
        %4436 = vmatpush2.bf16.msra.mxu0 0
        %4437 = vmatprep.subr.bf16.mxu0 0
        %4438 = vmatpush2.bf16.msra.mxu0 0
        %4439 = vmatprep.subr.bf16.mxu0 0
        %4440 = vmatpush2.bf16.msra.mxu0 0
        %4441 = vmatprep.subr.bf16.mxu0 0
        %4442 = vmatpush2.bf16.msra.mxu0 0
        %4443 = vmatprep.subr.bf16.mxu0 0
        %4444 = vmatpush2.bf16.msra.mxu0 0
        %4445 = vmatprep.subr.bf16.mxu0 0
        %4446 = vmatpush2.bf16.msra.mxu0 0
        %4447 = vmatprep.mubr.bf16.mxu0 0
        %4448 = vmatmul.mubr.bf16.gmra.mxu0 %v2300
        %v4449 = vpop.f32.mrf.mxu0
        %v4450 = vadd.f32 %v2648, %v4449
        %v4451 = vpop.f32.mrf.mxu0
        %v4452 = vadd.f32 %v2652, %v4451
        %v4453 = vpop.f32.mrf.mxu0
        %v4454 = vpop.f32.mrf.mxu0
        %4455 = vdwg.mxu0
        %4456 = vmatprep.subr.bf16.mxu0 %v3740
        %4457 = vmatpush1.bf16.msra.mxu0 %v3739
        %4458 = vmatprep.subr.bf16.mxu0 %v3708
        %4459 = vmatpush1.bf16.msra.mxu0 %v3707
        %4460 = vmatprep.subr.bf16.mxu0 %v3676
        %4461 = vmatpush1.bf16.msra.mxu0 %v3675
        %4462 = vmatprep.subr.bf16.mxu0 %v3644
        %4463 = vmatpush1.bf16.msra.mxu0 %v3643
        %4464 = vmatprep.subr.bf16.mxu0 %v3612
        %4465 = vmatpush1.bf16.msra.mxu0 %v3611
        %4466 = vmatprep.subr.bf16.mxu0 %v3580
        %4467 = vmatpush1.bf16.msra.mxu0 %v3579
        %4468 = vmatprep.subr.bf16.mxu0 %v3548
        %4469 = vmatpush1.bf16.msra.mxu0 %v3547
        %4470 = vmatprep.subr.bf16.mxu0 %v3516
        %4471 = vmatpush1.bf16.msra.mxu0 %v3515
        %4472 = vmatprep.subr.bf16.mxu0 0
        %4473 = vmatpush2.bf16.msra.mxu0 0
        %4474 = vmatprep.subr.bf16.mxu0 0
        %4475 = vmatpush2.bf16.msra.mxu0 0
        %4476 = vmatprep.subr.bf16.mxu0 0
        %4477 = vmatpush2.bf16.msra.mxu0 0
        %4478 = vmatprep.subr.bf16.mxu0 0
        %4479 = vmatpush2.bf16.msra.mxu0 0
        %4480 = vmatprep.subr.bf16.mxu0 0
        %4481 = vmatpush2.bf16.msra.mxu0 0
        %4482 = vmatprep.subr.bf16.mxu0 0
        %4483 = vmatpush2.bf16.msra.mxu0 0
        %4484 = vmatprep.subr.bf16.mxu0 0
        %4485 = vmatpush2.bf16.msra.mxu0 0
        %4486 = vmatprep.subr.bf16.mxu0 0
        %4487 = vmatpush2.bf16.msra.mxu0 0
        %4488 = vmatprep.mubr.bf16.mxu0 0
        %4489 = vmatmul.mubr.bf16.gmra.mxu0 %v2300
        %v4490 = vpop.f32.mrf.mxu0
        %v4491 = vadd.f32 %v2656, %v4490
        %v4492 = vpop.f32.mrf.mxu0
        %v4493 = vadd.f32 %v2660, %v4492
        %v4494 = vpop.f32.mrf.mxu0
        %v4495 = vpop.f32.mrf.mxu0
        %4496 = vdwg.mxu0
        %4497 = vmatprep.subr.bf16.mxu0 %v3742
        %4498 = vmatpush1.bf16.msra.mxu0 %v3741
        %4499 = vmatprep.subr.bf16.mxu0 %v3710
        %4500 = vmatpush1.bf16.msra.mxu0 %v3709
        %4501 = vmatprep.subr.bf16.mxu0 %v3678
        %4502 = vmatpush1.bf16.msra.mxu0 %v3677
        %4503 = vmatprep.subr.bf16.mxu0 %v3646
        %4504 = vmatpush1.bf16.msra.mxu0 %v3645
        %4505 = vmatprep.subr.bf16.mxu0 %v3614
        %4506 = vmatpush1.bf16.msra.mxu0 %v3613
        %4507 = vmatprep.subr.bf16.mxu0 %v3582
        %4508 = vmatpush1.bf16.msra.mxu0 %v3581
        %4509 = vmatprep.subr.bf16.mxu0 %v3550
        %4510 = vmatpush1.bf16.msra.mxu0 %v3549
        %4511 = vmatprep.subr.bf16.mxu0 %v3518
        %4512 = vmatpush1.bf16.msra.mxu0 %v3517
        %4513 = vmatprep.subr.bf16.mxu0 0
        %4514 = vmatpush2.bf16.msra.mxu0 0
        %4515 = vmatprep.subr.bf16.mxu0 0
        %4516 = vmatpush2.bf16.msra.mxu0 0
        %4517 = vmatprep.subr.bf16.mxu0 0
        %4518 = vmatpush2.bf16.msra.mxu0 0
        %4519 = vmatprep.subr.bf16.mxu0 0
        %4520 = vmatpush2.bf16.msra.mxu0 0
        %4521 = vmatprep.subr.bf16.mxu0 0
        %4522 = vmatpush2.bf16.msra.mxu0 0
        %4523 = vmatprep.subr.bf16.mxu0 0
        %4524 = vmatpush2.bf16.msra.mxu0 0
        %4525 = vmatprep.subr.bf16.mxu0 0
        %4526 = vmatpush2.bf16.msra.mxu0 0
        %4527 = vmatprep.subr.bf16.mxu0 0
        %4528 = vmatpush2.bf16.msra.mxu0 0
        %4529 = vmatprep.mubr.bf16.mxu0 0
        %4530 = vmatmul.mubr.bf16.gmra.mxu0 %v2300
        %v4531 = vpop.f32.mrf.mxu0
        %v4532 = vadd.f32 %v2664, %v4531
        %v4533 = vpop.f32.mrf.mxu0
        %v4534 = vadd.f32 %v2668, %v4533
        %v4535 = vpop.f32.mrf.mxu0
        %v4536 = vpop.f32.mrf.mxu0
        %4537 = vdwg.mxu0
        %4538 = vmatprep.subr.bf16.mxu0 %v3744
        %4539 = vmatpush1.bf16.msra.mxu0 %v3743
        %4540 = vmatprep.subr.bf16.mxu0 %v3712
        %4541 = vmatpush1.bf16.msra.mxu0 %v3711
        %4542 = vmatprep.subr.bf16.mxu0 %v3680
        %4543 = vmatpush1.bf16.msra.mxu0 %v3679
        %4544 = vmatprep.subr.bf16.mxu0 %v3648
        %4545 = vmatpush1.bf16.msra.mxu0 %v3647
        %4546 = vmatprep.subr.bf16.mxu0 %v3616
        %4547 = vmatpush1.bf16.msra.mxu0 %v3615
        %4548 = vmatprep.subr.bf16.mxu0 %v3584
        %4549 = vmatpush1.bf16.msra.mxu0 %v3583
        %4550 = vmatprep.subr.bf16.mxu0 %v3552
        %4551 = vmatpush1.bf16.msra.mxu0 %v3551
        %4552 = vmatprep.subr.bf16.mxu0 %v3520
        %4553 = vmatpush1.bf16.msra.mxu0 %v3519
        %4554 = vmatprep.subr.bf16.mxu0 0
        %4555 = vmatpush2.bf16.msra.mxu0 0
        %4556 = vmatprep.subr.bf16.mxu0 0
        %4557 = vmatpush2.bf16.msra.mxu0 0
        %4558 = vmatprep.subr.bf16.mxu0 0
        %4559 = vmatpush2.bf16.msra.mxu0 0
        %4560 = vmatprep.subr.bf16.mxu0 0
        %4561 = vmatpush2.bf16.msra.mxu0 0
        %4562 = vmatprep.subr.bf16.mxu0 0
        %4563 = vmatpush2.bf16.msra.mxu0 0
        %4564 = vmatprep.subr.bf16.mxu0 0
        %4565 = vmatpush2.bf16.msra.mxu0 0
        %4566 = vmatprep.subr.bf16.mxu0 0
        %4567 = vmatpush2.bf16.msra.mxu0 0
        %4568 = vmatprep.subr.bf16.mxu0 0
        %4569 = vmatpush2.bf16.msra.mxu0 0
        %4570 = vmatprep.mubr.bf16.mxu0 0
        %4571 = vmatmul.mubr.bf16.gmra.mxu0 %v2300
        %v4572 = vpop.f32.mrf.mxu0
        %v4573 = vadd.f32 %v2672, %v4572
        %v4574 = vpop.f32.mrf.mxu0
        %v4575 = vadd.f32 %v2676, %v4574
        %v4576 = vpop.f32.mrf.mxu0
        %v4577 = vpop.f32.mrf.mxu0
        %4578 = vdwg.mxu0
        %4579 = vmatprep.subr.bf16.mxu0 %v3746
        %4580 = vmatpush1.bf16.msra.mxu0 %v3745
        %4581 = vmatprep.subr.bf16.mxu0 %v3714
        %4582 = vmatpush1.bf16.msra.mxu0 %v3713
        %4583 = vmatprep.subr.bf16.mxu0 %v3682
        %4584 = vmatpush1.bf16.msra.mxu0 %v3681
        %4585 = vmatprep.subr.bf16.mxu0 %v3650
        %4586 = vmatpush1.bf16.msra.mxu0 %v3649
        %4587 = vmatprep.subr.bf16.mxu0 %v3618
        %4588 = vmatpush1.bf16.msra.mxu0 %v3617
        %4589 = vmatprep.subr.bf16.mxu0 %v3586
        %4590 = vmatpush1.bf16.msra.mxu0 %v3585
        %4591 = vmatprep.subr.bf16.mxu0 %v3554
        %4592 = vmatpush1.bf16.msra.mxu0 %v3553
        %4593 = vmatprep.subr.bf16.mxu0 %v3522
        %4594 = vmatpush1.bf16.msra.mxu0 %v3521
        %4595 = vmatprep.subr.bf16.mxu0 0
        %4596 = vmatpush2.bf16.msra.mxu0 0
        %4597 = vmatprep.subr.bf16.mxu0 0
        %4598 = vmatpush2.bf16.msra.mxu0 0
        %4599 = vmatprep.subr.bf16.mxu0 0
        %4600 = vmatpush2.bf16.msra.mxu0 0
        %4601 = vmatprep.subr.bf16.mxu0 0
        %4602 = vmatpush2.bf16.msra.mxu0 0
        %4603 = vmatprep.subr.bf16.mxu0 0
        %4604 = vmatpush2.bf16.msra.mxu0 0
        %4605 = vmatprep.subr.bf16.mxu0 0
        %4606 = vmatpush2.bf16.msra.mxu0 0
        %4607 = vmatprep.subr.bf16.mxu0 0
        %4608 = vmatpush2.bf16.msra.mxu0 0
        %4609 = vmatprep.subr.bf16.mxu0 0
        %4610 = vmatpush2.bf16.msra.mxu0 0
        %4611 = vmatprep.mubr.bf16.mxu0 0
        %4612 = vmatmul.mubr.bf16.gmra.mxu0 %v2300
        %v4613 = vpop.f32.mrf.mxu0
        %v4614 = vadd.f32 %v2680, %v4613
        %v4615 = vpop.f32.mrf.mxu0
        %v4616 = vadd.f32 %v2684, %v4615
        %v4617 = vpop.f32.mrf.mxu0
        %v4618 = vpop.f32.mrf.mxu0
        %4619 = vdwg.mxu0
        %4620 = vmatprep.subr.bf16.mxu0 %v3748
        %4621 = vmatpush1.bf16.msra.mxu0 %v3747
        %4622 = vmatprep.subr.bf16.mxu0 %v3716
        %4623 = vmatpush1.bf16.msra.mxu0 %v3715
        %4624 = vmatprep.subr.bf16.mxu0 %v3684
        %4625 = vmatpush1.bf16.msra.mxu0 %v3683
        %4626 = vmatprep.subr.bf16.mxu0 %v3652
        %4627 = vmatpush1.bf16.msra.mxu0 %v3651
        %4628 = vmatprep.subr.bf16.mxu0 %v3620
        %4629 = vmatpush1.bf16.msra.mxu0 %v3619
        %4630 = vmatprep.subr.bf16.mxu0 %v3588
        %4631 = vmatpush1.bf16.msra.mxu0 %v3587
        %4632 = vmatprep.subr.bf16.mxu0 %v3556
        %4633 = vmatpush1.bf16.msra.mxu0 %v3555
        %4634 = vmatprep.subr.bf16.mxu0 %v3524
        %4635 = vmatpush1.bf16.msra.mxu0 %v3523
        %4636 = vmatprep.subr.bf16.mxu0 0
        %4637 = vmatpush2.bf16.msra.mxu0 0
        %4638 = vmatprep.subr.bf16.mxu0 0
        %4639 = vmatpush2.bf16.msra.mxu0 0
        %4640 = vmatprep.subr.bf16.mxu0 0
        %4641 = vmatpush2.bf16.msra.mxu0 0
        %4642 = vmatprep.subr.bf16.mxu0 0
        %4643 = vmatpush2.bf16.msra.mxu0 0
        %4644 = vmatprep.subr.bf16.mxu0 0
        %4645 = vmatpush2.bf16.msra.mxu0 0
        %4646 = vmatprep.subr.bf16.mxu0 0
        %4647 = vmatpush2.bf16.msra.mxu0 0
        %4648 = vmatprep.subr.bf16.mxu0 0
        %4649 = vmatpush2.bf16.msra.mxu0 0
        %4650 = vmatprep.subr.bf16.mxu0 0
        %4651 = vmatpush2.bf16.msra.mxu0 0
        %4652 = vmatprep.mubr.bf16.mxu0 0
        %4653 = vmatmul.mubr.bf16.gmra.mxu0 %v2300
        %v4654 = vpop.f32.mrf.mxu0
        %v4655 = vadd.f32 %v2688, %v4654
        %v4656 = vpop.f32.mrf.mxu0
        %v4657 = vadd.f32 %v2692, %v4656
        %v4658 = vpop.f32.mrf.mxu0
        %v4659 = vpop.f32.mrf.mxu0
        %4660 = vdwg.mxu0
        %v4661 = vxor.u32 %v4040, 2147483648
        %v4662 = vxor.u32 %v4042, 2147483648
        %v4663 = vxor.u32 %v4081, 2147483648
        %v4664 = vxor.u32 %v4083, 2147483648
        %v4665 = vxor.u32 %v4122, 2147483648
        %v4666 = vxor.u32 %v4124, 2147483648
        %v4667 = vxor.u32 %v4163, 2147483648
        %v4668 = vxor.u32 %v4165, 2147483648
        %v4669 = vxor.u32 %v4204, 2147483648
        %v4670 = vxor.u32 %v4206, 2147483648
        %v4671 = vxor.u32 %v4245, 2147483648
        %v4672 = vxor.u32 %v4247, 2147483648
        %v4673 = vxor.u32 %v4286, 2147483648
        %v4674 = vxor.u32 %v4288, 2147483648
        %v4675 = vxor.u32 %v4327, 2147483648
        %v4676 = vxor.u32 %v4329, 2147483648
        %v4677 = vxor.u32 %v4368, 2147483648
        %v4678 = vxor.u32 %v4370, 2147483648
        %v4679 = vxor.u32 %v4409, 2147483648
        %v4680 = vxor.u32 %v4411, 2147483648
        %v4681 = vxor.u32 %v4450, 2147483648
        %v4682 = vxor.u32 %v4452, 2147483648
        %v4683 = vxor.u32 %v4491, 2147483648
        %v4684 = vxor.u32 %v4493, 2147483648
        %v4685 = vxor.u32 %v4532, 2147483648
        %v4686 = vxor.u32 %v4534, 2147483648
        %v4687 = vxor.u32 %v4573, 2147483648
        %v4688 = vxor.u32 %v4575, 2147483648
        %v4689 = vxor.u32 %v4614, 2147483648
        %v4690 = vxor.u32 %v4616, 2147483648
        %v4691 = vxor.u32 %v4655, 2147483648
        %v4692 = vxor.u32 %v4657, 2147483648
        %v4693 = vmul.f32 %v4661, 1.442695
        %v4694 = vpow.pop %v4693
        %v4695 = vmul.f32 %v4662, 1.442695
        %v4696 = vpow.pop %v4695
        %v4697 = vmul.f32 %v4663, 1.442695
        %v4698 = vpow.pop %v4697
        %v4699 = vmul.f32 %v4664, 1.442695
        %v4700 = vpow.pop %v4699
        %v4701 = vmul.f32 %v4665, 1.442695
        %v4702 = vpow.pop %v4701
        %v4703 = vmul.f32 %v4666, 1.442695
        %v4704 = vpow.pop %v4703
        %v4705 = vmul.f32 %v4667, 1.442695
        %v4706 = vpow.pop %v4705
        %v4707 = vmul.f32 %v4668, 1.442695
        %v4708 = vpow.pop %v4707
        %v4709 = vmul.f32 %v4669, 1.442695
        %v4710 = vpow.pop %v4709
        %v4711 = vmul.f32 %v4670, 1.442695
        %v4712 = vpow.pop %v4711
        %v4713 = vmul.f32 %v4671, 1.442695
        %v4714 = vpow.pop %v4713
        %v4715 = vmul.f32 %v4672, 1.442695
        %v4716 = vpow.pop %v4715
        %v4717 = vmul.f32 %v4673, 1.442695
        %v4718 = vpow.pop %v4717
        %v4719 = vmul.f32 %v4674, 1.442695
        %v4720 = vpow.pop %v4719
        %v4721 = vmul.f32 %v4675, 1.442695
        %v4722 = vpow.pop %v4721
        %v4723 = vmul.f32 %v4676, 1.442695
        %v4724 = vpow.pop %v4723
        %v4725 = vmul.f32 %v4677, 1.442695
        %v4726 = vpow.pop %v4725
        %v4727 = vmul.f32 %v4678, 1.442695
        %v4728 = vpow.pop %v4727
        %v4729 = vmul.f32 %v4679, 1.442695
        %v4730 = vpow.pop %v4729
        %v4731 = vmul.f32 %v4680, 1.442695
        %v4732 = vpow.pop %v4731
        %v4733 = vmul.f32 %v4681, 1.442695
        %v4734 = vpow.pop %v4733
        %v4735 = vmul.f32 %v4682, 1.442695
        %v4736 = vpow.pop %v4735
        %v4737 = vmul.f32 %v4683, 1.442695
        %v4738 = vpow.pop %v4737
        %v4739 = vmul.f32 %v4684, 1.442695
        %v4740 = vpow.pop %v4739
        %v4741 = vmul.f32 %v4685, 1.442695
        %v4742 = vpow.pop %v4741
        %v4743 = vmul.f32 %v4686, 1.442695
        %v4744 = vpow.pop %v4743
        %v4745 = vmul.f32 %v4687, 1.442695
        %v4746 = vpow.pop %v4745
        %v4747 = vmul.f32 %v4688, 1.442695
        %v4748 = vpow.pop %v4747
        %v4749 = vmul.f32 %v4689, 1.442695
        %v4750 = vpow.pop %v4749
        %v4751 = vmul.f32 %v4690, 1.442695
        %v4752 = vpow.pop %v4751
        %v4753 = vmul.f32 %v4691, 1.442695
        %v4754 = vpow.pop %v4753
        %v4755 = vmul.f32 %v4692, 1.442695
        %v4756 = vpow.pop %v4755
        %v4757 = vadd.f32 %v4694, 1.0
        %v4758 = vadd.f32 %v4696, 1.0
        %v4759 = vadd.f32 %v4698, 1.0
        %v4760 = vadd.f32 %v4700, 1.0
        %v4761 = vadd.f32 %v4702, 1.0
        %v4762 = vadd.f32 %v4704, 1.0
        %v4763 = vadd.f32 %v4706, 1.0
        %v4764 = vadd.f32 %v4708, 1.0
        %v4765 = vadd.f32 %v4710, 1.0
        %v4766 = vadd.f32 %v4712, 1.0
        %v4767 = vadd.f32 %v4714, 1.0
        %v4768 = vadd.f32 %v4716, 1.0
        %v4769 = vadd.f32 %v4718, 1.0
        %v4770 = vadd.f32 %v4720, 1.0
        %v4771 = vadd.f32 %v4722, 1.0
        %v4772 = vadd.f32 %v4724, 1.0
        %v4773 = vadd.f32 %v4726, 1.0
        %v4774 = vadd.f32 %v4728, 1.0
        %v4775 = vadd.f32 %v4730, 1.0
        %v4776 = vadd.f32 %v4732, 1.0
        %v4777 = vadd.f32 %v4734, 1.0
        %v4778 = vadd.f32 %v4736, 1.0
        %v4779 = vadd.f32 %v4738, 1.0
        %v4780 = vadd.f32 %v4740, 1.0
        %v4781 = vadd.f32 %v4742, 1.0
        %v4782 = vadd.f32 %v4744, 1.0
        %v4783 = vadd.f32 %v4746, 1.0
        %v4784 = vadd.f32 %v4748, 1.0
        %v4785 = vadd.f32 %v4750, 1.0
        %v4786 = vadd.f32 %v4752, 1.0
        %v4787 = vadd.f32 %v4754, 1.0
        %v4788 = vadd.f32 %v4756, 1.0
        %v4789 = vrcp.pop %v4757
        %v4790 = vmul.f32 1.0, %v4789
        %v4791 = vrcp.pop %v4758
        %v4792 = vmul.f32 1.0, %v4791
        %v4793 = vrcp.pop %v4759
        %v4794 = vmul.f32 1.0, %v4793
        %v4795 = vrcp.pop %v4760
        %v4796 = vmul.f32 1.0, %v4795
        %v4797 = vrcp.pop %v4761
        %v4798 = vmul.f32 1.0, %v4797
        %v4799 = vrcp.pop %v4762
        %v4800 = vmul.f32 1.0, %v4799
        %v4801 = vrcp.pop %v4763
        %v4802 = vmul.f32 1.0, %v4801
        %v4803 = vrcp.pop %v4764
        %v4804 = vmul.f32 1.0, %v4803
        %v4805 = vrcp.pop %v4765
        %v4806 = vmul.f32 1.0, %v4805
        %v4807 = vrcp.pop %v4766
        %v4808 = vmul.f32 1.0, %v4807
        %v4809 = vrcp.pop %v4767
        %v4810 = vmul.f32 1.0, %v4809
        %v4811 = vrcp.pop %v4768
        %v4812 = vmul.f32 1.0, %v4811
        %v4813 = vrcp.pop %v4769
        %v4814 = vmul.f32 1.0, %v4813
        %v4815 = vrcp.pop %v4770
        %v4816 = vmul.f32 1.0, %v4815
        %v4817 = vrcp.pop %v4771
        %v4818 = vmul.f32 1.0, %v4817
        %v4819 = vrcp.pop %v4772
        %v4820 = vmul.f32 1.0, %v4819
        %v4821 = vrcp.pop %v4773
        %v4822 = vmul.f32 1.0, %v4821
        %v4823 = vrcp.pop %v4774
        %v4824 = vmul.f32 1.0, %v4823
        %v4825 = vrcp.pop %v4775
        %v4826 = vmul.f32 1.0, %v4825
        %v4827 = vrcp.pop %v4776
        %v4828 = vmul.f32 1.0, %v4827
        %v4829 = vrcp.pop %v4777
        %v4830 = vmul.f32 1.0, %v4829
        %v4831 = vrcp.pop %v4778
        %v4832 = vmul.f32 1.0, %v4831
        %v4833 = vrcp.pop %v4779
        %v4834 = vmul.f32 1.0, %v4833
        %v4835 = vrcp.pop %v4780
        %v4836 = vmul.f32 1.0, %v4835
        %v4837 = vrcp.pop %v4781
        %v4838 = vmul.f32 1.0, %v4837
        %v4839 = vrcp.pop %v4782
        %v4840 = vmul.f32 1.0, %v4839
        %v4841 = vrcp.pop %v4783
        %v4842 = vmul.f32 1.0, %v4841
        %v4843 = vrcp.pop %v4784
        %v4844 = vmul.f32 1.0, %v4843
        %v4845 = vrcp.pop %v4785
        %v4846 = vmul.f32 1.0, %v4845
        %v4847 = vrcp.pop %v4786
        %v4848 = vmul.f32 1.0, %v4847
        %v4849 = vrcp.pop %v4787
        %v4850 = vmul.f32 1.0, %v4849
        %v4851 = vrcp.pop %v4788
        %v4852 = vmul.f32 1.0, %v4851
        %v4885 = vcombine.low %v4790, %v4792
        %v4886 = vcombine.low %v4794, %v4796
        %v4888 = vunpack.c.l.s4 1983009808
        %v4889 = vunpack.c.0.s8 %v4888
        %v4890 = vlaneseq
        %v4891 = vshrl.u32 %v4890, 7
        %v4892 = vsub.s32 %v4889, %v4891
        %v4893 = vrot.slane %v4885, %v4892
        %v4895 = vunpack.c.l.s4 1983009808
        %v4896 = vunpack.c.0.s8 %v4895
        %v4897 = vlaneseq
        %v4898 = vshrl.u32 %v4897, 7
        %v4899 = vsub.s32 %v4896, %v4898
        %v4900 = vrot.slane %v4886, %v4899
        %v4901 = vcombine.low %v4893, %v4900
        %v4902 = vcombine.low %v4798, %v4800
        %v4903 = vcombine.low %v4802, %v4804
        %v4905 = vunpack.c.l.s4 1983009808
        %v4906 = vunpack.c.0.s8 %v4905
        %v4907 = vlaneseq
        %v4908 = vshrl.u32 %v4907, 7
        %v4909 = vsub.s32 %v4906, %v4908
        %v4910 = vrot.slane %v4902, %v4909
        %v4912 = vunpack.c.l.s4 1983009808
        %v4913 = vunpack.c.0.s8 %v4912
        %v4914 = vlaneseq
        %v4915 = vshrl.u32 %v4914, 7
        %v4916 = vsub.s32 %v4913, %v4915
        %v4917 = vrot.slane %v4903, %v4916
        %v4918 = vcombine.low %v4910, %v4917
        %v4919 = vcombine.low %v4806, %v4808
        %v4920 = vcombine.low %v4810, %v4812
        %v4922 = vunpack.c.l.s4 1983009808
        %v4923 = vunpack.c.0.s8 %v4922
        %v4924 = vlaneseq
        %v4925 = vshrl.u32 %v4924, 7
        %v4926 = vsub.s32 %v4923, %v4925
        %v4927 = vrot.slane %v4919, %v4926
        %v4929 = vunpack.c.l.s4 1983009808
        %v4930 = vunpack.c.0.s8 %v4929
        %v4931 = vlaneseq
        %v4932 = vshrl.u32 %v4931, 7
        %v4933 = vsub.s32 %v4930, %v4932
        %v4934 = vrot.slane %v4920, %v4933
        %v4935 = vcombine.low %v4927, %v4934
        %v4936 = vcombine.low %v4814, %v4816
        %v4937 = vcombine.low %v4818, %v4820
        %v4939 = vunpack.c.l.s4 1983009808
        %v4940 = vunpack.c.0.s8 %v4939
        %v4941 = vlaneseq
        %v4942 = vshrl.u32 %v4941, 7
        %v4943 = vsub.s32 %v4940, %v4942
        %v4944 = vrot.slane %v4936, %v4943
        %v4946 = vunpack.c.l.s4 1983009808
        %v4947 = vunpack.c.0.s8 %v4946
        %v4948 = vlaneseq
        %v4949 = vshrl.u32 %v4948, 7
        %v4950 = vsub.s32 %v4947, %v4949
        %v4951 = vrot.slane %v4937, %v4950
        %v4952 = vcombine.low %v4944, %v4951
        %v4953 = vcombine.low %v4822, %v4824
        %v4954 = vcombine.low %v4826, %v4828
        %v4956 = vunpack.c.l.s4 1983009808
        %v4957 = vunpack.c.0.s8 %v4956
        %v4958 = vlaneseq
        %v4959 = vshrl.u32 %v4958, 7
        %v4960 = vsub.s32 %v4957, %v4959
        %v4961 = vrot.slane %v4953, %v4960
        %v4963 = vunpack.c.l.s4 1983009808
        %v4964 = vunpack.c.0.s8 %v4963
        %v4965 = vlaneseq
        %v4966 = vshrl.u32 %v4965, 7
        %v4967 = vsub.s32 %v4964, %v4966
        %v4968 = vrot.slane %v4954, %v4967
        %v4969 = vcombine.low %v4961, %v4968
        %v4970 = vcombine.low %v4830, %v4832
        %v4971 = vcombine.low %v4834, %v4836
        %v4973 = vunpack.c.l.s4 1983009808
        %v4974 = vunpack.c.0.s8 %v4973
        %v4975 = vlaneseq
        %v4976 = vshrl.u32 %v4975, 7
        %v4977 = vsub.s32 %v4974, %v4976
        %v4978 = vrot.slane %v4970, %v4977
        %v4980 = vunpack.c.l.s4 1983009808
        %v4981 = vunpack.c.0.s8 %v4980
        %v4982 = vlaneseq
        %v4983 = vshrl.u32 %v4982, 7
        %v4984 = vsub.s32 %v4981, %v4983
        %v4985 = vrot.slane %v4971, %v4984
        %v4986 = vcombine.low %v4978, %v4985
        %v4987 = vcombine.low %v4838, %v4840
        %v4988 = vcombine.low %v4842, %v4844
        %v4990 = vunpack.c.l.s4 1983009808
        %v4991 = vunpack.c.0.s8 %v4990
        %v4992 = vlaneseq
        %v4993 = vshrl.u32 %v4992, 7
        %v4994 = vsub.s32 %v4991, %v4993
        %v4995 = vrot.slane %v4987, %v4994
        %v4997 = vunpack.c.l.s4 1983009808
        %v4998 = vunpack.c.0.s8 %v4997
        %v4999 = vlaneseq
        %v5000 = vshrl.u32 %v4999, 7
        %v5001 = vsub.s32 %v4998, %v5000
        %v5002 = vrot.slane %v4988, %v5001
        %v5003 = vcombine.low %v4995, %v5002
        %v5004 = vcombine.low %v4846, %v4848
        %v5005 = vcombine.low %v4850, %v4852
        %v5007 = vunpack.c.l.s4 1983009808
        %v5008 = vunpack.c.0.s8 %v5007
        %v5009 = vlaneseq
        %v5010 = vshrl.u32 %v5009, 7
        %v5011 = vsub.s32 %v5008, %v5010
        %v5012 = vrot.slane %v5004, %v5011
        %v5014 = vunpack.c.l.s4 1983009808
        %v5015 = vunpack.c.0.s8 %v5014
        %v5016 = vlaneseq
        %v5017 = vshrl.u32 %v5016, 7
        %v5018 = vsub.s32 %v5015, %v5017
        %v5019 = vrot.slane %v5005, %v5018
        %v5020 = vcombine.low %v5012, %v5019
        %5029 = vst [vmem:[%s666] sm:$0xff] %v4901
        %5030 = vst [vmem:[%s666 + $0x8] sm:$0xff] %v4918
        %5031 = vst [vmem:[%s666 + $0x10] sm:$0xff] %v4935
        %5032 = vst [vmem:[%s666 + $0x18] sm:$0xff] %v4952
        %5033 = vst [vmem:[%s666 + $0x20] sm:$0xff] %v4969
        %5034 = vst [vmem:[%s666 + $0x28] sm:$0xff] %v4986
        %5035 = vst [vmem:[%s666 + $0x30] sm:$0xff] %v5003
        %5036 = vst [vmem:[%s666 + $0x38] sm:$0xff] %v5020
        %s5037 = sand.u32 %s349, 1
        %s5038 = scalar_lea.sflag [#allocation5], %s5037
        %s5039 = sand.u32 %s349, 1
        %s5040 = smul.addr %s5039, 64
        %s5041 = scalar_lea.vmem [#allocation24], %s5040
        // Predicated region
        $region133: #{tpu_custom_call.1} parent=75 // pred_check
          %p5042 = pneg %p359
        $region134: #{tpu_custom_call.1} parent=75 // pred_check_branch
          %5044 = sbr.rel (%p5042) target = $region136
        $region135: #{tpu_custom_call.1} parent=75 // pred_region
          %s5045 = smul.u32 32, %s37
          %s5047 = ssub.s32 1024, 1024
          %5048 = vsyncadd %s5038, %s5047
          %s5049 = smul.addr %s5045, 32
          %s5050 = scalar_lea.hbm %s14, %s5049
          %s5052 = sshll.u32 %s5041, 4
          %s5053 = int_to_ptr.vmem [resolvable:$true] %s5052
          %5055 = dma.vmem_to_hbm [thread:$0]  %s5053, 1024, %s5050, %s5038
        $region136: #{tpu_custom_call.1} parent=75 // pred_fallthru
          _
      $region76: #{tpu_custom_call.1} parent=5 // pred_fallthru
        _
      %p5056 = scmp.le.s32.totalorder 2, %s32
      // Predicated region
      $region137: #{tpu_custom_call.1} parent=5 // pred_check
        %p5057 = pneg %p5056
      $region138: #{tpu_custom_call.1} parent=5 // pred_check_branch
        %5059 = sbr.rel (%p5057) target = $region140
      $region139: #{tpu_custom_call.1} parent=5 // pred_region
        %s5060 = ssub.s32 %s32, 2
        // Predicated region
        $region141: #{tpu_custom_call.1} parent=139 // pred_check
          %p5061 = pneg %p365
        $region142: #{tpu_custom_call.1} parent=139 // pred_check_branch
          %5063 = sbr.rel (%p5061) target = $region144
        $region143: #{tpu_custom_call.1} parent=139 // pred_region
          %s5064 = sand.u32 %s350, 1
          %s5065 = scalar_lea.sflag [#allocation5], %s5064
          %s5066 = sand.u32 %s350, 1
          %s5067 = smul.addr %s5066, 64
          %s5068 = scalar_lea.vmem [#allocation24], %s5067
          %5069 = dma.done %s5065, 1024
        $region144: #{tpu_custom_call.1} parent=139 // pred_fallthru
          _
      $region140: #{tpu_custom_call.1} parent=5 // pred_fallthru
        _
    $region6: #{tpu_custom_call.1} parent=1 // loop_footer
      %s36 = sadd.s32 1, %s32
    $region7: #{tpu_custom_call.1} parent=1 // loop_footer_branch
      %31 = sbr.rel target = $region3
    $region8: #{tpu_custom_call.1} parent=1 // loop_exit
      _
    %5070 = vsyncpa [#allocation4], 1
    %s5071 = scalar_lea.sflag [#allocation4], 1
    %5072 = vsyncpa %s5071, 1
    %5073 = vsyncpa [#allocation7], 1
    %5074 = vsyncpa [#allocation10], 1
    %5075 = vsyncpa [#allocation13], 1
    %5076 = vsyncpa [#allocation16], 1
    %5077 = vsyncpa [#allocation19], 1
    %5078 = vsyncpa [#allocation22], 1
    %s5079 = scalar_lea.sflag [#allocation22], 1
    %5080 = vsyncpa %s5079, 1
    %5081 = vsyncpa [#allocation5], 1
    %s5082 = scalar_lea.sflag [#allocation5], 1
    %5083 = vsyncpa %s5082, 1

</llo_original>
